<compile_context>
chip_gen: v7x
topology: tpu7x:2x2x1
jax: 0.10.0
libtpu: 0.0.40
codegen_flags: <defaults>
</compile_context>

<pallas_src>
import functools

import jax
import jax.numpy as jnp
from jax.experimental import pallas as pl
from jax.experimental.pallas import tpu as pltpu


def _round_up(a: int, b: int) -> int:
    return ((a + b - 1) // b) * b


# ----------------------------- Pallas kernel --------------------------------
def _make_convblock_kernel(k: int, tap_offsets, m_ext: int, stride: int):
    """Build the fused conv + folded-BN + ReLU6 kernel (static shapes closed over)."""

    def kernel(x_ref, w_ref, b_ref, o_ref):
        # x_ref: (1, C_pad, FLAT)        bf16  zero-padded image, spatial flattened on lanes
        # w_ref: (k*k, TILE_OUP, C_pad)  bf16  BN-scale-folded conv weight, one tap per slot
        # b_ref: (TILE_OUP, 1)           f32   folded BN bias
        # o_ref: (1, TILE_OUP, M_ext)    f32   channel-major, lane-dense output tile
        acc = jnp.zeros((w_ref.shape[1], m_ext), jnp.float32)
        for t in range(k * k):                      # unrolled: k*k small GEMMs
            off = tap_offsets[t]
            if stride == 1:
                xs = x_ref[0, :, pl.ds(off, m_ext)]             # (C_pad, M_ext) contiguous
            else:
                xs = x_ref[0, :, pl.ds(off, m_ext, stride)]     # strided lane slice
            acc = acc + jnp.dot(w_ref[t], xs, preferred_element_type=jnp.float32)
        y = acc + b_ref[...]                                    # folded BN bias (f32)
        o_ref[0] = jnp.clip(y, 0.0, 6.0).astype(o_ref.dtype)    # ReLU6

    return kernel


# ------------------------------ host wrapper ---------------------------------
@functools.partial(jax.jit, static_argnames=("stride", "padding", "eps", "tile_oup"))
def conv_block_forward(x, weight, gamma, beta, running_mean, running_var,
                       *, stride, padding, eps=1e-5, tile_oup=128):
    """Forward of ConvBlock.  x: (N, C, H, W) NCHW -> (N, oup, H_out, W_out)."""
    n, c, h, w = x.shape
    oup, inp, k, k2 = weight.shape
    assert inp == c and k == k2

    h_pad, w_pad = h + 2 * padding, w + 2 * padding
    h_out = (h + 2 * padding - k) // stride + 1
    w_out = (w + 2 * padding - k) // stride + 1

    c_p = _round_up(c, 8)                 # sublane-friendly contraction dim
    oup_p = _round_up(oup, tile_oup)      # lane/MXU-friendly output channels

    # ---- fold BatchNorm (inference running stats) into weight + per-channel bias ----
    scale = gamma / jnp.sqrt(running_var + eps)                       # (oup,)
    bias = beta - running_mean * scale                                # (oup,)
    w_f = weight.astype(jnp.float32) * scale[:, None, None, None]     # scale folded
    w_f = jnp.pad(w_f, ((0, oup_p - oup), (0, c_p - c), (0, 0), (0, 0)))
    w_r = w_f.transpose(2, 3, 0, 1).reshape(k * k, oup_p, c_p).astype(jnp.bfloat16)
    b_r = jnp.pad(bias, (0, oup_p - oup)).reshape(oup_p, 1).astype(jnp.float32)

    # ---- zero-pad spatially, flatten (H_pad*W_pad) onto the lane axis, bf16 ----
    xp = jnp.pad(x.astype(jnp.bfloat16),
                 ((0, 0), (0, c_p - c), (padding, padding), (padding, padding)))
    m_ext = _round_up(h_out * w_pad, 128)      # extended (lane-dense) output length
    need = stride * (m_ext - 1) + (k - 1) * w_pad + (k - 1) + 1
    flat_len = _round_up(max(h_pad * w_pad, need), 128)
    x_flat = xp.reshape(n, c_p, h_pad * w_pad)
    x_flat = jnp.pad(x_flat, ((0, 0), (0, 0), (0, flat_len - h_pad * w_pad)))

    tap_offsets = tuple(kh * w_pad + kw for kh in range(k) for kw in range(k))
    kernel = _make_convblock_kernel(k, tap_offsets, m_ext, stride)

    grid = (n, oup_p // tile_oup)
    out = pl.pallas_call(
        kernel,
        out_shape=jax.ShapeDtypeStruct((n, oup_p, m_ext), jnp.float32),
        grid_spec=pltpu.PrefetchScalarGridSpec(
            num_scalar_prefetch=0,
            grid=grid,
            in_specs=[
                pl.BlockSpec((1, c_p, flat_len), lambda i, j: (i, 0, 0)),      # image
                pl.BlockSpec((k * k, tile_oup, c_p), lambda i, j: (0, j, 0)),  # weights
                pl.BlockSpec((tile_oup, 1), lambda i, j: (j, 0)),              # bias
            ],
            out_specs=pl.BlockSpec((1, tile_oup, m_ext), lambda i, j: (i, j, 0)),
        ),
        compiler_params=pltpu.CompilerParams(
            dimension_semantics=("parallel", "parallel"),
            vmem_limit_bytes=48 * 1024 * 1024,
        ),
    )(x_flat, w_r, b_r)

    # Drop padded channels and the per-row "wrap" columns; result is already NCHW-major.
    out = out[:, :oup, : h_out * w_pad].reshape(n, oup, h_out, w_pad)[..., :w_out]
    return out


# -------------------------------- reference ---------------------------------
def _reference(x, weight, gamma, beta, mean, var, *, stride, padding, eps=1e-5):
    """conv+BN+ReLU6 with the same bf16-rounded operands (f32 accumulation)."""
    scale = gamma / jnp.sqrt(var + eps)
    bias = (beta - mean * scale).reshape(1, -1, 1, 1)
    w_s = (weight.astype(jnp.float32) * scale[:, None, None, None])
    w_s = w_s.astype(jnp.bfloat16).astype(jnp.float32)
    x_s = x.astype(jnp.bfloat16).astype(jnp.float32)
    y = jax.lax.conv_general_dilated(
        x_s, w_s, window_strides=(stride, stride),
        padding=((padding, padding), (padding, padding)),
        dimension_numbers=("NCHW", "OIHW", "NCHW"),
        precision=jax.lax.Precision.HIGHEST,
    )
    return jnp.clip(y + bias, 0.0, 6.0)


if __name__ == "__main__":
    # ConvBlock(inp=4, oup=8, kernel_size=3, stride=1, padding=1) at small shapes.
    N, INP, H, W = 2, 4, 16, 16
    OUP, K, STRIDE, PAD = 8, 3, 1, 1

    key = jax.random.PRNGKey(0)
    kx, kw, kg, kb, km, kv = jax.random.split(key, 6)

    x = jax.random.normal(kx, (N, INP, H, W), dtype=jnp.float32)

    fan = INP * K * K
    weight = jax.random.normal(kw, (OUP, INP, K, K), dtype=jnp.float32) * (2.0 / fan) ** 0.5
    gamma = 1.0 + 0.1 * jax.random.normal(kg, (OUP,), dtype=jnp.float32)
    beta = 0.1 * jax.random.normal(kb, (OUP,), dtype=jnp.float32)
    running_mean = 0.1 * jax.random.normal(km, (OUP,), dtype=jnp.float32)
    running_var = jnp.abs(1.0 + 0.1 * jax.random.normal(kv, (OUP,), dtype=jnp.float32))

    out = conv_block_forward(
        x, weight, gamma, beta, running_mean, running_var, stride=STRIDE, padding=PAD
    )
    out = jax.block_until_ready(out)

    ref = _reference(
        x, weight, gamma, beta, running_mean, running_var, stride=STRIDE, padding=PAD
    )
    assert out.shape == (N, OUP, H, W)
    assert jnp.max(jnp.abs(out - ref)) < 1e-3, "mismatch vs reference conv+bn+relu6"

    # TODO(synk): SpConvBlock's sp_forward / reset_yv_ (sparsity bookkeeping) have no
    # tensor hot path; only the standard forward (conv->bn->relu6) is implemented.
    # TODO(synk): BatchNorm is folded with running stats (inference semantics); a
    # training-mode batch-stat path is not implemented.
    print("KERNEL_OK")
</pallas_src>

<mosaic_0001>
module attributes {stable_mosaic.version = 11 : i64} {
  func.func @kernel(%arg0: i32, %arg1: i32, %arg2: memref<1x8x512xbf16, #tpu.memory_space<vmem>>, %arg3: memref<9x128x8xbf16, #tpu.memory_space<vmem>>, %arg4: memref<128x1xf32, #tpu.memory_space<vmem>>, %arg5: memref<1x128x384xf32, #tpu.memory_space<vmem>>) attributes {dimension_semantics = [#tpu.dimension_semantics<parallel>, #tpu.dimension_semantics<parallel>], iteration_bounds = array<i64: 2, 1>, scalar_prefetch = 0 : i64, scratch_operands = 0 : i64, tpu.core_type = #tpu.core_type<tc>, window_params = [{transform_indices = @transform_0, window_bounds = array<i64: 1, 8, 512>}, {transform_indices = @transform_1, window_bounds = array<i64: 9, 128, 8>}, {transform_indices = @transform_2, window_bounds = array<i64: 128, 1>}, {transform_indices = @transform_3, window_bounds = array<i64: 1, 128, 384>}]} {
    %cst = arith.constant 0.000000e+00 : f32
    %0 = vector.broadcast %cst : f32 to vector<128x384xf32>
    %c0 = arith.constant 0 : index
    %c0_0 = arith.constant 0 : index
    %c0_1 = arith.constant 0 : index
    %1 = vector.load %arg2[%c0, %c0_0, %c0_1] : memref<1x8x512xbf16, #tpu.memory_space<vmem>>, vector<1x8x384xbf16>
    %2 = vector.shape_cast %1 : vector<1x8x384xbf16> to vector<8x384xbf16>
    %c0_2 = arith.constant 0 : index
    %c0_3 = arith.constant 0 : index
    %c0_4 = arith.constant 0 : index
    %3 = vector.load %arg3[%c0_2, %c0_3, %c0_4] : memref<9x128x8xbf16, #tpu.memory_space<vmem>>, vector<1x128x8xbf16>
    %4 = vector.shape_cast %3 : vector<1x128x8xbf16> to vector<128x8xbf16>
    %cst_5 = arith.constant dense<0.000000e+00> : vector<128x384xf32>
    %5 = tpu.matmul %4, %2, %cst_5 {dimension_numbers = #tpu.dot_dimension_numbers<[1], [0], [0], [1], [0, 0, 1, 1], [], []>} : vector<128x8xbf16>, vector<8x384xbf16>, vector<128x384xf32> -> vector<128x384xf32>
    %6 = arith.addf %0, %5 : vector<128x384xf32>
    %c0_6 = arith.constant 0 : index
    %c0_7 = arith.constant 0 : index
    %c1 = arith.constant 1 : index
    %7 = vector.load %arg2[%c0_6, %c0_7, %c1] : memref<1x8x512xbf16, #tpu.memory_space<vmem>>, vector<1x8x384xbf16>
    %8 = vector.shape_cast %7 : vector<1x8x384xbf16> to vector<8x384xbf16>
    %c1_8 = arith.constant 1 : index
    %c0_9 = arith.constant 0 : index
    %c0_10 = arith.constant 0 : index
    %9 = vector.load %arg3[%c1_8, %c0_9, %c0_10] : memref<9x128x8xbf16, #tpu.memory_space<vmem>>, vector<1x128x8xbf16>
    %10 = vector.shape_cast %9 : vector<1x128x8xbf16> to vector<128x8xbf16>
    %cst_11 = arith.constant dense<0.000000e+00> : vector<128x384xf32>
    %11 = tpu.matmul %10, %8, %cst_11 {dimension_numbers = #tpu.dot_dimension_numbers<[1], [0], [0], [1], [0, 0, 1, 1], [], []>} : vector<128x8xbf16>, vector<8x384xbf16>, vector<128x384xf32> -> vector<128x384xf32>
    %12 = arith.addf %6, %11 : vector<128x384xf32>
    %c0_12 = arith.constant 0 : index
    %c0_13 = arith.constant 0 : index
    %c2 = arith.constant 2 : index
    %13 = vector.load %arg2[%c0_12, %c0_13, %c2] : memref<1x8x512xbf16, #tpu.memory_space<vmem>>, vector<1x8x384xbf16>
    %14 = vector.shape_cast %13 : vector<1x8x384xbf16> to vector<8x384xbf16>
    %c2_14 = arith.constant 2 : index
    %c0_15 = arith.constant 0 : index
    %c0_16 = arith.constant 0 : index
    %15 = vector.load %arg3[%c2_14, %c0_15, %c0_16] : memref<9x128x8xbf16, #tpu.memory_space<vmem>>, vector<1x128x8xbf16>
    %16 = vector.shape_cast %15 : vector<1x128x8xbf16> to vector<128x8xbf16>
    %cst_17 = arith.constant dense<0.000000e+00> : vector<128x384xf32>
    %17 = tpu.matmul %16, %14, %cst_17 {dimension_numbers = #tpu.dot_dimension_numbers<[1], [0], [0], [1], [0, 0, 1, 1], [], []>} : vector<128x8xbf16>, vector<8x384xbf16>, vector<128x384xf32> -> vector<128x384xf32>
    %18 = arith.addf %12, %17 : vector<128x384xf32>
    %c0_18 = arith.constant 0 : index
    %c0_19 = arith.constant 0 : index
    %c18 = arith.constant 18 : index
    %19 = vector.load %arg2[%c0_18, %c0_19, %c18] : memref<1x8x512xbf16, #tpu.memory_space<vmem>>, vector<1x8x384xbf16>
    %20 = vector.shape_cast %19 : vector<1x8x384xbf16> to vector<8x384xbf16>
    %c3 = arith.constant 3 : index
    %c0_20 = arith.constant 0 : index
    %c0_21 = arith.constant 0 : index
    %21 = vector.load %arg3[%c3, %c0_20, %c0_21] : memref<9x128x8xbf16, #tpu.memory_space<vmem>>, vector<1x128x8xbf16>
    %22 = vector.shape_cast %21 : vector<1x128x8xbf16> to vector<128x8xbf16>
    %cst_22 = arith.constant dense<0.000000e+00> : vector<128x384xf32>
    %23 = tpu.matmul %22, %20, %cst_22 {dimension_numbers = #tpu.dot_dimension_numbers<[1], [0], [0], [1], [0, 0, 1, 1], [], []>} : vector<128x8xbf16>, vector<8x384xbf16>, vector<128x384xf32> -> vector<128x384xf32>
    %24 = arith.addf %18, %23 : vector<128x384xf32>
    %c0_23 = arith.constant 0 : index
    %c0_24 = arith.constant 0 : index
    %c19 = arith.constant 19 : index
    %25 = vector.load %arg2[%c0_23, %c0_24, %c19] : memref<1x8x512xbf16, #tpu.memory_space<vmem>>, vector<1x8x384xbf16>
    %26 = vector.shape_cast %25 : vector<1x8x384xbf16> to vector<8x384xbf16>
    %c4 = arith.constant 4 : index
    %c0_25 = arith.constant 0 : index
    %c0_26 = arith.constant 0 : index
    %27 = vector.load %arg3[%c4, %c0_25, %c0_26] : memref<9x128x8xbf16, #tpu.memory_space<vmem>>, vector<1x128x8xbf16>
    %28 = vector.shape_cast %27 : vector<1x128x8xbf16> to vector<128x8xbf16>
    %cst_27 = arith.constant dense<0.000000e+00> : vector<128x384xf32>
    %29 = tpu.matmul %28, %26, %cst_27 {dimension_numbers = #tpu.dot_dimension_numbers<[1], [0], [0], [1], [0, 0, 1, 1], [], []>} : vector<128x8xbf16>, vector<8x384xbf16>, vector<128x384xf32> -> vector<128x384xf32>
    %30 = arith.addf %24, %29 : vector<128x384xf32>
    %c0_28 = arith.constant 0 : index
    %c0_29 = arith.constant 0 : index
    %c20 = arith.constant 20 : index
    %31 = vector.load %arg2[%c0_28, %c0_29, %c20] : memref<1x8x512xbf16, #tpu.memory_space<vmem>>, vector<1x8x384xbf16>
    %32 = vector.shape_cast %31 : vector<1x8x384xbf16> to vector<8x384xbf16>
    %c5 = arith.constant 5 : index
    %c0_30 = arith.constant 0 : index
    %c0_31 = arith.constant 0 : index
    %33 = vector.load %arg3[%c5, %c0_30, %c0_31] : memref<9x128x8xbf16, #tpu.memory_space<vmem>>, vector<1x128x8xbf16>
    %34 = vector.shape_cast %33 : vector<1x128x8xbf16> to vector<128x8xbf16>
    %cst_32 = arith.constant dense<0.000000e+00> : vector<128x384xf32>
    %35 = tpu.matmul %34, %32, %cst_32 {dimension_numbers = #tpu.dot_dimension_numbers<[1], [0], [0], [1], [0, 0, 1, 1], [], []>} : vector<128x8xbf16>, vector<8x384xbf16>, vector<128x384xf32> -> vector<128x384xf32>
    %36 = arith.addf %30, %35 : vector<128x384xf32>
    %c0_33 = arith.constant 0 : index
    %c0_34 = arith.constant 0 : index
    %c36 = arith.constant 36 : index
    %37 = vector.load %arg2[%c0_33, %c0_34, %c36] : memref<1x8x512xbf16, #tpu.memory_space<vmem>>, vector<1x8x384xbf16>
    %38 = vector.shape_cast %37 : vector<1x8x384xbf16> to vector<8x384xbf16>
    %c6 = arith.constant 6 : index
    %c0_35 = arith.constant 0 : index
    %c0_36 = arith.constant 0 : index
    %39 = vector.load %arg3[%c6, %c0_35, %c0_36] : memref<9x128x8xbf16, #tpu.memory_space<vmem>>, vector<1x128x8xbf16>
    %40 = vector.shape_cast %39 : vector<1x128x8xbf16> to vector<128x8xbf16>
    %cst_37 = arith.constant dense<0.000000e+00> : vector<128x384xf32>
    %41 = tpu.matmul %40, %38, %cst_37 {dimension_numbers = #tpu.dot_dimension_numbers<[1], [0], [0], [1], [0, 0, 1, 1], [], []>} : vector<128x8xbf16>, vector<8x384xbf16>, vector<128x384xf32> -> vector<128x384xf32>
    %42 = arith.addf %36, %41 : vector<128x384xf32>
    %c0_38 = arith.constant 0 : index
    %c0_39 = arith.constant 0 : index
    %c37 = arith.constant 37 : index
    %43 = vector.load %arg2[%c0_38, %c0_39, %c37] : memref<1x8x512xbf16, #tpu.memory_space<vmem>>, vector<1x8x384xbf16>
    %44 = vector.shape_cast %43 : vector<1x8x384xbf16> to vector<8x384xbf16>
    %c7 = arith.constant 7 : index
    %c0_40 = arith.constant 0 : index
    %c0_41 = arith.constant 0 : index
    %45 = vector.load %arg3[%c7, %c0_40, %c0_41] : memref<9x128x8xbf16, #tpu.memory_space<vmem>>, vector<1x128x8xbf16>
    %46 = vector.shape_cast %45 : vector<1x128x8xbf16> to vector<128x8xbf16>
    %cst_42 = arith.constant dense<0.000000e+00> : vector<128x384xf32>
    %47 = tpu.matmul %46, %44, %cst_42 {dimension_numbers = #tpu.dot_dimension_numbers<[1], [0], [0], [1], [0, 0, 1, 1], [], []>} : vector<128x8xbf16>, vector<8x384xbf16>, vector<128x384xf32> -> vector<128x384xf32>
    %48 = arith.addf %42, %47 : vector<128x384xf32>
    %c0_43 = arith.constant 0 : index
    %c0_44 = arith.constant 0 : index
    %c38 = arith.constant 38 : index
    %49 = vector.load %arg2[%c0_43, %c0_44, %c38] : memref<1x8x512xbf16, #tpu.memory_space<vmem>>, vector<1x8x384xbf16>
    %50 = vector.shape_cast %49 : vector<1x8x384xbf16> to vector<8x384xbf16>
    %c8 = arith.constant 8 : index
    %c0_45 = arith.constant 0 : index
    %c0_46 = arith.constant 0 : index
    %51 = vector.load %arg3[%c8, %c0_45, %c0_46] : memref<9x128x8xbf16, #tpu.memory_space<vmem>>, vector<1x128x8xbf16>
    %52 = vector.shape_cast %51 : vector<1x128x8xbf16> to vector<128x8xbf16>
    %cst_47 = arith.constant dense<0.000000e+00> : vector<128x384xf32>
    %53 = tpu.matmul %52, %50, %cst_47 {dimension_numbers = #tpu.dot_dimension_numbers<[1], [0], [0], [1], [0, 0, 1, 1], [], []>} : vector<128x8xbf16>, vector<8x384xbf16>, vector<128x384xf32> -> vector<128x384xf32>
    %54 = arith.addf %48, %53 : vector<128x384xf32>
    %c0_48 = arith.constant 0 : index
    %c0_49 = arith.constant 0 : index
    %55 = vector.load %arg4[%c0_48, %c0_49] : memref<128x1xf32, #tpu.memory_space<vmem>>, vector<128x1xf32>
    %56 = vector.broadcast %55 : vector<128x1xf32> to vector<128x384xf32>
    %57 = arith.addf %54, %56 : vector<128x384xf32>
    %cst_50 = arith.constant 0.000000e+00 : f32
    %cst_51 = arith.constant 6.000000e+00 : f32
    %58 = vector.broadcast %cst_50 : f32 to vector<128x384xf32>
    %59 = arith.maximumf %58, %57 : vector<128x384xf32>
    %60 = vector.broadcast %cst_51 : f32 to vector<128x384xf32>
    %61 = arith.minimumf %60, %59 : vector<128x384xf32>
    %c0_52 = arith.constant 0 : index
    %c0_53 = arith.constant 0 : index
    %c0_54 = arith.constant 0 : index
    %62 = vector.load %arg5[%c0_52, %c0_53, %c0_54] : memref<1x128x384xf32, #tpu.memory_space<vmem>>, vector<1x128x384xf32>
    %63 = vector.shape_cast %62 : vector<1x128x384xf32> to vector<128x384xf32>
    %64 = vector.shape_cast %61 : vector<128x384xf32> to vector<1x128x384xf32>
    tpu.vector_store %arg5[%c0_52, %c0_53, %c0_54], %64 {strides = array<i32>} : memref<1x128x384xf32, #tpu.memory_space<vmem>>, vector<1x128x384xf32>,
    return
  }
  func.func @transform_0(%arg0: i32, %arg1: i32) -> (i32, i32, i32) {
    %c0_i32 = arith.constant 0 : i32
    %c0_i32_0 = arith.constant 0 : i32
    %c0_i32_1 = arith.constant 0 : i32
    return %arg0, %c0_i32, %c0_i32_0 : i32, i32, i32
  }
  func.func @transform_1(%arg0: i32, %arg1: i32) -> (i32, i32, i32) {
    %c0_i32 = arith.constant 0 : i32
    %c0_i32_0 = arith.constant 0 : i32
    %c0_i32_1 = arith.constant 0 : i32
    return %c0_i32, %arg1, %c0_i32_0 : i32, i32, i32
  }
  func.func @transform_2(%arg0: i32, %arg1: i32) -> (i32, i32) {
    %c0_i32 = arith.constant 0 : i32
    %c0_i32_0 = arith.constant 0 : i32
    return %arg1, %c0_i32 : i32, i32
  }
  func.func @transform_3(%arg0: i32, %arg1: i32) -> (i32, i32, i32) {
    %c0_i32 = arith.constant 0 : i32
    %c0_i32_0 = arith.constant 0 : i32
    return %arg0, %arg1, %c0_i32 : i32, i32, i32
  }
}

</mosaic_0001>

<llo_original>
// kernel: conv_block_forward.1
$region0: #{conv_block_forward.1}
  #allocation0 [shape = 'u32[]', space=smem, size = 0x4, offset = 0x4, fixed_abs, tag = 'smem constant byte address 0x4 - core index']
  #allocation1 [shape = 'u32[144,128]{1,0:T(1,128)}', space=vmem, size = 0x12000, scoped, tag = 'internal scratch']
  %s0 = inlined_call_operand.vmem [shape: bf16[2,8,512], index: 0, kind: input, shape index: {}]
  %s1 = inlined_call_operand.vmem [shape: bf16[9,128,8], index: 1, kind: input, shape index: {}]
  %s2 = inlined_call_operand.vmem [shape: f32[128,1], index: 2, kind: input, shape index: {}]
  %s3 = inlined_call_operand.vmem [shape: f32[2,128,384], index: 3, kind: output, shape index: {}]
  %s4 = sld [smem:[#allocation0]]
  $region45: #{conv_block_forward.1} parent=0
    _
  %s6 = ssub.s32 1, %s4
  %s7 = scalar_select 0, %s6, %s4
  loop: start=0, step=1, limit=4
  $region2: #{conv_block_forward.1} parent=0 // loop_pre_header
    _
  $region3: #{conv_block_forward.1} parent=0 // loop_header
    %s9 = sphi 0, %s13
    %p10 = scmp.ge.s32.totalorder %s9, 4
    %s16 = sphi 0, %s28
    %s17 = sphi 0, %s24
    %s18 = sphi 0, %s16
    %s19 = sphi 0, %s17
    %s20 = sphi 0, %s18
    %s21 = sphi 0, %s19
    %s31 = sphi 0, %s33
    %s34 = sphi 0, %s31
    %s35 = sphi 0, %s34
    %s51 = sphi 0, %s35
    %s57 = sphi 0, %s59
    %s60 = sphi 0, %s57
    %s61 = sphi 0, %s60
    %s77 = sphi 0, %s61
    %s83 = sphi 0, %s85
    %s86 = sphi 0, %s83
    %s87 = sphi 0, %s86
    %s103 = sphi 0, %s87
    %s111 = sphi 0, %s113
    %s114 = sphi 0, %s111
    %s115 = sphi 0, %s114
    %s131 = sphi 0, %s115
  $region4: #{conv_block_forward.1} parent=0 // loop_header_branch
    %12 = sbr.rel (%p10) target = $region8
  $region5: #{conv_block_forward.1} parent=0 // loop_body
    %s14 = ssub.s32 %s9, 1
    %s15 = ssub.s32 %s9, 2
    %s22 = sadd.s32 1, %s17
    %p23 = scmp.ge.s32.totalorder %s22, 1
    %s24 = scalar_select %p23, 0, %s22
    %s25 = sadd.s32 1, %s16
    %s26 = scalar_select %p23, %s25, %s16
    %p27 = scmp.ge.s32.totalorder %s26, 2
    %s28 = scalar_select %p27, 0, %s26
    %s29 = ssub.s32 %s16, %s28
    %p30 = scmp.eq.s32.totalorder %s29, 0
    %s32 = sadd.s32 %s31, 1
    %s33 = scalar_select %p30, %s31, %s32
    %p36 = pneg %p30
    %p37 = scmp.eq.s32.totalorder %s9, 1
    %p38 = por %p36, %p37
    %p39 = scmp.ne.s32.totalorder %s31, %s34
    %p40 = scmp.eq.s32.totalorder %s9, 0
    %p41 = por %p39, %p40
    %p42 = scmp.ne.s32.totalorder %s31, %s34
    %p43 = scmp.eq.s32.totalorder %s14, 1
    %p44 = por %p42, %p43
    %p45 = scmp.ne.s32.totalorder %s34, %s35
    %p46 = scmp.eq.s32.totalorder %s14, 0
    %p47 = por %p45, %p46
    %p48 = scmp.ne.s32.totalorder %s34, %s35
    %p49 = scmp.eq.s32.totalorder %s15, 1
    %p50 = por %p48, %p49
    %p52 = scmp.ne.s32.totalorder %s35, %s51
    %p53 = scmp.eq.s32.totalorder %s15, 0
    %p54 = por %p52, %p53
    %s55 = ssub.s32 %s17, %s24
    %p56 = scmp.eq.s32.totalorder %s55, 0
    %s58 = sadd.s32 %s57, 1
    %s59 = scalar_select %p56, %s57, %s58
    %p62 = pneg %p56
    %p63 = scmp.eq.s32.totalorder %s9, 1
    %p64 = por %p62, %p63
    %p65 = scmp.ne.s32.totalorder %s57, %s60
    %p66 = scmp.eq.s32.totalorder %s9, 0
    %p67 = por %p65, %p66
    %p68 = scmp.ne.s32.totalorder %s57, %s60
    %p69 = scmp.eq.s32.totalorder %s14, 1
    %p70 = por %p68, %p69
    %p71 = scmp.ne.s32.totalorder %s60, %s61
    %p72 = scmp.eq.s32.totalorder %s14, 0
    %p73 = por %p71, %p72
    %p74 = scmp.ne.s32.totalorder %s60, %s61
    %p75 = scmp.eq.s32.totalorder %s15, 1
    %p76 = por %p74, %p75
    %p78 = scmp.ne.s32.totalorder %s61, %s77
    %p79 = scmp.eq.s32.totalorder %s15, 0
    %p80 = por %p78, %p79
    %s81 = ssub.s32 %s17, %s24
    %p82 = scmp.eq.s32.totalorder %s81, 0
    %s84 = sadd.s32 %s83, 1
    %s85 = scalar_select %p82, %s83, %s84
    %p88 = pneg %p82
    %p89 = scmp.eq.s32.totalorder %s9, 1
    %p90 = por %p88, %p89
    %p91 = scmp.ne.s32.totalorder %s83, %s86
    %p92 = scmp.eq.s32.totalorder %s9, 0
    %p93 = por %p91, %p92
    %p94 = scmp.ne.s32.totalorder %s83, %s86
    %p95 = scmp.eq.s32.totalorder %s14, 1
    %p96 = por %p94, %p95
    %p97 = scmp.ne.s32.totalorder %s86, %s87
    %p98 = scmp.eq.s32.totalorder %s14, 0
    %p99 = por %p97, %p98
    %p100 = scmp.ne.s32.totalorder %s86, %s87
    %p101 = scmp.eq.s32.totalorder %s15, 1
    %p102 = por %p100, %p101
    %p104 = scmp.ne.s32.totalorder %s87, %s103
    %p105 = scmp.eq.s32.totalorder %s15, 0
    %p106 = por %p104, %p105
    %s107 = ssub.s32 %s16, %s28
    %s108 = ssub.s32 %s17, %s24
    %s109 = sor.u32 %s107, %s108
    %p110 = scmp.eq.s32.totalorder %s109, 0
    %s112 = sadd.s32 %s111, 1
    %s113 = scalar_select %p110, %s111, %s112
    %p116 = pneg %p110
    %p117 = scmp.eq.s32.totalorder %s9, 1
    %p118 = por %p116, %p117
    %p119 = scmp.ne.s32.totalorder %s111, %s114
    %p120 = scmp.eq.s32.totalorder %s9, 0
    %p121 = por %p119, %p120
    %p122 = scmp.ne.s32.totalorder %s111, %s114
    %p123 = scmp.eq.s32.totalorder %s14, 1
    %p124 = por %p122, %p123
    %p125 = scmp.ne.s32.totalorder %s114, %s115
    %p126 = scmp.eq.s32.totalorder %s14, 0
    %p127 = por %p125, %p126
    %p128 = scmp.ne.s32.totalorder %s114, %s115
    %p129 = scmp.eq.s32.totalorder %s15, 1
    %p130 = por %p128, %p129
    %p132 = scmp.ne.s32.totalorder %s115, %s131
    %p133 = scmp.eq.s32.totalorder %s15, 0
    %p134 = por %p132, %p133
    %p135 = scmp.le.s32.totalorder 1, %s9
    %p136 = scmp.lt.s32.totalorder %s9, 3
    %p137 = pnand %p135, %p136
    %p138 = pneg %p137
    // Predicated region
    $region9: #{conv_block_forward.1} parent=5 // pred_check
      _
    $region10: #{conv_block_forward.1} parent=5 // pred_check_branch
      %140 = sbr.rel (%p137) target = $region12
    $region11: #{conv_block_forward.1} parent=5 // pred_region
      %s141 = ssub.s32 %s9, 1
      // Predicated region
      $region13: #{conv_block_forward.1} parent=11 // pred_check
        %p142 = pneg %p73
      $region14: #{conv_block_forward.1} parent=11 // pred_check_branch
        %144 = sbr.rel (%p142) target = $region16
      $region15: #{conv_block_forward.1} parent=11 // pred_region
        %s145 = smul.u32 16, %s19
        %p146 = scmp.lt.s32.totalorder %s145, 15
        %s147 = scalar_select %p146, %s145, 15
        %s148 = smul.addr %s147, 4
        %s149 = scalar_lea.vmem %s1, %s148
        %s150 = smul.u32 16, %s19
      $region16: #{conv_block_forward.1} parent=11 // pred_fallthru
        _
      // Predicated region
      $region17: #{conv_block_forward.1} parent=11 // pred_check
        %p151 = pneg %p99
      $region18: #{conv_block_forward.1} parent=11 // pred_check_branch
        %153 = sbr.rel (%p151) target = $region20
      $region19: #{conv_block_forward.1} parent=11 // pred_region
        %s154 = smul.u32 16, %s19
        %p155 = scmp.lt.s32.totalorder %s154, 15
        %s156 = scalar_select %p155, %s154, 15
        %s157 = smul.addr %s156, 8
        %s158 = scalar_lea.vmem %s2, %s157
        %s159 = smul.u32 16, %s19
      $region20: #{conv_block_forward.1} parent=11 // pred_fallthru
        _
    $region12: #{conv_block_forward.1} parent=5 // pred_fallthru
      _
    %p160 = scmp.lt.s32.totalorder %s9, 2
    // Predicated region
    $region21: #{conv_block_forward.1} parent=5 // pred_check
      %p161 = pneg %p160
    $region22: #{conv_block_forward.1} parent=5 // pred_check_branch
      %163 = sbr.rel (%p161) target = $region24
    $region23: #{conv_block_forward.1} parent=5 // pred_region
      // Predicated region
      $region25: #{conv_block_forward.1} parent=23 // pred_check
        %p164 = pneg %p41
      $region26: #{conv_block_forward.1} parent=23 // pred_check_branch
        %166 = sbr.rel (%p164) target = $region28
      $region27: #{conv_block_forward.1} parent=23 // pred_region
        %p167 = scmp.lt.s32.totalorder %s16, 1
        %s168 = scalar_select %p167, %s16, 1
        %s169 = smul.addr %s168, 4
        %s170 = smul.addr %s169, 4
        %s171 = scalar_lea.vmem %s0, %s170
      $region28: #{conv_block_forward.1} parent=23 // pred_fallthru
        _
    $region24: #{conv_block_forward.1} parent=5 // pred_fallthru
      _
    %p172 = scmp.le.s32.totalorder 1, %s9
    %p173 = scmp.lt.s32.totalorder %s9, 3
    %p174 = pnand %p172, %p173
    %p175 = pneg %p174
    // Predicated region
    $region29: #{conv_block_forward.1} parent=5 // pred_check
      _
    $region30: #{conv_block_forward.1} parent=5 // pred_check_branch
      %177 = sbr.rel (%p174) target = $region32
    $region31: #{conv_block_forward.1} parent=5 // pred_region
      %s178 = ssub.s32 %s9, 1
      %p179 = scmp.lt.s32.totalorder %s18, 1
      %s180 = scalar_select %p179, %s18, 1
      %s181 = smul.addr %s180, 4
      %s182 = smul.addr %s181, 4
      %s183 = scalar_lea.vmem %s0, %s182
      %p184 = pneg %p47
      %p185 = pneg %p44
      %s186 = smul.u32 16, %s19
      %p187 = scmp.lt.s32.totalorder %s186, 15
      %s188 = scalar_select %p187, %s186, 15
      %s189 = smul.addr %s188, 4
      %s190 = scalar_lea.vmem %s1, %s189
      %p191 = pneg %p73
      %p192 = pneg %p70
      %s193 = smul.u32 16, %s19
      %p194 = scmp.lt.s32.totalorder %s193, 15
      %s195 = scalar_select %p194, %s193, 15
      %s196 = smul.addr %s195, 8
      %s197 = scalar_lea.vmem %s2, %s196
      %p198 = pneg %p99
      %p199 = pneg %p96
      %p200 = pneg %p127
      %p201 = pneg %p124
      %s202 = smul.u32 16, %s19
      %p203 = scmp.lt.s32.totalorder %s18, 1
      %s204 = scalar_select %p203, %s18, 1
      %p205 = scmp.lt.s32.totalorder %s202, 15
      %s206 = scalar_select %p205, %s202, 15
      %s207 = smul.addr %s206, 3
      %s208 = smul.addr %s204, 48
      %s209 = sadd.s32 %s207, %s208
      %s210 = smul.addr %s209, 8
      %s211 = scalar_lea.vmem %s3, %s210
      %p212 = scmp.lt.s32.totalorder %s18, 1
      %s213 = scalar_select %p212, %s18, 1
      %s214 = smul.addr %s213, 4
      %s215 = smul.addr %s214, 4
      %s216 = scalar_lea.vmem %s0, %s215
      %s217 = smul.u32 16, %s19
      %p218 = scmp.lt.s32.totalorder %s217, 15
      %s219 = scalar_select %p218, %s217, 15
      %s220 = smul.addr %s219, 4
      %s221 = scalar_lea.vmem %s1, %s220
      %s222 = smul.u32 16, %s19
      %s223 = smul.u32 16, %s19
      %p224 = scmp.lt.s32.totalorder %s223, 15
      %s225 = scalar_select %p224, %s223, 15
      %s226 = smul.addr %s225, 8
      %s227 = scalar_lea.vmem %s2, %s226
      %s228 = smul.u32 16, %s19
      %s229 = smul.u32 16, %s19
      %p230 = scmp.lt.s32.totalorder %s18, 1
      %s231 = scalar_select %p230, %s18, 1
      %p232 = scmp.lt.s32.totalorder %s229, 15
      %s233 = scalar_select %p232, %s229, 15
      %s234 = smul.addr %s233, 3
      %s235 = smul.addr %s231, 48
      %s236 = sadd.s32 %s234, %s235
      %s237 = smul.addr %s236, 8
      %s238 = scalar_lea.vmem %s3, %s237
      %s239 = smul.u32 16, %s19
      %v241 = vld [vmem:[%s216] sm:$0xff]
      %v242 = vld [vmem:[%s216 + $0x8] sm:$0xf]
      %v243 = vld [vmem:[%s221] sm:$0xf]
      %v244 = vld [vmem:[%s221 + $0x4] sm:$0xf]
      %v245 = vld [vmem:[%s221 + $0x8] sm:$0xf]
      %v246 = vld [vmem:[%s221 + $0xc] sm:$0xf]
      %v247 = vld [vmem:[%s221 + $0x10] sm:$0xf]
      %v248 = vld [vmem:[%s221 + $0x14] sm:$0xf]
      %v249 = vld [vmem:[%s221 + $0x18] sm:$0xf]
      %v250 = vld [vmem:[%s221 + $0x1c] sm:$0xf]
      %v251 = vld [vmem:[%s221 + $0x20] sm:$0xf]
      %v252 = vld [vmem:[%s221 + $0x24] sm:$0xf]
      %v253 = vld [vmem:[%s221 + $0x28] sm:$0xf]
      %v254 = vld [vmem:[%s221 + $0x2c] sm:$0xf]
      %v255 = vld [vmem:[%s221 + $0x30] sm:$0xf]
      %v256 = vld [vmem:[%s221 + $0x34] sm:$0xf]
      %v257 = vld [vmem:[%s221 + $0x38] sm:$0xf]
      %v258 = vld [vmem:[%s221 + $0x3c] sm:$0xf]
      %v259 = vld [vmem:[%s216] sm:$0xff]
      %v260 = vld [vmem:[%s216 + $0x8] sm:$0xff]
      %s261 = scalar_lea.vmem %s221, 64
      %v262 = vld [vmem:[%s261] sm:$0xf]
      %v263 = vld [vmem:[%s261 + $0x4] sm:$0xf]
      %v264 = vld [vmem:[%s261 + $0x8] sm:$0xf]
      %v265 = vld [vmem:[%s261 + $0xc] sm:$0xf]
      %v266 = vld [vmem:[%s261 + $0x10] sm:$0xf]
      %v267 = vld [vmem:[%s261 + $0x14] sm:$0xf]
      %v268 = vld [vmem:[%s261 + $0x18] sm:$0xf]
      %v269 = vld [vmem:[%s261 + $0x1c] sm:$0xf]
      %v270 = vld [vmem:[%s261 + $0x20] sm:$0xf]
      %v271 = vld [vmem:[%s261 + $0x24] sm:$0xf]
      %v272 = vld [vmem:[%s261 + $0x28] sm:$0xf]
      %v273 = vld [vmem:[%s261 + $0x2c] sm:$0xf]
      %v274 = vld [vmem:[%s261 + $0x30] sm:$0xf]
      %v275 = vld [vmem:[%s261 + $0x34] sm:$0xf]
      %v276 = vld [vmem:[%s261 + $0x38] sm:$0xf]
      %v277 = vld [vmem:[%s261 + $0x3c] sm:$0xf]
      %v294 = vunpack.c.l.b16 %v262
      %v295 = vunpack.c.l.b16 %v263
      %v296 = vunpack.c.l.b16 %v264
      %v297 = vunpack.c.l.b16 %v265
      %v298 = vunpack.c.l.b16 %v266
      %v299 = vunpack.c.l.b16 %v267
      %v300 = vunpack.c.l.b16 %v268
      %v301 = vunpack.c.l.b16 %v269
      %v302 = vunpack.c.l.b16 %v270
      %v303 = vunpack.c.l.b16 %v271
      %v304 = vunpack.c.l.b16 %v272
      %v305 = vunpack.c.l.b16 %v273
      %v306 = vunpack.c.l.b16 %v274
      %v307 = vunpack.c.l.b16 %v275
      %v308 = vunpack.c.l.b16 %v276
      %v309 = vunpack.c.l.b16 %v277
      %v310 = vpack.c.b16 %v295, %v294
      %v311 = vpack.c.b16 %v297, %v296
      %v312 = vpack.c.b16 %v299, %v298
      %v313 = vpack.c.b16 %v301, %v300
      %v314 = vpack.c.b16 %v303, %v302
      %v315 = vpack.c.b16 %v305, %v304
      %v316 = vpack.c.b16 %v307, %v306
      %v317 = vpack.c.b16 %v309, %v308
      %v320 = vunpack.c.l.b16 %v259
      %v321 = vunpack.c.h.b16 %v259
      %v322 = vunpack.c.l.b16 %v260
      %v323 = vunpack.c.h.b16 %v260
      %v324 = vpack.c.b16 %v320, %v320
      %v325 = vpack.c.b16 %v321, %v321
      %v326 = vpack.c.b16 %v322, %v322
      %v327 = vpack.c.b16 %v323, %v323
      %328 = vrot.lane.b32.xlu0 %v324, 127
      %v329 = vpop.permute.xlu0 %328
      %330 = vrot.lane.b32.xlu0 %v325, 127
      %v331 = vpop.permute.xlu0 %330
      %332 = vrot.lane.b32.xlu0 %v326, 127
      %v333 = vpop.permute.xlu0 %332
      %334 = vrot.lane.b32.xlu0 %v327, 127
      %v335 = vpop.permute.xlu0 %334
      %vm336 = vcmask 1039360
      %v337 = vsel %vm336, %v329, %v331
      %v338 = vsel %vm336, %v331, %v333
      %v339 = vsel %vm336, %v333, %v335
      %vm340 = vcmask 64512
      %v342 = vsel %vm340, %v310, 0
      %v345 = vsel %vm340, %v311, 0
      %v348 = vsel %vm340, %v312, 0
      %v351 = vsel %vm340, %v313, 0
      %v354 = vsel %vm340, %v314, 0
      %v357 = vsel %vm340, %v315, 0
      %v360 = vsel %vm340, %v316, 0
      %v363 = vsel %vm340, %v317, 0
      %vm365 = vcmask 1043456
      %v367 = vsel %vm365, %v337, 0
      %v370 = vsel %vm365, %v338, 0
      %v373 = vsel %vm365, %v339, 0
      %375 = vmatprep.subr.bf16.mxu0 %v370
      %376 = vmatpush1.bf16.msra.mxu0 %v367
      %377 = vmatprep.subr.bf16.mxu0 0
      %378 = vmatpush1.bf16.msra.mxu0 0
      %379 = vmatprep.subr.bf16.mxu0 0
      %380 = vmatpush1.bf16.msra.mxu0 0
      %381 = vmatprep.subr.bf16.mxu0 0
      %382 = vmatpush1.bf16.msra.mxu0 0
      %383 = vmatprep.subr.bf16.mxu0 0
      %384 = vmatpush1.bf16.msra.mxu0 0
      %385 = vmatprep.subr.bf16.mxu0 0
      %386 = vmatpush1.bf16.msra.mxu0 0
      %387 = vmatprep.subr.bf16.mxu0 0
      %388 = vmatpush1.bf16.msra.mxu0 0
      %389 = vmatprep.subr.bf16.mxu0 0
      %390 = vmatpush1.bf16.msra.mxu0 0
      %391 = vmatprep.subr.bf16.mxu0 0
      %392 = vmatpush1.bf16.msra.mxu0 0
      %393 = vmatprep.subr.bf16.mxu0 0
      %394 = vmatpush1.bf16.msra.mxu0 0
      %395 = vmatprep.subr.bf16.mxu0 0
      %396 = vmatpush1.bf16.msra.mxu0 0
      %397 = vmatprep.subr.bf16.mxu0 0
      %398 = vmatpush1.bf16.msra.mxu0 0
      %399 = vmatprep.subr.bf16.mxu0 0
      %400 = vmatpush1.bf16.msra.mxu0 0
      %401 = vmatprep.subr.bf16.mxu0 0
      %402 = vmatpush1.bf16.msra.mxu0 0
      %403 = vmatprep.subr.bf16.mxu0 0
      %404 = vmatpush1.bf16.msra.mxu0 0
      %405 = vmatprep.subr.bf16.mxu0 0
      %406 = vmatpush1.bf16.msra.mxu0 0
      %407 = vmatprep.mubr.bf16.mxu0 0
      %408 = vmatmul.mubr.bf16.gmra.mrb[0].mxu0 %v342
      %v409 = vpop.f32.mrb[0].mxu0
      %v410 = vadd.f32 0.0, %v409
      %v411 = vpop.f32.mrb[0].mxu0
      %v412 = vadd.f32 0.0, %v411
      %v413 = vpop.f32.mrb[0].mxu0
      %v414 = vadd.f32 0.0, %v413
      %v415 = vpop.f32.mrb[0].mxu0
      %v416 = vadd.f32 0.0, %v415
      %417 = vmatprep.mubr.bf16.mxu0 0
      %418 = vmatmul.mubr.bf16.gmra.mrb[0].mxu0 %v345
      %v419 = vpop.f32.mrb[0].mxu0
      %v420 = vadd.f32 0.0, %v419
      %v421 = vpop.f32.mrb[0].mxu0
      %v422 = vadd.f32 0.0, %v421
      %v423 = vpop.f32.mrb[0].mxu0
      %v424 = vadd.f32 0.0, %v423
      %v425 = vpop.f32.mrb[0].mxu0
      %v426 = vadd.f32 0.0, %v425
      %427 = vmatprep.mubr.bf16.mxu0 0
      %428 = vmatmul.mubr.bf16.gmra.mrb[0].mxu0 %v348
      %v429 = vpop.f32.mrb[0].mxu0
      %v430 = vadd.f32 0.0, %v429
      %v431 = vpop.f32.mrb[0].mxu0
      %v432 = vadd.f32 0.0, %v431
      %v433 = vpop.f32.mrb[0].mxu0
      %v434 = vadd.f32 0.0, %v433
      %v435 = vpop.f32.mrb[0].mxu0
      %v436 = vadd.f32 0.0, %v435
      %437 = vmatprep.mubr.bf16.mxu0 0
      %438 = vmatmul.mubr.bf16.gmra.mrb[0].mxu0 %v351
      %v439 = vpop.f32.mrb[0].mxu0
      %v440 = vadd.f32 0.0, %v439
      %v441 = vpop.f32.mrb[0].mxu0
      %v442 = vadd.f32 0.0, %v441
      %v443 = vpop.f32.mrb[0].mxu0
      %v444 = vadd.f32 0.0, %v443
      %v445 = vpop.f32.mrb[0].mxu0
      %v446 = vadd.f32 0.0, %v445
      %447 = vmatprep.mubr.bf16.mxu0 0
      %448 = vmatmul.mubr.bf16.gmra.mrb[0].mxu0 %v354
      %v449 = vpop.f32.mrb[0].mxu0
      %v450 = vadd.f32 0.0, %v449
      %v451 = vpop.f32.mrb[0].mxu0
      %v452 = vadd.f32 0.0, %v451
      %v453 = vpop.f32.mrb[0].mxu0
      %v454 = vadd.f32 0.0, %v453
      %v455 = vpop.f32.mrb[0].mxu0
      %v456 = vadd.f32 0.0, %v455
      %457 = vmatprep.mubr.bf16.mxu0 0
      %458 = vmatmul.mubr.bf16.gmra.mrb[0].mxu0 %v357
      %v459 = vpop.f32.mrb[0].mxu0
      %v460 = vadd.f32 0.0, %v459
      %v461 = vpop.f32.mrb[0].mxu0
      %v462 = vadd.f32 0.0, %v461
      %v463 = vpop.f32.mrb[0].mxu0
      %v464 = vadd.f32 0.0, %v463
      %v465 = vpop.f32.mrb[0].mxu0
      %v466 = vadd.f32 0.0, %v465
      %467 = vmatprep.mubr.bf16.mxu0 0
      %468 = vmatmul.mubr.bf16.gmra.mrb[0].mxu0 %v360
      %v469 = vpop.f32.mrb[0].mxu0
      %v470 = vadd.f32 0.0, %v469
      %v471 = vpop.f32.mrb[0].mxu0
      %v472 = vadd.f32 0.0, %v471
      %v473 = vpop.f32.mrb[0].mxu0
      %v474 = vadd.f32 0.0, %v473
      %v475 = vpop.f32.mrb[0].mxu0
      %v476 = vadd.f32 0.0, %v475
      %477 = vmatprep.mubr.bf16.mxu0 0
      %478 = vmatmul.mubr.bf16.gmra.mrb[0].mxu0 %v363
      %v479 = vpop.f32.mrb[0].mxu0
      %v480 = vadd.f32 0.0, %v479
      %v481 = vpop.f32.mrb[0].mxu0
      %v482 = vadd.f32 0.0, %v481
      %v483 = vpop.f32.mrb[0].mxu0
      %v484 = vadd.f32 0.0, %v483
      %v485 = vpop.f32.mrb[0].mxu0
      %v486 = vadd.f32 0.0, %v485
      %487 = vdwg.mxu0
      %488 = vmatprep.subr.bf16.mxu0 0
      %489 = vmatpush1.bf16.msra.mxu0 %v373
      %490 = vmatprep.subr.bf16.mxu0 0
      %491 = vmatpush1.bf16.msra.mxu0 0
      %492 = vmatprep.subr.bf16.mxu0 0
      %493 = vmatpush1.bf16.msra.mxu0 0
      %494 = vmatprep.subr.bf16.mxu0 0
      %495 = vmatpush1.bf16.msra.mxu0 0
      %496 = vmatprep.subr.bf16.mxu0 0
      %497 = vmatpush1.bf16.msra.mxu0 0
      %498 = vmatprep.subr.bf16.mxu0 0
      %499 = vmatpush1.bf16.msra.mxu0 0
      %500 = vmatprep.subr.bf16.mxu0 0
      %501 = vmatpush1.bf16.msra.mxu0 0
      %502 = vmatprep.subr.bf16.mxu0 0
      %503 = vmatpush1.bf16.msra.mxu0 0
      %504 = vmatprep.subr.bf16.mxu0 0
      %505 = vmatpush1.bf16.msra.mxu0 0
      %506 = vmatprep.subr.bf16.mxu0 0
      %507 = vmatpush1.bf16.msra.mxu0 0
      %508 = vmatprep.subr.bf16.mxu0 0
      %509 = vmatpush1.bf16.msra.mxu0 0
      %510 = vmatprep.subr.bf16.mxu0 0
      %511 = vmatpush1.bf16.msra.mxu0 0
      %512 = vmatprep.subr.bf16.mxu0 0
      %513 = vmatpush1.bf16.msra.mxu0 0
      %514 = vmatprep.subr.bf16.mxu0 0
      %515 = vmatpush1.bf16.msra.mxu0 0
      %516 = vmatprep.subr.bf16.mxu0 0
      %517 = vmatpush1.bf16.msra.mxu0 0
      %518 = vmatprep.subr.bf16.mxu0 0
      %519 = vmatpush1.bf16.msra.mxu0 0
      %520 = vmatprep.mubr.bf16.mxu0 0
      %521 = vmatmul.mubr.bf16.gmra.mrb[0].mxu0 %v342
      %v522 = vpop.f32.mrb[0].mxu0
      %v523 = vadd.f32 0.0, %v522
      %v524 = vpop.f32.mrb[0].mxu0
      %v525 = vpop.f32.mrb[0].mxu0
      %v526 = vadd.f32 0.0, %v525
      %v527 = vpop.f32.mrb[0].mxu0
      %528 = vmatprep.mubr.bf16.mxu0 0
      %529 = vmatmul.mubr.bf16.gmra.mrb[0].mxu0 %v345
      %v530 = vpop.f32.mrb[0].mxu0
      %v531 = vadd.f32 0.0, %v530
      %v532 = vpop.f32.mrb[0].mxu0
      %v533 = vpop.f32.mrb[0].mxu0
      %v534 = vadd.f32 0.0, %v533
      %v535 = vpop.f32.mrb[0].mxu0
      %536 = vmatprep.mubr.bf16.mxu0 0
      %537 = vmatmul.mubr.bf16.gmra.mrb[0].mxu0 %v348
      %v538 = vpop.f32.mrb[0].mxu0
      %v539 = vadd.f32 0.0, %v538
      %v540 = vpop.f32.mrb[0].mxu0
      %v541 = vpop.f32.mrb[0].mxu0
      %v542 = vadd.f32 0.0, %v541
      %v543 = vpop.f32.mrb[0].mxu0
      %544 = vmatprep.mubr.bf16.mxu0 0
      %545 = vmatmul.mubr.bf16.gmra.mrb[0].mxu0 %v351
      %v546 = vpop.f32.mrb[0].mxu0
      %v547 = vadd.f32 0.0, %v546
      %v548 = vpop.f32.mrb[0].mxu0
      %v549 = vpop.f32.mrb[0].mxu0
      %v550 = vadd.f32 0.0, %v549
      %v551 = vpop.f32.mrb[0].mxu0
      %552 = vmatprep.mubr.bf16.mxu0 0
      %553 = vmatmul.mubr.bf16.gmra.mrb[0].mxu0 %v354
      %v554 = vpop.f32.mrb[0].mxu0
      %v555 = vadd.f32 0.0, %v554
      %v556 = vpop.f32.mrb[0].mxu0
      %v557 = vpop.f32.mrb[0].mxu0
      %v558 = vadd.f32 0.0, %v557
      %v559 = vpop.f32.mrb[0].mxu0
      %560 = vmatprep.mubr.bf16.mxu0 0
      %561 = vmatmul.mubr.bf16.gmra.mrb[0].mxu0 %v357
      %v562 = vpop.f32.mrb[0].mxu0
      %v563 = vadd.f32 0.0, %v562
      %v564 = vpop.f32.mrb[0].mxu0
      %v565 = vpop.f32.mrb[0].mxu0
      %v566 = vadd.f32 0.0, %v565
      %v567 = vpop.f32.mrb[0].mxu0
      %568 = vmatprep.mubr.bf16.mxu0 0
      %569 = vmatmul.mubr.bf16.gmra.mrb[0].mxu0 %v360
      %v570 = vpop.f32.mrb[0].mxu0
      %v571 = vadd.f32 0.0, %v570
      %v572 = vpop.f32.mrb[0].mxu0
      %v573 = vpop.f32.mrb[0].mxu0
      %v574 = vadd.f32 0.0, %v573
      %v575 = vpop.f32.mrb[0].mxu0
      %576 = vmatprep.mubr.bf16.mxu0 0
      %577 = vmatmul.mubr.bf16.gmra.mrb[0].mxu0 %v363
      %v578 = vpop.f32.mrb[0].mxu0
      %v579 = vadd.f32 0.0, %v578
      %v580 = vpop.f32.mrb[0].mxu0
      %v581 = vpop.f32.mrb[0].mxu0
      %v582 = vadd.f32 0.0, %v581
      %v583 = vpop.f32.mrb[0].mxu0
      %584 = vdwg.mxu0
      %v601 = vunpack.c.l.b16 %v243
      %v602 = vunpack.c.l.b16 %v244
      %v603 = vunpack.c.l.b16 %v245
      %v604 = vunpack.c.l.b16 %v246
      %v605 = vunpack.c.l.b16 %v247
      %v606 = vunpack.c.l.b16 %v248
      %v607 = vunpack.c.l.b16 %v249
      %v608 = vunpack.c.l.b16 %v250
      %v609 = vunpack.c.l.b16 %v251
      %v610 = vunpack.c.l.b16 %v252
      %v611 = vunpack.c.l.b16 %v253
      %v612 = vunpack.c.l.b16 %v254
      %v613 = vunpack.c.l.b16 %v255
      %v614 = vunpack.c.l.b16 %v256
      %v615 = vunpack.c.l.b16 %v257
      %v616 = vunpack.c.l.b16 %v258
      %v617 = vpack.c.b16 %v602, %v601
      %v618 = vpack.c.b16 %v604, %v603
      %v619 = vpack.c.b16 %v606, %v605
      %v620 = vpack.c.b16 %v608, %v607
      %v621 = vpack.c.b16 %v610, %v609
      %v622 = vpack.c.b16 %v612, %v611
      %v623 = vpack.c.b16 %v614, %v613
      %v624 = vpack.c.b16 %v616, %v615
      %v627 = vunpack.c.l.b16 %v241
      %v628 = vunpack.c.h.b16 %v241
      %v629 = vunpack.c.l.b16 %v242
      %v630 = vpack.c.b16 %v627, %v627
      %v631 = vpack.c.b16 %v628, %v628
      %v632 = vpack.c.b16 %v629, %v629
      %v634 = vsel %vm340, %v617, 0
      %v637 = vsel %vm340, %v618, 0
      %v640 = vsel %vm340, %v619, 0
      %v643 = vsel %vm340, %v620, 0
      %v646 = vsel %vm340, %v621, 0
      %v649 = vsel %vm340, %v622, 0
      %v652 = vsel %vm340, %v623, 0
      %v655 = vsel %vm340, %v624, 0
      %v658 = vsel %vm365, %v630, 0
      %v661 = vsel %vm365, %v631, 0
      %v664 = vsel %vm365, %v632, 0
      %666 = vmatprep.subr.bf16.mxu0 %v661
      %667 = vmatpush1.bf16.msra.mxu0 %v658
      %668 = vmatprep.subr.bf16.mxu0 0
      %669 = vmatpush1.bf16.msra.mxu0 0
      %670 = vmatprep.subr.bf16.mxu0 0
      %671 = vmatpush1.bf16.msra.mxu0 0
      %672 = vmatprep.subr.bf16.mxu0 0
      %673 = vmatpush1.bf16.msra.mxu0 0
      %674 = vmatprep.subr.bf16.mxu0 0
      %675 = vmatpush1.bf16.msra.mxu0 0
      %676 = vmatprep.subr.bf16.mxu0 0
      %677 = vmatpush1.bf16.msra.mxu0 0
      %678 = vmatprep.subr.bf16.mxu0 0
      %679 = vmatpush1.bf16.msra.mxu0 0
      %680 = vmatprep.subr.bf16.mxu0 0
      %681 = vmatpush1.bf16.msra.mxu0 0
      %682 = vmatprep.subr.bf16.mxu0 0
      %683 = vmatpush1.bf16.msra.mxu0 0
      %684 = vmatprep.subr.bf16.mxu0 0
      %685 = vmatpush1.bf16.msra.mxu0 0
      %686 = vmatprep.subr.bf16.mxu0 0
      %687 = vmatpush1.bf16.msra.mxu0 0
      %688 = vmatprep.subr.bf16.mxu0 0
      %689 = vmatpush1.bf16.msra.mxu0 0
      %690 = vmatprep.subr.bf16.mxu0 0
      %691 = vmatpush1.bf16.msra.mxu0 0
      %692 = vmatprep.subr.bf16.mxu0 0
      %693 = vmatpush1.bf16.msra.mxu0 0
      %694 = vmatprep.subr.bf16.mxu0 0
      %695 = vmatpush1.bf16.msra.mxu0 0
      %696 = vmatprep.subr.bf16.mxu0 0
      %697 = vmatpush1.bf16.msra.mxu0 0
      %698 = vmatprep.mubr.bf16.mxu0 0
      %699 = vmatmul.mubr.bf16.gmra.mrb[0].mxu0 %v634
      %v700 = vpop.f32.mrb[0].mxu0
      %v701 = vadd.f32 %v410, %v700
      %v702 = vpop.f32.mrb[0].mxu0
      %v703 = vadd.f32 %v412, %v702
      %v704 = vpop.f32.mrb[0].mxu0
      %v705 = vadd.f32 %v414, %v704
      %v706 = vpop.f32.mrb[0].mxu0
      %v707 = vadd.f32 %v416, %v706
      %708 = vmatprep.mubr.bf16.mxu0 0
      %709 = vmatmul.mubr.bf16.gmra.mrb[0].mxu0 %v637
      %v710 = vpop.f32.mrb[0].mxu0
      %v711 = vadd.f32 %v420, %v710
      %v712 = vpop.f32.mrb[0].mxu0
      %v713 = vadd.f32 %v422, %v712
      %v714 = vpop.f32.mrb[0].mxu0
      %v715 = vadd.f32 %v424, %v714
      %v716 = vpop.f32.mrb[0].mxu0
      %v717 = vadd.f32 %v426, %v716
      %718 = vmatprep.mubr.bf16.mxu0 0
      %719 = vmatmul.mubr.bf16.gmra.mrb[0].mxu0 %v640
      %v720 = vpop.f32.mrb[0].mxu0
      %v721 = vadd.f32 %v430, %v720
      %v722 = vpop.f32.mrb[0].mxu0
      %v723 = vadd.f32 %v432, %v722
      %v724 = vpop.f32.mrb[0].mxu0
      %v725 = vadd.f32 %v434, %v724
      %v726 = vpop.f32.mrb[0].mxu0
      %v727 = vadd.f32 %v436, %v726
      %728 = vmatprep.mubr.bf16.mxu0 0
      %729 = vmatmul.mubr.bf16.gmra.mrb[0].mxu0 %v643
      %v730 = vpop.f32.mrb[0].mxu0
      %v731 = vadd.f32 %v440, %v730
      %v732 = vpop.f32.mrb[0].mxu0
      %v733 = vadd.f32 %v442, %v732
      %v734 = vpop.f32.mrb[0].mxu0
      %v735 = vadd.f32 %v444, %v734
      %v736 = vpop.f32.mrb[0].mxu0
      %v737 = vadd.f32 %v446, %v736
      %738 = vmatprep.mubr.bf16.mxu0 0
      %739 = vmatmul.mubr.bf16.gmra.mrb[0].mxu0 %v646
      %v740 = vpop.f32.mrb[0].mxu0
      %v741 = vadd.f32 %v450, %v740
      %v742 = vpop.f32.mrb[0].mxu0
      %v743 = vadd.f32 %v452, %v742
      %v744 = vpop.f32.mrb[0].mxu0
      %v745 = vadd.f32 %v454, %v744
      %v746 = vpop.f32.mrb[0].mxu0
      %v747 = vadd.f32 %v456, %v746
      %748 = vmatprep.mubr.bf16.mxu0 0
      %749 = vmatmul.mubr.bf16.gmra.mrb[0].mxu0 %v649
      %v750 = vpop.f32.mrb[0].mxu0
      %v751 = vadd.f32 %v460, %v750
      %v752 = vpop.f32.mrb[0].mxu0
      %v753 = vadd.f32 %v462, %v752
      %v754 = vpop.f32.mrb[0].mxu0
      %v755 = vadd.f32 %v464, %v754
      %v756 = vpop.f32.mrb[0].mxu0
      %v757 = vadd.f32 %v466, %v756
      %758 = vmatprep.mubr.bf16.mxu0 0
      %759 = vmatmul.mubr.bf16.gmra.mrb[0].mxu0 %v652
      %v760 = vpop.f32.mrb[0].mxu0
      %v761 = vadd.f32 %v470, %v760
      %v762 = vpop.f32.mrb[0].mxu0
      %v763 = vadd.f32 %v472, %v762
      %v764 = vpop.f32.mrb[0].mxu0
      %v765 = vadd.f32 %v474, %v764
      %v766 = vpop.f32.mrb[0].mxu0
      %v767 = vadd.f32 %v476, %v766
      %768 = vmatprep.mubr.bf16.mxu0 0
      %769 = vmatmul.mubr.bf16.gmra.mrb[0].mxu0 %v655
      %v770 = vpop.f32.mrb[0].mxu0
      %v771 = vadd.f32 %v480, %v770
      %v772 = vpop.f32.mrb[0].mxu0
      %v773 = vadd.f32 %v482, %v772
      %v774 = vpop.f32.mrb[0].mxu0
      %v775 = vadd.f32 %v484, %v774
      %v776 = vpop.f32.mrb[0].mxu0
      %v777 = vadd.f32 %v486, %v776
      %778 = vdwg.mxu0
      %779 = vmatprep.subr.bf16.mxu0 0
      %780 = vmatpush1.bf16.msra.mxu0 %v664
      %781 = vmatprep.subr.bf16.mxu0 0
      %782 = vmatpush1.bf16.msra.mxu0 0
      %783 = vmatprep.subr.bf16.mxu0 0
      %784 = vmatpush1.bf16.msra.mxu0 0
      %785 = vmatprep.subr.bf16.mxu0 0
      %786 = vmatpush1.bf16.msra.mxu0 0
      %787 = vmatprep.subr.bf16.mxu0 0
      %788 = vmatpush1.bf16.msra.mxu0 0
      %789 = vmatprep.subr.bf16.mxu0 0
      %790 = vmatpush1.bf16.msra.mxu0 0
      %791 = vmatprep.subr.bf16.mxu0 0
      %792 = vmatpush1.bf16.msra.mxu0 0
      %793 = vmatprep.subr.bf16.mxu0 0
      %794 = vmatpush1.bf16.msra.mxu0 0
      %795 = vmatprep.subr.bf16.mxu0 0
      %796 = vmatpush1.bf16.msra.mxu0 0
      %797 = vmatprep.subr.bf16.mxu0 0
      %798 = vmatpush1.bf16.msra.mxu0 0
      %799 = vmatprep.subr.bf16.mxu0 0
      %800 = vmatpush1.bf16.msra.mxu0 0
      %801 = vmatprep.subr.bf16.mxu0 0
      %802 = vmatpush1.bf16.msra.mxu0 0
      %803 = vmatprep.subr.bf16.mxu0 0
      %804 = vmatpush1.bf16.msra.mxu0 0
      %805 = vmatprep.subr.bf16.mxu0 0
      %806 = vmatpush1.bf16.msra.mxu0 0
      %807 = vmatprep.subr.bf16.mxu0 0
      %808 = vmatpush1.bf16.msra.mxu0 0
      %809 = vmatprep.subr.bf16.mxu0 0
      %810 = vmatpush1.bf16.msra.mxu0 0
      %811 = vmatprep.mubr.bf16.mxu0 0
      %812 = vmatmul.mubr.bf16.gmra.mrb[0].mxu0 %v634
      %v813 = vpop.f32.mrb[0].mxu0
      %v814 = vadd.f32 %v523, %v813
      %v815 = vpop.f32.mrb[0].mxu0
      %v816 = vpop.f32.mrb[0].mxu0
      %v817 = vadd.f32 %v526, %v816
      %v818 = vpop.f32.mrb[0].mxu0
      %819 = vmatprep.mubr.bf16.mxu0 0
      %820 = vmatmul.mubr.bf16.gmra.mrb[0].mxu0 %v637
      %v821 = vpop.f32.mrb[0].mxu0
      %v822 = vadd.f32 %v531, %v821
      %v823 = vpop.f32.mrb[0].mxu0
      %v824 = vpop.f32.mrb[0].mxu0
      %v825 = vadd.f32 %v534, %v824
      %v826 = vpop.f32.mrb[0].mxu0
      %827 = vmatprep.mubr.bf16.mxu0 0
      %828 = vmatmul.mubr.bf16.gmra.mrb[0].mxu0 %v640
      %v829 = vpop.f32.mrb[0].mxu0
      %v830 = vadd.f32 %v539, %v829
      %v831 = vpop.f32.mrb[0].mxu0
      %v832 = vpop.f32.mrb[0].mxu0
      %v833 = vadd.f32 %v542, %v832
      %v834 = vpop.f32.mrb[0].mxu0
      %835 = vmatprep.mubr.bf16.mxu0 0
      %836 = vmatmul.mubr.bf16.gmra.mrb[0].mxu0 %v643
      %v837 = vpop.f32.mrb[0].mxu0
      %v838 = vadd.f32 %v547, %v837
      %v839 = vpop.f32.mrb[0].mxu0
      %v840 = vpop.f32.mrb[0].mxu0
      %v841 = vadd.f32 %v550, %v840
      %v842 = vpop.f32.mrb[0].mxu0
      %843 = vmatprep.mubr.bf16.mxu0 0
      %844 = vmatmul.mubr.bf16.gmra.mrb[0].mxu0 %v646
      %v845 = vpop.f32.mrb[0].mxu0
      %v846 = vadd.f32 %v555, %v845
      %v847 = vpop.f32.mrb[0].mxu0
      %v848 = vpop.f32.mrb[0].mxu0
      %v849 = vadd.f32 %v558, %v848
      %v850 = vpop.f32.mrb[0].mxu0
      %851 = vmatprep.mubr.bf16.mxu0 0
      %852 = vmatmul.mubr.bf16.gmra.mrb[0].mxu0 %v649
      %v853 = vpop.f32.mrb[0].mxu0
      %v854 = vadd.f32 %v563, %v853
      %v855 = vpop.f32.mrb[0].mxu0
      %v856 = vpop.f32.mrb[0].mxu0
      %v857 = vadd.f32 %v566, %v856
      %v858 = vpop.f32.mrb[0].mxu0
      %859 = vmatprep.mubr.bf16.mxu0 0
      %860 = vmatmul.mubr.bf16.gmra.mrb[0].mxu0 %v652
      %v861 = vpop.f32.mrb[0].mxu0
      %v862 = vadd.f32 %v571, %v861
      %v863 = vpop.f32.mrb[0].mxu0
      %v864 = vpop.f32.mrb[0].mxu0
      %v865 = vadd.f32 %v574, %v864
      %v866 = vpop.f32.mrb[0].mxu0
      %867 = vmatprep.mubr.bf16.mxu0 0
      %868 = vmatmul.mubr.bf16.gmra.mrb[0].mxu0 %v655
      %v869 = vpop.f32.mrb[0].mxu0
      %v870 = vadd.f32 %v579, %v869
      %v871 = vpop.f32.mrb[0].mxu0
      %v872 = vpop.f32.mrb[0].mxu0
      %v873 = vadd.f32 %v582, %v872
      %v874 = vpop.f32.mrb[0].mxu0
      %875 = vdwg.mxu0
      %s876 = scalar_lea.vmem %s221, 128
      %v877 = vld [vmem:[%s876] sm:$0xf]
      %v878 = vld [vmem:[%s876 + $0x4] sm:$0xf]
      %v879 = vld [vmem:[%s876 + $0x8] sm:$0xf]
      %v880 = vld [vmem:[%s876 + $0xc] sm:$0xf]
      %v881 = vld [vmem:[%s876 + $0x10] sm:$0xf]
      %v882 = vld [vmem:[%s876 + $0x14] sm:$0xf]
      %v883 = vld [vmem:[%s876 + $0x18] sm:$0xf]
      %v884 = vld [vmem:[%s876 + $0x1c] sm:$0xf]
      %v885 = vld [vmem:[%s876 + $0x20] sm:$0xf]
      %v886 = vld [vmem:[%s876 + $0x24] sm:$0xf]
      %v887 = vld [vmem:[%s876 + $0x28] sm:$0xf]
      %v888 = vld [vmem:[%s876 + $0x2c] sm:$0xf]
      %v889 = vld [vmem:[%s876 + $0x30] sm:$0xf]
      %v890 = vld [vmem:[%s876 + $0x34] sm:$0xf]
      %v891 = vld [vmem:[%s876 + $0x38] sm:$0xf]
      %v892 = vld [vmem:[%s876 + $0x3c] sm:$0xf]
      %v909 = vunpack.c.l.b16 %v877
      %v910 = vunpack.c.l.b16 %v878
      %v911 = vunpack.c.l.b16 %v879
      %v912 = vunpack.c.l.b16 %v880
      %v913 = vunpack.c.l.b16 %v881
      %v914 = vunpack.c.l.b16 %v882
      %v915 = vunpack.c.l.b16 %v883
      %v916 = vunpack.c.l.b16 %v884
      %v917 = vunpack.c.l.b16 %v885
      %v918 = vunpack.c.l.b16 %v886
      %v919 = vunpack.c.l.b16 %v887
      %v920 = vunpack.c.l.b16 %v888
      %v921 = vunpack.c.l.b16 %v889
      %v922 = vunpack.c.l.b16 %v890
      %v923 = vunpack.c.l.b16 %v891
      %v924 = vunpack.c.l.b16 %v892
      %v925 = vpack.c.b16 %v910, %v909
      %v926 = vpack.c.b16 %v912, %v911
      %v927 = vpack.c.b16 %v914, %v913
      %v928 = vpack.c.b16 %v916, %v915
      %v929 = vpack.c.b16 %v918, %v917
      %v930 = vpack.c.b16 %v920, %v919
      %v931 = vpack.c.b16 %v922, %v921
      %v932 = vpack.c.b16 %v924, %v923
      %933 = vrot.lane.b32.xlu0 %v324, 126
      %v934 = vpop.permute.xlu0 %933
      %935 = vrot.lane.b32.xlu0 %v325, 126
      %v936 = vpop.permute.xlu0 %935
      %937 = vrot.lane.b32.xlu0 %v326, 126
      %v938 = vpop.permute.xlu0 %937
      %939 = vrot.lane.b32.xlu0 %v327, 126
      %v940 = vpop.permute.xlu0 %939
      %vm941 = vcmask 1031168
      %v942 = vsel %vm941, %v934, %v936
      %v943 = vsel %vm941, %v936, %v938
      %v944 = vsel %vm941, %v938, %v940
      %v946 = vsel %vm340, %v925, 0
      %v949 = vsel %vm340, %v926, 0
      %v952 = vsel %vm340, %v927, 0
      %v955 = vsel %vm340, %v928, 0
      %v958 = vsel %vm340, %v929, 0
      %v961 = vsel %vm340, %v930, 0
      %v964 = vsel %vm340, %v931, 0
      %v967 = vsel %vm340, %v932, 0
      %v970 = vsel %vm365, %v942, 0
      %v973 = vsel %vm365, %v943, 0
      %v976 = vsel %vm365, %v944, 0
      %978 = vmatprep.subr.bf16.mxu0 %v973
      %979 = vmatpush1.bf16.msra.mxu0 %v970
      %980 = vmatprep.subr.bf16.mxu0 0
      %981 = vmatpush1.bf16.msra.mxu0 0
      %982 = vmatprep.subr.bf16.mxu0 0
      %983 = vmatpush1.bf16.msra.mxu0 0
      %984 = vmatprep.subr.bf16.mxu0 0
      %985 = vmatpush1.bf16.msra.mxu0 0
      %986 = vmatprep.subr.bf16.mxu0 0
      %987 = vmatpush1.bf16.msra.mxu0 0
      %988 = vmatprep.subr.bf16.mxu0 0
      %989 = vmatpush1.bf16.msra.mxu0 0
      %990 = vmatprep.subr.bf16.mxu0 0
      %991 = vmatpush1.bf16.msra.mxu0 0
      %992 = vmatprep.subr.bf16.mxu0 0
      %993 = vmatpush1.bf16.msra.mxu0 0
      %994 = vmatprep.subr.bf16.mxu0 0
      %995 = vmatpush1.bf16.msra.mxu0 0
      %996 = vmatprep.subr.bf16.mxu0 0
      %997 = vmatpush1.bf16.msra.mxu0 0
      %998 = vmatprep.subr.bf16.mxu0 0
      %999 = vmatpush1.bf16.msra.mxu0 0
      %1000 = vmatprep.subr.bf16.mxu0 0
      %1001 = vmatpush1.bf16.msra.mxu0 0
      %1002 = vmatprep.subr.bf16.mxu0 0
      %1003 = vmatpush1.bf16.msra.mxu0 0
      %1004 = vmatprep.subr.bf16.mxu0 0
      %1005 = vmatpush1.bf16.msra.mxu0 0
      %1006 = vmatprep.subr.bf16.mxu0 0
      %1007 = vmatpush1.bf16.msra.mxu0 0
      %1008 = vmatprep.subr.bf16.mxu0 0
      %1009 = vmatpush1.bf16.msra.mxu0 0
      %1010 = vmatprep.mubr.bf16.mxu0 0
      %1011 = vmatmul.mubr.bf16.gmra.mrb[0].mxu0 %v946
      %v1012 = vpop.f32.mrb[0].mxu0
      %v1013 = vadd.f32 0.0, %v1012
      %v1014 = vpop.f32.mrb[0].mxu0
      %v1015 = vadd.f32 0.0, %v1014
      %v1016 = vpop.f32.mrb[0].mxu0
      %v1017 = vadd.f32 0.0, %v1016
      %v1018 = vpop.f32.mrb[0].mxu0
      %v1019 = vadd.f32 0.0, %v1018
      %1020 = vmatprep.mubr.bf16.mxu0 0
      %1021 = vmatmul.mubr.bf16.gmra.mrb[0].mxu0 %v949
      %v1022 = vpop.f32.mrb[0].mxu0
      %v1023 = vadd.f32 0.0, %v1022
      %v1024 = vpop.f32.mrb[0].mxu0
      %v1025 = vadd.f32 0.0, %v1024
      %v1026 = vpop.f32.mrb[0].mxu0
      %v1027 = vadd.f32 0.0, %v1026
      %v1028 = vpop.f32.mrb[0].mxu0
      %v1029 = vadd.f32 0.0, %v1028
      %1030 = vmatprep.mubr.bf16.mxu0 0
      %1031 = vmatmul.mubr.bf16.gmra.mrb[0].mxu0 %v952
      %v1032 = vpop.f32.mrb[0].mxu0
      %v1033 = vadd.f32 0.0, %v1032
      %v1034 = vpop.f32.mrb[0].mxu0
      %v1035 = vadd.f32 0.0, %v1034
      %v1036 = vpop.f32.mrb[0].mxu0
      %v1037 = vadd.f32 0.0, %v1036
      %v1038 = vpop.f32.mrb[0].mxu0
      %v1039 = vadd.f32 0.0, %v1038
      %1040 = vmatprep.mubr.bf16.mxu0 0
      %1041 = vmatmul.mubr.bf16.gmra.mrb[0].mxu0 %v955
      %v1042 = vpop.f32.mrb[0].mxu0
      %v1043 = vadd.f32 0.0, %v1042
      %v1044 = vpop.f32.mrb[0].mxu0
      %v1045 = vadd.f32 0.0, %v1044
      %v1046 = vpop.f32.mrb[0].mxu0
      %v1047 = vadd.f32 0.0, %v1046
      %v1048 = vpop.f32.mrb[0].mxu0
      %v1049 = vadd.f32 0.0, %v1048
      %1050 = vmatprep.mubr.bf16.mxu0 0
      %1051 = vmatmul.mubr.bf16.gmra.mrb[0].mxu0 %v958
      %v1052 = vpop.f32.mrb[0].mxu0
      %v1053 = vadd.f32 0.0, %v1052
      %v1054 = vpop.f32.mrb[0].mxu0
      %v1055 = vadd.f32 0.0, %v1054
      %v1056 = vpop.f32.mrb[0].mxu0
      %v1057 = vadd.f32 0.0, %v1056
      %v1058 = vpop.f32.mrb[0].mxu0
      %v1059 = vadd.f32 0.0, %v1058
      %1060 = vmatprep.mubr.bf16.mxu0 0
      %1061 = vmatmul.mubr.bf16.gmra.mrb[0].mxu0 %v961
      %v1062 = vpop.f32.mrb[0].mxu0
      %v1063 = vadd.f32 0.0, %v1062
      %v1064 = vpop.f32.mrb[0].mxu0
      %v1065 = vadd.f32 0.0, %v1064
      %v1066 = vpop.f32.mrb[0].mxu0
      %v1067 = vadd.f32 0.0, %v1066
      %v1068 = vpop.f32.mrb[0].mxu0
      %v1069 = vadd.f32 0.0, %v1068
      %1070 = vmatprep.mubr.bf16.mxu0 0
      %1071 = vmatmul.mubr.bf16.gmra.mrb[0].mxu0 %v964
      %v1072 = vpop.f32.mrb[0].mxu0
      %v1073 = vadd.f32 0.0, %v1072
      %v1074 = vpop.f32.mrb[0].mxu0
      %v1075 = vadd.f32 0.0, %v1074
      %v1076 = vpop.f32.mrb[0].mxu0
      %v1077 = vadd.f32 0.0, %v1076
      %v1078 = vpop.f32.mrb[0].mxu0
      %v1079 = vadd.f32 0.0, %v1078
      %1080 = vmatprep.mubr.bf16.mxu0 0
      %1081 = vmatmul.mubr.bf16.gmra.mrb[0].mxu0 %v967
      %v1082 = vpop.f32.mrb[0].mxu0
      %v1083 = vadd.f32 0.0, %v1082
      %v1084 = vpop.f32.mrb[0].mxu0
      %v1085 = vadd.f32 0.0, %v1084
      %v1086 = vpop.f32.mrb[0].mxu0
      %v1087 = vadd.f32 0.0, %v1086
      %v1088 = vpop.f32.mrb[0].mxu0
      %v1089 = vadd.f32 0.0, %v1088
      %1090 = vdwg.mxu0
      %1091 = vmatprep.subr.bf16.mxu0 0
      %1092 = vmatpush1.bf16.msra.mxu0 %v976
      %1093 = vmatprep.subr.bf16.mxu0 0
      %1094 = vmatpush1.bf16.msra.mxu0 0
      %1095 = vmatprep.subr.bf16.mxu0 0
      %1096 = vmatpush1.bf16.msra.mxu0 0
      %1097 = vmatprep.subr.bf16.mxu0 0
      %1098 = vmatpush1.bf16.msra.mxu0 0
      %1099 = vmatprep.subr.bf16.mxu0 0
      %1100 = vmatpush1.bf16.msra.mxu0 0
      %1101 = vmatprep.subr.bf16.mxu0 0
      %1102 = vmatpush1.bf16.msra.mxu0 0
      %1103 = vmatprep.subr.bf16.mxu0 0
      %1104 = vmatpush1.bf16.msra.mxu0 0
      %1105 = vmatprep.subr.bf16.mxu0 0
      %1106 = vmatpush1.bf16.msra.mxu0 0
      %1107 = vmatprep.subr.bf16.mxu0 0
      %1108 = vmatpush1.bf16.msra.mxu0 0
      %1109 = vmatprep.subr.bf16.mxu0 0
      %1110 = vmatpush1.bf16.msra.mxu0 0
      %1111 = vmatprep.subr.bf16.mxu0 0
      %1112 = vmatpush1.bf16.msra.mxu0 0
      %1113 = vmatprep.subr.bf16.mxu0 0
      %1114 = vmatpush1.bf16.msra.mxu0 0
      %1115 = vmatprep.subr.bf16.mxu0 0
      %1116 = vmatpush1.bf16.msra.mxu0 0
      %1117 = vmatprep.subr.bf16.mxu0 0
      %1118 = vmatpush1.bf16.msra.mxu0 0
      %1119 = vmatprep.subr.bf16.mxu0 0
      %1120 = vmatpush1.bf16.msra.mxu0 0
      %1121 = vmatprep.subr.bf16.mxu0 0
      %1122 = vmatpush1.bf16.msra.mxu0 0
      %1123 = vmatprep.mubr.bf16.mxu0 0
      %1124 = vmatmul.mubr.bf16.gmra.mrb[0].mxu0 %v946
      %v1125 = vpop.f32.mrb[0].mxu0
      %v1126 = vadd.f32 0.0, %v1125
      %v1127 = vpop.f32.mrb[0].mxu0
      %v1128 = vpop.f32.mrb[0].mxu0
      %v1129 = vadd.f32 0.0, %v1128
      %v1130 = vpop.f32.mrb[0].mxu0
      %1131 = vmatprep.mubr.bf16.mxu0 0
      %1132 = vmatmul.mubr.bf16.gmra.mrb[0].mxu0 %v949
      %v1133 = vpop.f32.mrb[0].mxu0
      %v1134 = vadd.f32 0.0, %v1133
      %v1135 = vpop.f32.mrb[0].mxu0
      %v1136 = vpop.f32.mrb[0].mxu0
      %v1137 = vadd.f32 0.0, %v1136
      %v1138 = vpop.f32.mrb[0].mxu0
      %1139 = vmatprep.mubr.bf16.mxu0 0
      %1140 = vmatmul.mubr.bf16.gmra.mrb[0].mxu0 %v952
      %v1141 = vpop.f32.mrb[0].mxu0
      %v1142 = vadd.f32 0.0, %v1141
      %v1143 = vpop.f32.mrb[0].mxu0
      %v1144 = vpop.f32.mrb[0].mxu0
      %v1145 = vadd.f32 0.0, %v1144
      %v1146 = vpop.f32.mrb[0].mxu0
      %1147 = vmatprep.mubr.bf16.mxu0 0
      %1148 = vmatmul.mubr.bf16.gmra.mrb[0].mxu0 %v955
      %v1149 = vpop.f32.mrb[0].mxu0
      %v1150 = vadd.f32 0.0, %v1149
      %v1151 = vpop.f32.mrb[0].mxu0
      %v1152 = vpop.f32.mrb[0].mxu0
      %v1153 = vadd.f32 0.0, %v1152
      %v1154 = vpop.f32.mrb[0].mxu0
      %1155 = vmatprep.mubr.bf16.mxu0 0
      %1156 = vmatmul.mubr.bf16.gmra.mrb[0].mxu0 %v958
      %v1157 = vpop.f32.mrb[0].mxu0
      %v1158 = vadd.f32 0.0, %v1157
      %v1159 = vpop.f32.mrb[0].mxu0
      %v1160 = vpop.f32.mrb[0].mxu0
      %v1161 = vadd.f32 0.0, %v1160
      %v1162 = vpop.f32.mrb[0].mxu0
      %1163 = vmatprep.mubr.bf16.mxu0 0
      %1164 = vmatmul.mubr.bf16.gmra.mrb[0].mxu0 %v961
      %v1165 = vpop.f32.mrb[0].mxu0
      %v1166 = vadd.f32 0.0, %v1165
      %v1167 = vpop.f32.mrb[0].mxu0
      %v1168 = vpop.f32.mrb[0].mxu0
      %v1169 = vadd.f32 0.0, %v1168
      %v1170 = vpop.f32.mrb[0].mxu0
      %1171 = vmatprep.mubr.bf16.mxu0 0
      %1172 = vmatmul.mubr.bf16.gmra.mrb[0].mxu0 %v964
      %v1173 = vpop.f32.mrb[0].mxu0
      %v1174 = vadd.f32 0.0, %v1173
      %v1175 = vpop.f32.mrb[0].mxu0
      %v1176 = vpop.f32.mrb[0].mxu0
      %v1177 = vadd.f32 0.0, %v1176
      %v1178 = vpop.f32.mrb[0].mxu0
      %1179 = vmatprep.mubr.bf16.mxu0 0
      %1180 = vmatmul.mubr.bf16.gmra.mrb[0].mxu0 %v967
      %v1181 = vpop.f32.mrb[0].mxu0
      %v1182 = vadd.f32 0.0, %v1181
      %v1183 = vpop.f32.mrb[0].mxu0
      %v1184 = vpop.f32.mrb[0].mxu0
      %v1185 = vadd.f32 0.0, %v1184
      %v1186 = vpop.f32.mrb[0].mxu0
      %1187 = vdwg.mxu0
      %v1188 = vadd.f32 %v701, %v1013
      %v1189 = vadd.f32 %v703, %v1015
      %v1190 = vadd.f32 %v814, %v1126
      %v1191 = vadd.f32 %v705, %v1017
      %v1192 = vadd.f32 %v707, %v1019
      %v1193 = vadd.f32 %v817, %v1129
      %v1194 = vadd.f32 %v711, %v1023
      %v1195 = vadd.f32 %v713, %v1025
      %v1196 = vadd.f32 %v822, %v1134
      %v1197 = vadd.f32 %v715, %v1027
      %v1198 = vadd.f32 %v717, %v1029
      %v1199 = vadd.f32 %v825, %v1137
      %v1200 = vadd.f32 %v721, %v1033
      %v1201 = vadd.f32 %v723, %v1035
      %v1202 = vadd.f32 %v830, %v1142
      %v1203 = vadd.f32 %v725, %v1037
      %v1204 = vadd.f32 %v727, %v1039
      %v1205 = vadd.f32 %v833, %v1145
      %v1206 = vadd.f32 %v731, %v1043
      %v1207 = vadd.f32 %v733, %v1045
      %v1208 = vadd.f32 %v838, %v1150
      %v1209 = vadd.f32 %v735, %v1047
      %v1210 = vadd.f32 %v737, %v1049
      %v1211 = vadd.f32 %v841, %v1153
      %v1212 = vadd.f32 %v741, %v1053
      %v1213 = vadd.f32 %v743, %v1055
      %v1214 = vadd.f32 %v846, %v1158
      %v1215 = vadd.f32 %v745, %v1057
      %v1216 = vadd.f32 %v747, %v1059
      %v1217 = vadd.f32 %v849, %v1161
      %v1218 = vadd.f32 %v751, %v1063
      %v1219 = vadd.f32 %v753, %v1065
      %v1220 = vadd.f32 %v854, %v1166
      %v1221 = vadd.f32 %v755, %v1067
      %v1222 = vadd.f32 %v757, %v1069
      %v1223 = vadd.f32 %v857, %v1169
      %v1224 = vadd.f32 %v761, %v1073
      %v1225 = vadd.f32 %v763, %v1075
      %v1226 = vadd.f32 %v862, %v1174
      %v1227 = vadd.f32 %v765, %v1077
      %v1228 = vadd.f32 %v767, %v1079
      %v1229 = vadd.f32 %v865, %v1177
      %v1230 = vadd.f32 %v771, %v1083
      %v1231 = vadd.f32 %v773, %v1085
      %v1232 = vadd.f32 %v870, %v1182
      %v1233 = vadd.f32 %v775, %v1087
      %v1234 = vadd.f32 %v777, %v1089
      %v1235 = vadd.f32 %v873, %v1185
      %s1236 = scalar_lea.vmem %s221, 192
      %v1237 = vld [vmem:[%s1236] sm:$0xf]
      %v1238 = vld [vmem:[%s1236 + $0x4] sm:$0xf]
      %v1239 = vld [vmem:[%s1236 + $0x8] sm:$0xf]
      %v1240 = vld [vmem:[%s1236 + $0xc] sm:$0xf]
      %v1241 = vld [vmem:[%s1236 + $0x10] sm:$0xf]
      %v1242 = vld [vmem:[%s1236 + $0x14] sm:$0xf]
      %v1243 = vld [vmem:[%s1236 + $0x18] sm:$0xf]
      %v1244 = vld [vmem:[%s1236 + $0x1c] sm:$0xf]
      %v1245 = vld [vmem:[%s1236 + $0x20] sm:$0xf]
      %v1246 = vld [vmem:[%s1236 + $0x24] sm:$0xf]
      %v1247 = vld [vmem:[%s1236 + $0x28] sm:$0xf]
      %v1248 = vld [vmem:[%s1236 + $0x2c] sm:$0xf]
      %v1249 = vld [vmem:[%s1236 + $0x30] sm:$0xf]
      %v1250 = vld [vmem:[%s1236 + $0x34] sm:$0xf]
      %v1251 = vld [vmem:[%s1236 + $0x38] sm:$0xf]
      %v1252 = vld [vmem:[%s1236 + $0x3c] sm:$0xf]
      %v1269 = vunpack.c.l.b16 %v1237
      %v1270 = vunpack.c.l.b16 %v1238
      %v1271 = vunpack.c.l.b16 %v1239
      %v1272 = vunpack.c.l.b16 %v1240
      %v1273 = vunpack.c.l.b16 %v1241
      %v1274 = vunpack.c.l.b16 %v1242
      %v1275 = vunpack.c.l.b16 %v1243
      %v1276 = vunpack.c.l.b16 %v1244
      %v1277 = vunpack.c.l.b16 %v1245
      %v1278 = vunpack.c.l.b16 %v1246
      %v1279 = vunpack.c.l.b16 %v1247
      %v1280 = vunpack.c.l.b16 %v1248
      %v1281 = vunpack.c.l.b16 %v1249
      %v1282 = vunpack.c.l.b16 %v1250
      %v1283 = vunpack.c.l.b16 %v1251
      %v1284 = vunpack.c.l.b16 %v1252
      %v1285 = vpack.c.b16 %v1270, %v1269
      %v1286 = vpack.c.b16 %v1272, %v1271
      %v1287 = vpack.c.b16 %v1274, %v1273
      %v1288 = vpack.c.b16 %v1276, %v1275
      %v1289 = vpack.c.b16 %v1278, %v1277
      %v1290 = vpack.c.b16 %v1280, %v1279
      %v1291 = vpack.c.b16 %v1282, %v1281
      %v1292 = vpack.c.b16 %v1284, %v1283
      %1293 = vrot.lane.b32.xlu0 %v324, 110
      %v1294 = vpop.permute.xlu0 %1293
      %1295 = vrot.lane.b32.xlu0 %v325, 110
      %v1296 = vpop.permute.xlu0 %1295
      %1297 = vrot.lane.b32.xlu0 %v326, 110
      %v1298 = vpop.permute.xlu0 %1297
      %1299 = vrot.lane.b32.xlu0 %v327, 110
      %v1300 = vpop.permute.xlu0 %1299
      %vm1301 = vcmask 900096
      %v1302 = vsel %vm1301, %v1294, %v1296
      %v1303 = vsel %vm1301, %v1296, %v1298
      %v1304 = vsel %vm1301, %v1298, %v1300
      %v1306 = vsel %vm340, %v1285, 0
      %v1309 = vsel %vm340, %v1286, 0
      %v1312 = vsel %vm340, %v1287, 0
      %v1315 = vsel %vm340, %v1288, 0
      %v1318 = vsel %vm340, %v1289, 0
      %v1321 = vsel %vm340, %v1290, 0
      %v1324 = vsel %vm340, %v1291, 0
      %v1327 = vsel %vm340, %v1292, 0
      %v1330 = vsel %vm365, %v1302, 0
      %v1333 = vsel %vm365, %v1303, 0
      %v1336 = vsel %vm365, %v1304, 0
      %1338 = vmatprep.subr.bf16.mxu0 %v1333
      %1339 = vmatpush1.bf16.msra.mxu0 %v1330
      %1340 = vmatprep.subr.bf16.mxu0 0
      %1341 = vmatpush1.bf16.msra.mxu0 0
      %1342 = vmatprep.subr.bf16.mxu0 0
      %1343 = vmatpush1.bf16.msra.mxu0 0
      %1344 = vmatprep.subr.bf16.mxu0 0
      %1345 = vmatpush1.bf16.msra.mxu0 0
      %1346 = vmatprep.subr.bf16.mxu0 0
      %1347 = vmatpush1.bf16.msra.mxu0 0
      %1348 = vmatprep.subr.bf16.mxu0 0
      %1349 = vmatpush1.bf16.msra.mxu0 0
      %1350 = vmatprep.subr.bf16.mxu0 0
      %1351 = vmatpush1.bf16.msra.mxu0 0
      %1352 = vmatprep.subr.bf16.mxu0 0
      %1353 = vmatpush1.bf16.msra.mxu0 0
      %1354 = vmatprep.subr.bf16.mxu0 0
      %1355 = vmatpush1.bf16.msra.mxu0 0
      %1356 = vmatprep.subr.bf16.mxu0 0
      %1357 = vmatpush1.bf16.msra.mxu0 0
      %1358 = vmatprep.subr.bf16.mxu0 0
      %1359 = vmatpush1.bf16.msra.mxu0 0
      %1360 = vmatprep.subr.bf16.mxu0 0
      %1361 = vmatpush1.bf16.msra.mxu0 0
      %1362 = vmatprep.subr.bf16.mxu0 0
      %1363 = vmatpush1.bf16.msra.mxu0 0
      %1364 = vmatprep.subr.bf16.mxu0 0
      %1365 = vmatpush1.bf16.msra.mxu0 0
      %1366 = vmatprep.subr.bf16.mxu0 0
      %1367 = vmatpush1.bf16.msra.mxu0 0
      %1368 = vmatprep.subr.bf16.mxu0 0
      %1369 = vmatpush1.bf16.msra.mxu0 0
      %1370 = vmatprep.mubr.bf16.mxu0 0
      %1371 = vmatmul.mubr.bf16.gmra.mrb[0].mxu0 %v1306
      %v1372 = vpop.f32.mrb[0].mxu0
      %v1373 = vadd.f32 0.0, %v1372
      %v1374 = vpop.f32.mrb[0].mxu0
      %v1375 = vadd.f32 0.0, %v1374
      %v1376 = vpop.f32.mrb[0].mxu0
      %v1377 = vadd.f32 0.0, %v1376
      %v1378 = vpop.f32.mrb[0].mxu0
      %v1379 = vadd.f32 0.0, %v1378
      %1380 = vmatprep.mubr.bf16.mxu0 0
      %1381 = vmatmul.mubr.bf16.gmra.mrb[0].mxu0 %v1309
      %v1382 = vpop.f32.mrb[0].mxu0
      %v1383 = vadd.f32 0.0, %v1382
      %v1384 = vpop.f32.mrb[0].mxu0
      %v1385 = vadd.f32 0.0, %v1384
      %v1386 = vpop.f32.mrb[0].mxu0
      %v1387 = vadd.f32 0.0, %v1386
      %v1388 = vpop.f32.mrb[0].mxu0
      %v1389 = vadd.f32 0.0, %v1388
      %1390 = vmatprep.mubr.bf16.mxu0 0
      %1391 = vmatmul.mubr.bf16.gmra.mrb[0].mxu0 %v1312
      %v1392 = vpop.f32.mrb[0].mxu0
      %v1393 = vadd.f32 0.0, %v1392
      %v1394 = vpop.f32.mrb[0].mxu0
      %v1395 = vadd.f32 0.0, %v1394
      %v1396 = vpop.f32.mrb[0].mxu0
      %v1397 = vadd.f32 0.0, %v1396
      %v1398 = vpop.f32.mrb[0].mxu0
      %v1399 = vadd.f32 0.0, %v1398
      %1400 = vmatprep.mubr.bf16.mxu0 0
      %1401 = vmatmul.mubr.bf16.gmra.mrb[0].mxu0 %v1315
      %v1402 = vpop.f32.mrb[0].mxu0
      %v1403 = vadd.f32 0.0, %v1402
      %v1404 = vpop.f32.mrb[0].mxu0
      %v1405 = vadd.f32 0.0, %v1404
      %v1406 = vpop.f32.mrb[0].mxu0
      %v1407 = vadd.f32 0.0, %v1406
      %v1408 = vpop.f32.mrb[0].mxu0
      %v1409 = vadd.f32 0.0, %v1408
      %1410 = vmatprep.mubr.bf16.mxu0 0
      %1411 = vmatmul.mubr.bf16.gmra.mrb[0].mxu0 %v1318
      %v1412 = vpop.f32.mrb[0].mxu0
      %v1413 = vadd.f32 0.0, %v1412
      %v1414 = vpop.f32.mrb[0].mxu0
      %v1415 = vadd.f32 0.0, %v1414
      %v1416 = vpop.f32.mrb[0].mxu0
      %v1417 = vadd.f32 0.0, %v1416
      %v1418 = vpop.f32.mrb[0].mxu0
      %v1419 = vadd.f32 0.0, %v1418
      %1420 = vmatprep.mubr.bf16.mxu0 0
      %1421 = vmatmul.mubr.bf16.gmra.mrb[0].mxu0 %v1321
      %v1422 = vpop.f32.mrb[0].mxu0
      %v1423 = vadd.f32 0.0, %v1422
      %v1424 = vpop.f32.mrb[0].mxu0
      %v1425 = vadd.f32 0.0, %v1424
      %v1426 = vpop.f32.mrb[0].mxu0
      %v1427 = vadd.f32 0.0, %v1426
      %v1428 = vpop.f32.mrb[0].mxu0
      %v1429 = vadd.f32 0.0, %v1428
      %1430 = vmatprep.mubr.bf16.mxu0 0
      %1431 = vmatmul.mubr.bf16.gmra.mrb[0].mxu0 %v1324
      %v1432 = vpop.f32.mrb[0].mxu0
      %v1433 = vadd.f32 0.0, %v1432
      %v1434 = vpop.f32.mrb[0].mxu0
      %v1435 = vadd.f32 0.0, %v1434
      %v1436 = vpop.f32.mrb[0].mxu0
      %v1437 = vadd.f32 0.0, %v1436
      %v1438 = vpop.f32.mrb[0].mxu0
      %v1439 = vadd.f32 0.0, %v1438
      %1440 = vmatprep.mubr.bf16.mxu0 0
      %1441 = vmatmul.mubr.bf16.gmra.mrb[0].mxu0 %v1327
      %v1442 = vpop.f32.mrb[0].mxu0
      %v1443 = vadd.f32 0.0, %v1442
      %v1444 = vpop.f32.mrb[0].mxu0
      %v1445 = vadd.f32 0.0, %v1444
      %v1446 = vpop.f32.mrb[0].mxu0
      %v1447 = vadd.f32 0.0, %v1446
      %v1448 = vpop.f32.mrb[0].mxu0
      %v1449 = vadd.f32 0.0, %v1448
      %1450 = vdwg.mxu0
      %1451 = vmatprep.subr.bf16.mxu0 0
      %1452 = vmatpush1.bf16.msra.mxu0 %v1336
      %1453 = vmatprep.subr.bf16.mxu0 0
      %1454 = vmatpush1.bf16.msra.mxu0 0
      %1455 = vmatprep.subr.bf16.mxu0 0
      %1456 = vmatpush1.bf16.msra.mxu0 0
      %1457 = vmatprep.subr.bf16.mxu0 0
      %1458 = vmatpush1.bf16.msra.mxu0 0
      %1459 = vmatprep.subr.bf16.mxu0 0
      %1460 = vmatpush1.bf16.msra.mxu0 0
      %1461 = vmatprep.subr.bf16.mxu0 0
      %1462 = vmatpush1.bf16.msra.mxu0 0
      %1463 = vmatprep.subr.bf16.mxu0 0
      %1464 = vmatpush1.bf16.msra.mxu0 0
      %1465 = vmatprep.subr.bf16.mxu0 0
      %1466 = vmatpush1.bf16.msra.mxu0 0
      %1467 = vmatprep.subr.bf16.mxu0 0
      %1468 = vmatpush1.bf16.msra.mxu0 0
      %1469 = vmatprep.subr.bf16.mxu0 0
      %1470 = vmatpush1.bf16.msra.mxu0 0
      %1471 = vmatprep.subr.bf16.mxu0 0
      %1472 = vmatpush1.bf16.msra.mxu0 0
      %1473 = vmatprep.subr.bf16.mxu0 0
      %1474 = vmatpush1.bf16.msra.mxu0 0
      %1475 = vmatprep.subr.bf16.mxu0 0
      %1476 = vmatpush1.bf16.msra.mxu0 0
      %1477 = vmatprep.subr.bf16.mxu0 0
      %1478 = vmatpush1.bf16.msra.mxu0 0
      %1479 = vmatprep.subr.bf16.mxu0 0
      %1480 = vmatpush1.bf16.msra.mxu0 0
      %1481 = vmatprep.subr.bf16.mxu0 0
      %1482 = vmatpush1.bf16.msra.mxu0 0
      %1483 = vmatprep.mubr.bf16.mxu0 0
      %1484 = vmatmul.mubr.bf16.gmra.mrb[0].mxu0 %v1306
      %v1485 = vpop.f32.mrb[0].mxu0
      %v1486 = vadd.f32 0.0, %v1485
      %v1487 = vpop.f32.mrb[0].mxu0
      %v1488 = vpop.f32.mrb[0].mxu0
      %v1489 = vadd.f32 0.0, %v1488
      %v1490 = vpop.f32.mrb[0].mxu0
      %1491 = vmatprep.mubr.bf16.mxu0 0
      %1492 = vmatmul.mubr.bf16.gmra.mrb[0].mxu0 %v1309
      %v1493 = vpop.f32.mrb[0].mxu0
      %v1494 = vadd.f32 0.0, %v1493
      %v1495 = vpop.f32.mrb[0].mxu0
      %v1496 = vpop.f32.mrb[0].mxu0
      %v1497 = vadd.f32 0.0, %v1496
      %v1498 = vpop.f32.mrb[0].mxu0
      %1499 = vmatprep.mubr.bf16.mxu0 0
      %1500 = vmatmul.mubr.bf16.gmra.mrb[0].mxu0 %v1312
      %v1501 = vpop.f32.mrb[0].mxu0
      %v1502 = vadd.f32 0.0, %v1501
      %v1503 = vpop.f32.mrb[0].mxu0
      %v1504 = vpop.f32.mrb[0].mxu0
      %v1505 = vadd.f32 0.0, %v1504
      %v1506 = vpop.f32.mrb[0].mxu0
      %1507 = vmatprep.mubr.bf16.mxu0 0
      %1508 = vmatmul.mubr.bf16.gmra.mrb[0].mxu0 %v1315
      %v1509 = vpop.f32.mrb[0].mxu0
      %v1510 = vadd.f32 0.0, %v1509
      %v1511 = vpop.f32.mrb[0].mxu0
      %v1512 = vpop.f32.mrb[0].mxu0
      %v1513 = vadd.f32 0.0, %v1512
      %v1514 = vpop.f32.mrb[0].mxu0
      %1515 = vmatprep.mubr.bf16.mxu0 0
      %1516 = vmatmul.mubr.bf16.gmra.mrb[0].mxu0 %v1318
      %v1517 = vpop.f32.mrb[0].mxu0
      %v1518 = vadd.f32 0.0, %v1517
      %v1519 = vpop.f32.mrb[0].mxu0
      %v1520 = vpop.f32.mrb[0].mxu0
      %v1521 = vadd.f32 0.0, %v1520
      %v1522 = vpop.f32.mrb[0].mxu0
      %1523 = vmatprep.mubr.bf16.mxu0 0
      %1524 = vmatmul.mubr.bf16.gmra.mrb[0].mxu0 %v1321
      %v1525 = vpop.f32.mrb[0].mxu0
      %v1526 = vadd.f32 0.0, %v1525
      %v1527 = vpop.f32.mrb[0].mxu0
      %v1528 = vpop.f32.mrb[0].mxu0
      %v1529 = vadd.f32 0.0, %v1528
      %v1530 = vpop.f32.mrb[0].mxu0
      %1531 = vmatprep.mubr.bf16.mxu0 0
      %1532 = vmatmul.mubr.bf16.gmra.mrb[0].mxu0 %v1324
      %v1533 = vpop.f32.mrb[0].mxu0
      %v1534 = vadd.f32 0.0, %v1533
      %v1535 = vpop.f32.mrb[0].mxu0
      %v1536 = vpop.f32.mrb[0].mxu0
      %v1537 = vadd.f32 0.0, %v1536
      %v1538 = vpop.f32.mrb[0].mxu0
      %1539 = vmatprep.mubr.bf16.mxu0 0
      %1540 = vmatmul.mubr.bf16.gmra.mrb[0].mxu0 %v1327
      %v1541 = vpop.f32.mrb[0].mxu0
      %v1542 = vadd.f32 0.0, %v1541
      %v1543 = vpop.f32.mrb[0].mxu0
      %v1544 = vpop.f32.mrb[0].mxu0
      %v1545 = vadd.f32 0.0, %v1544
      %v1546 = vpop.f32.mrb[0].mxu0
      %1547 = vdwg.mxu0
      %v1548 = vadd.f32 %v1188, %v1373
      %v1549 = vadd.f32 %v1189, %v1375
      %v1550 = vadd.f32 %v1190, %v1486
      %v1551 = vadd.f32 %v1191, %v1377
      %v1552 = vadd.f32 %v1192, %v1379
      %v1553 = vadd.f32 %v1193, %v1489
      %v1554 = vadd.f32 %v1194, %v1383
      %v1555 = vadd.f32 %v1195, %v1385
      %v1556 = vadd.f32 %v1196, %v1494
      %v1557 = vadd.f32 %v1197, %v1387
      %v1558 = vadd.f32 %v1198, %v1389
      %v1559 = vadd.f32 %v1199, %v1497
      %v1560 = vadd.f32 %v1200, %v1393
      %v1561 = vadd.f32 %v1201, %v1395
      %v1562 = vadd.f32 %v1202, %v1502
      %v1563 = vadd.f32 %v1203, %v1397
      %v1564 = vadd.f32 %v1204, %v1399
      %v1565 = vadd.f32 %v1205, %v1505
      %v1566 = vadd.f32 %v1206, %v1403
      %v1567 = vadd.f32 %v1207, %v1405
      %v1568 = vadd.f32 %v1208, %v1510
      %v1569 = vadd.f32 %v1209, %v1407
      %v1570 = vadd.f32 %v1210, %v1409
      %v1571 = vadd.f32 %v1211, %v1513
      %v1572 = vadd.f32 %v1212, %v1413
      %v1573 = vadd.f32 %v1213, %v1415
      %v1574 = vadd.f32 %v1214, %v1518
      %v1575 = vadd.f32 %v1215, %v1417
      %v1576 = vadd.f32 %v1216, %v1419
      %v1577 = vadd.f32 %v1217, %v1521
      %v1578 = vadd.f32 %v1218, %v1423
      %v1579 = vadd.f32 %v1219, %v1425
      %v1580 = vadd.f32 %v1220, %v1526
      %v1581 = vadd.f32 %v1221, %v1427
      %v1582 = vadd.f32 %v1222, %v1429
      %v1583 = vadd.f32 %v1223, %v1529
      %v1584 = vadd.f32 %v1224, %v1433
      %v1585 = vadd.f32 %v1225, %v1435
      %v1586 = vadd.f32 %v1226, %v1534
      %v1587 = vadd.f32 %v1227, %v1437
      %v1588 = vadd.f32 %v1228, %v1439
      %v1589 = vadd.f32 %v1229, %v1537
      %v1590 = vadd.f32 %v1230, %v1443
      %v1591 = vadd.f32 %v1231, %v1445
      %v1592 = vadd.f32 %v1232, %v1542
      %v1593 = vadd.f32 %v1233, %v1447
      %v1594 = vadd.f32 %v1234, %v1449
      %v1595 = vadd.f32 %v1235, %v1545
      %s1596 = scalar_lea.vmem %s221, 256
      %v1597 = vld [vmem:[%s1596] sm:$0xf]
      %v1598 = vld [vmem:[%s1596 + $0x4] sm:$0xf]
      %v1599 = vld [vmem:[%s1596 + $0x8] sm:$0xf]
      %v1600 = vld [vmem:[%s1596 + $0xc] sm:$0xf]
      %v1601 = vld [vmem:[%s1596 + $0x10] sm:$0xf]
      %v1602 = vld [vmem:[%s1596 + $0x14] sm:$0xf]
      %v1603 = vld [vmem:[%s1596 + $0x18] sm:$0xf]
      %v1604 = vld [vmem:[%s1596 + $0x1c] sm:$0xf]
      %v1605 = vld [vmem:[%s1596 + $0x20] sm:$0xf]
      %v1606 = vld [vmem:[%s1596 + $0x24] sm:$0xf]
      %v1607 = vld [vmem:[%s1596 + $0x28] sm:$0xf]
      %v1608 = vld [vmem:[%s1596 + $0x2c] sm:$0xf]
      %v1609 = vld [vmem:[%s1596 + $0x30] sm:$0xf]
      %v1610 = vld [vmem:[%s1596 + $0x34] sm:$0xf]
      %v1611 = vld [vmem:[%s1596 + $0x38] sm:$0xf]
      %v1612 = vld [vmem:[%s1596 + $0x3c] sm:$0xf]
      %v1629 = vunpack.c.l.b16 %v1597
      %v1630 = vunpack.c.l.b16 %v1598
      %v1631 = vunpack.c.l.b16 %v1599
      %v1632 = vunpack.c.l.b16 %v1600
      %v1633 = vunpack.c.l.b16 %v1601
      %v1634 = vunpack.c.l.b16 %v1602
      %v1635 = vunpack.c.l.b16 %v1603
      %v1636 = vunpack.c.l.b16 %v1604
      %v1637 = vunpack.c.l.b16 %v1605
      %v1638 = vunpack.c.l.b16 %v1606
      %v1639 = vunpack.c.l.b16 %v1607
      %v1640 = vunpack.c.l.b16 %v1608
      %v1641 = vunpack.c.l.b16 %v1609
      %v1642 = vunpack.c.l.b16 %v1610
      %v1643 = vunpack.c.l.b16 %v1611
      %v1644 = vunpack.c.l.b16 %v1612
      %v1645 = vpack.c.b16 %v1630, %v1629
      %v1646 = vpack.c.b16 %v1632, %v1631
      %v1647 = vpack.c.b16 %v1634, %v1633
      %v1648 = vpack.c.b16 %v1636, %v1635
      %v1649 = vpack.c.b16 %v1638, %v1637
      %v1650 = vpack.c.b16 %v1640, %v1639
      %v1651 = vpack.c.b16 %v1642, %v1641
      %v1652 = vpack.c.b16 %v1644, %v1643
      %1653 = vrot.lane.b32.xlu0 %v324, 109
      %v1654 = vpop.permute.xlu0 %1653
      %1655 = vrot.lane.b32.xlu0 %v325, 109
      %v1656 = vpop.permute.xlu0 %1655
      %1657 = vrot.lane.b32.xlu0 %v326, 109
      %v1658 = vpop.permute.xlu0 %1657
      %1659 = vrot.lane.b32.xlu0 %v327, 109
      %v1660 = vpop.permute.xlu0 %1659
      %vm1661 = vcmask 891904
      %v1662 = vsel %vm1661, %v1654, %v1656
      %v1663 = vsel %vm1661, %v1656, %v1658
      %v1664 = vsel %vm1661, %v1658, %v1660
      %v1666 = vsel %vm340, %v1645, 0
      %v1669 = vsel %vm340, %v1646, 0
      %v1672 = vsel %vm340, %v1647, 0
      %v1675 = vsel %vm340, %v1648, 0
      %v1678 = vsel %vm340, %v1649, 0
      %v1681 = vsel %vm340, %v1650, 0
      %v1684 = vsel %vm340, %v1651, 0
      %v1687 = vsel %vm340, %v1652, 0
      %v1690 = vsel %vm365, %v1662, 0
      %v1693 = vsel %vm365, %v1663, 0
      %v1696 = vsel %vm365, %v1664, 0
      %1698 = vmatprep.subr.bf16.mxu0 %v1693
      %1699 = vmatpush1.bf16.msra.mxu0 %v1690
      %1700 = vmatprep.subr.bf16.mxu0 0
      %1701 = vmatpush1.bf16.msra.mxu0 0
      %1702 = vmatprep.subr.bf16.mxu0 0
      %1703 = vmatpush1.bf16.msra.mxu0 0
      %1704 = vmatprep.subr.bf16.mxu0 0
      %1705 = vmatpush1.bf16.msra.mxu0 0
      %1706 = vmatprep.subr.bf16.mxu0 0
      %1707 = vmatpush1.bf16.msra.mxu0 0
      %1708 = vmatprep.subr.bf16.mxu0 0
      %1709 = vmatpush1.bf16.msra.mxu0 0
      %1710 = vmatprep.subr.bf16.mxu0 0
      %1711 = vmatpush1.bf16.msra.mxu0 0
      %1712 = vmatprep.subr.bf16.mxu0 0
      %1713 = vmatpush1.bf16.msra.mxu0 0
      %1714 = vmatprep.subr.bf16.mxu0 0
      %1715 = vmatpush1.bf16.msra.mxu0 0
      %1716 = vmatprep.subr.bf16.mxu0 0
      %1717 = vmatpush1.bf16.msra.mxu0 0
      %1718 = vmatprep.subr.bf16.mxu0 0
      %1719 = vmatpush1.bf16.msra.mxu0 0
      %1720 = vmatprep.subr.bf16.mxu0 0
      %1721 = vmatpush1.bf16.msra.mxu0 0
      %1722 = vmatprep.subr.bf16.mxu0 0
      %1723 = vmatpush1.bf16.msra.mxu0 0
      %1724 = vmatprep.subr.bf16.mxu0 0
      %1725 = vmatpush1.bf16.msra.mxu0 0
      %1726 = vmatprep.subr.bf16.mxu0 0
      %1727 = vmatpush1.bf16.msra.mxu0 0
      %1728 = vmatprep.subr.bf16.mxu0 0
      %1729 = vmatpush1.bf16.msra.mxu0 0
      %1730 = vmatprep.mubr.bf16.mxu0 0
      %1731 = vmatmul.mubr.bf16.gmra.mrb[0].mxu0 %v1666
      %v1732 = vpop.f32.mrb[0].mxu0
      %v1733 = vadd.f32 0.0, %v1732
      %v1734 = vpop.f32.mrb[0].mxu0
      %v1735 = vadd.f32 0.0, %v1734
      %v1736 = vpop.f32.mrb[0].mxu0
      %v1737 = vadd.f32 0.0, %v1736
      %v1738 = vpop.f32.mrb[0].mxu0
      %v1739 = vadd.f32 0.0, %v1738
      %1740 = vmatprep.mubr.bf16.mxu0 0
      %1741 = vmatmul.mubr.bf16.gmra.mrb[0].mxu0 %v1669
      %v1742 = vpop.f32.mrb[0].mxu0
      %v1743 = vadd.f32 0.0, %v1742
      %v1744 = vpop.f32.mrb[0].mxu0
      %v1745 = vadd.f32 0.0, %v1744
      %v1746 = vpop.f32.mrb[0].mxu0
      %v1747 = vadd.f32 0.0, %v1746
      %v1748 = vpop.f32.mrb[0].mxu0
      %v1749 = vadd.f32 0.0, %v1748
      %1750 = vmatprep.mubr.bf16.mxu0 0
      %1751 = vmatmul.mubr.bf16.gmra.mrb[0].mxu0 %v1672
      %v1752 = vpop.f32.mrb[0].mxu0
      %v1753 = vadd.f32 0.0, %v1752
      %v1754 = vpop.f32.mrb[0].mxu0
      %v1755 = vadd.f32 0.0, %v1754
      %v1756 = vpop.f32.mrb[0].mxu0
      %v1757 = vadd.f32 0.0, %v1756
      %v1758 = vpop.f32.mrb[0].mxu0
      %v1759 = vadd.f32 0.0, %v1758
      %1760 = vmatprep.mubr.bf16.mxu0 0
      %1761 = vmatmul.mubr.bf16.gmra.mrb[0].mxu0 %v1675
      %v1762 = vpop.f32.mrb[0].mxu0
      %v1763 = vadd.f32 0.0, %v1762
      %v1764 = vpop.f32.mrb[0].mxu0
      %v1765 = vadd.f32 0.0, %v1764
      %v1766 = vpop.f32.mrb[0].mxu0
      %v1767 = vadd.f32 0.0, %v1766
      %v1768 = vpop.f32.mrb[0].mxu0
      %v1769 = vadd.f32 0.0, %v1768
      %1770 = vmatprep.mubr.bf16.mxu0 0
      %1771 = vmatmul.mubr.bf16.gmra.mrb[0].mxu0 %v1678
      %v1772 = vpop.f32.mrb[0].mxu0
      %v1773 = vadd.f32 0.0, %v1772
      %v1774 = vpop.f32.mrb[0].mxu0
      %v1775 = vadd.f32 0.0, %v1774
      %v1776 = vpop.f32.mrb[0].mxu0
      %v1777 = vadd.f32 0.0, %v1776
      %v1778 = vpop.f32.mrb[0].mxu0
      %v1779 = vadd.f32 0.0, %v1778
      %1780 = vmatprep.mubr.bf16.mxu0 0
      %1781 = vmatmul.mubr.bf16.gmra.mrb[0].mxu0 %v1681
      %v1782 = vpop.f32.mrb[0].mxu0
      %v1783 = vadd.f32 0.0, %v1782
      %v1784 = vpop.f32.mrb[0].mxu0
      %v1785 = vadd.f32 0.0, %v1784
      %v1786 = vpop.f32.mrb[0].mxu0
      %v1787 = vadd.f32 0.0, %v1786
      %v1788 = vpop.f32.mrb[0].mxu0
      %v1789 = vadd.f32 0.0, %v1788
      %1790 = vmatprep.mubr.bf16.mxu0 0
      %1791 = vmatmul.mubr.bf16.gmra.mrb[0].mxu0 %v1684
      %v1792 = vpop.f32.mrb[0].mxu0
      %v1793 = vadd.f32 0.0, %v1792
      %v1794 = vpop.f32.mrb[0].mxu0
      %v1795 = vadd.f32 0.0, %v1794
      %v1796 = vpop.f32.mrb[0].mxu0
      %v1797 = vadd.f32 0.0, %v1796
      %v1798 = vpop.f32.mrb[0].mxu0
      %v1799 = vadd.f32 0.0, %v1798
      %1800 = vmatprep.mubr.bf16.mxu0 0
      %1801 = vmatmul.mubr.bf16.gmra.mrb[0].mxu0 %v1687
      %v1802 = vpop.f32.mrb[0].mxu0
      %v1803 = vadd.f32 0.0, %v1802
      %v1804 = vpop.f32.mrb[0].mxu0
      %v1805 = vadd.f32 0.0, %v1804
      %v1806 = vpop.f32.mrb[0].mxu0
      %v1807 = vadd.f32 0.0, %v1806
      %v1808 = vpop.f32.mrb[0].mxu0
      %v1809 = vadd.f32 0.0, %v1808
      %1810 = vdwg.mxu0
      %1811 = vmatprep.subr.bf16.mxu0 0
      %1812 = vmatpush1.bf16.msra.mxu0 %v1696
      %1813 = vmatprep.subr.bf16.mxu0 0
      %1814 = vmatpush1.bf16.msra.mxu0 0
      %1815 = vmatprep.subr.bf16.mxu0 0
      %1816 = vmatpush1.bf16.msra.mxu0 0
      %1817 = vmatprep.subr.bf16.mxu0 0
      %1818 = vmatpush1.bf16.msra.mxu0 0
      %1819 = vmatprep.subr.bf16.mxu0 0
      %1820 = vmatpush1.bf16.msra.mxu0 0
      %1821 = vmatprep.subr.bf16.mxu0 0
      %1822 = vmatpush1.bf16.msra.mxu0 0
      %1823 = vmatprep.subr.bf16.mxu0 0
      %1824 = vmatpush1.bf16.msra.mxu0 0
      %1825 = vmatprep.subr.bf16.mxu0 0
      %1826 = vmatpush1.bf16.msra.mxu0 0
      %1827 = vmatprep.subr.bf16.mxu0 0
      %1828 = vmatpush1.bf16.msra.mxu0 0
      %1829 = vmatprep.subr.bf16.mxu0 0
      %1830 = vmatpush1.bf16.msra.mxu0 0
      %1831 = vmatprep.subr.bf16.mxu0 0
      %1832 = vmatpush1.bf16.msra.mxu0 0
      %1833 = vmatprep.subr.bf16.mxu0 0
      %1834 = vmatpush1.bf16.msra.mxu0 0
      %1835 = vmatprep.subr.bf16.mxu0 0
      %1836 = vmatpush1.bf16.msra.mxu0 0
      %1837 = vmatprep.subr.bf16.mxu0 0
      %1838 = vmatpush1.bf16.msra.mxu0 0
      %1839 = vmatprep.subr.bf16.mxu0 0
      %1840 = vmatpush1.bf16.msra.mxu0 0
      %1841 = vmatprep.subr.bf16.mxu0 0
      %1842 = vmatpush1.bf16.msra.mxu0 0
      %1843 = vmatprep.mubr.bf16.mxu0 0
      %1844 = vmatmul.mubr.bf16.gmra.mrb[0].mxu0 %v1666
      %v1845 = vpop.f32.mrb[0].mxu0
      %v1846 = vadd.f32 0.0, %v1845
      %v1847 = vpop.f32.mrb[0].mxu0
      %v1848 = vpop.f32.mrb[0].mxu0
      %v1849 = vadd.f32 0.0, %v1848
      %v1850 = vpop.f32.mrb[0].mxu0
      %1851 = vmatprep.mubr.bf16.mxu0 0
      %1852 = vmatmul.mubr.bf16.gmra.mrb[0].mxu0 %v1669
      %v1853 = vpop.f32.mrb[0].mxu0
      %v1854 = vadd.f32 0.0, %v1853
      %v1855 = vpop.f32.mrb[0].mxu0
      %v1856 = vpop.f32.mrb[0].mxu0
      %v1857 = vadd.f32 0.0, %v1856
      %v1858 = vpop.f32.mrb[0].mxu0
      %1859 = vmatprep.mubr.bf16.mxu0 0
      %1860 = vmatmul.mubr.bf16.gmra.mrb[0].mxu0 %v1672
      %v1861 = vpop.f32.mrb[0].mxu0
      %v1862 = vadd.f32 0.0, %v1861
      %v1863 = vpop.f32.mrb[0].mxu0
      %v1864 = vpop.f32.mrb[0].mxu0
      %v1865 = vadd.f32 0.0, %v1864
      %v1866 = vpop.f32.mrb[0].mxu0
      %1867 = vmatprep.mubr.bf16.mxu0 0
      %1868 = vmatmul.mubr.bf16.gmra.mrb[0].mxu0 %v1675
      %v1869 = vpop.f32.mrb[0].mxu0
      %v1870 = vadd.f32 0.0, %v1869
      %v1871 = vpop.f32.mrb[0].mxu0
      %v1872 = vpop.f32.mrb[0].mxu0
      %v1873 = vadd.f32 0.0, %v1872
      %v1874 = vpop.f32.mrb[0].mxu0
      %1875 = vmatprep.mubr.bf16.mxu0 0
      %1876 = vmatmul.mubr.bf16.gmra.mrb[0].mxu0 %v1678
      %v1877 = vpop.f32.mrb[0].mxu0
      %v1878 = vadd.f32 0.0, %v1877
      %v1879 = vpop.f32.mrb[0].mxu0
      %v1880 = vpop.f32.mrb[0].mxu0
      %v1881 = vadd.f32 0.0, %v1880
      %v1882 = vpop.f32.mrb[0].mxu0
      %1883 = vmatprep.mubr.bf16.mxu0 0
      %1884 = vmatmul.mubr.bf16.gmra.mrb[0].mxu0 %v1681
      %v1885 = vpop.f32.mrb[0].mxu0
      %v1886 = vadd.f32 0.0, %v1885
      %v1887 = vpop.f32.mrb[0].mxu0
      %v1888 = vpop.f32.mrb[0].mxu0
      %v1889 = vadd.f32 0.0, %v1888
      %v1890 = vpop.f32.mrb[0].mxu0
      %1891 = vmatprep.mubr.bf16.mxu0 0
      %1892 = vmatmul.mubr.bf16.gmra.mrb[0].mxu0 %v1684
      %v1893 = vpop.f32.mrb[0].mxu0
      %v1894 = vadd.f32 0.0, %v1893
      %v1895 = vpop.f32.mrb[0].mxu0
      %v1896 = vpop.f32.mrb[0].mxu0
      %v1897 = vadd.f32 0.0, %v1896
      %v1898 = vpop.f32.mrb[0].mxu0
      %1899 = vmatprep.mubr.bf16.mxu0 0
      %1900 = vmatmul.mubr.bf16.gmra.mrb[0].mxu0 %v1687
      %v1901 = vpop.f32.mrb[0].mxu0
      %v1902 = vadd.f32 0.0, %v1901
      %v1903 = vpop.f32.mrb[0].mxu0
      %v1904 = vpop.f32.mrb[0].mxu0
      %v1905 = vadd.f32 0.0, %v1904
      %v1906 = vpop.f32.mrb[0].mxu0
      %1907 = vdwg.mxu0
      %v1908 = vadd.f32 %v1548, %v1733
      %v1909 = vadd.f32 %v1549, %v1735
      %v1910 = vadd.f32 %v1550, %v1846
      %v1911 = vadd.f32 %v1551, %v1737
      %v1912 = vadd.f32 %v1552, %v1739
      %v1913 = vadd.f32 %v1553, %v1849
      %v1914 = vadd.f32 %v1554, %v1743
      %v1915 = vadd.f32 %v1555, %v1745
      %v1916 = vadd.f32 %v1556, %v1854
      %v1917 = vadd.f32 %v1557, %v1747
      %v1918 = vadd.f32 %v1558, %v1749
      %v1919 = vadd.f32 %v1559, %v1857
      %v1920 = vadd.f32 %v1560, %v1753
      %v1921 = vadd.f32 %v1561, %v1755
      %v1922 = vadd.f32 %v1562, %v1862
      %v1923 = vadd.f32 %v1563, %v1757
      %v1924 = vadd.f32 %v1564, %v1759
      %v1925 = vadd.f32 %v1565, %v1865
      %v1926 = vadd.f32 %v1566, %v1763
      %v1927 = vadd.f32 %v1567, %v1765
      %v1928 = vadd.f32 %v1568, %v1870
      %v1929 = vadd.f32 %v1569, %v1767
      %v1930 = vadd.f32 %v1570, %v1769
      %v1931 = vadd.f32 %v1571, %v1873
      %v1932 = vadd.f32 %v1572, %v1773
      %v1933 = vadd.f32 %v1573, %v1775
      %v1934 = vadd.f32 %v1574, %v1878
      %v1935 = vadd.f32 %v1575, %v1777
      %v1936 = vadd.f32 %v1576, %v1779
      %v1937 = vadd.f32 %v1577, %v1881
      %v1938 = vadd.f32 %v1578, %v1783
      %v1939 = vadd.f32 %v1579, %v1785
      %v1940 = vadd.f32 %v1580, %v1886
      %v1941 = vadd.f32 %v1581, %v1787
      %v1942 = vadd.f32 %v1582, %v1789
      %v1943 = vadd.f32 %v1583, %v1889
      %v1944 = vadd.f32 %v1584, %v1793
      %v1945 = vadd.f32 %v1585, %v1795
      %v1946 = vadd.f32 %v1586, %v1894
      %v1947 = vadd.f32 %v1587, %v1797
      %v1948 = vadd.f32 %v1588, %v1799
      %v1949 = vadd.f32 %v1589, %v1897
      %v1950 = vadd.f32 %v1590, %v1803
      %v1951 = vadd.f32 %v1591, %v1805
      %v1952 = vadd.f32 %v1592, %v1902
      %v1953 = vadd.f32 %v1593, %v1807
      %v1954 = vadd.f32 %v1594, %v1809
      %v1955 = vadd.f32 %v1595, %v1905
      %s1956 = scalar_lea.vmem %s221, 320
      %v1957 = vld [vmem:[%s1956] sm:$0xf]
      %v1958 = vld [vmem:[%s1956 + $0x4] sm:$0xf]
      %v1959 = vld [vmem:[%s1956 + $0x8] sm:$0xf]
      %v1960 = vld [vmem:[%s1956 + $0xc] sm:$0xf]
      %v1961 = vld [vmem:[%s1956 + $0x10] sm:$0xf]
      %v1962 = vld [vmem:[%s1956 + $0x14] sm:$0xf]
      %v1963 = vld [vmem:[%s1956 + $0x18] sm:$0xf]
      %v1964 = vld [vmem:[%s1956 + $0x1c] sm:$0xf]
      %v1965 = vld [vmem:[%s1956 + $0x20] sm:$0xf]
      %v1966 = vld [vmem:[%s1956 + $0x24] sm:$0xf]
      %v1967 = vld [vmem:[%s1956 + $0x28] sm:$0xf]
      %v1968 = vld [vmem:[%s1956 + $0x2c] sm:$0xf]
      %v1969 = vld [vmem:[%s1956 + $0x30] sm:$0xf]
      %v1970 = vld [vmem:[%s1956 + $0x34] sm:$0xf]
      %v1971 = vld [vmem:[%s1956 + $0x38] sm:$0xf]
      %v1972 = vld [vmem:[%s1956 + $0x3c] sm:$0xf]
      %v1989 = vunpack.c.l.b16 %v1957
      %v1990 = vunpack.c.l.b16 %v1958
      %v1991 = vunpack.c.l.b16 %v1959
      %v1992 = vunpack.c.l.b16 %v1960
      %v1993 = vunpack.c.l.b16 %v1961
      %v1994 = vunpack.c.l.b16 %v1962
      %v1995 = vunpack.c.l.b16 %v1963
      %v1996 = vunpack.c.l.b16 %v1964
      %v1997 = vunpack.c.l.b16 %v1965
      %v1998 = vunpack.c.l.b16 %v1966
      %v1999 = vunpack.c.l.b16 %v1967
      %v2000 = vunpack.c.l.b16 %v1968
      %v2001 = vunpack.c.l.b16 %v1969
      %v2002 = vunpack.c.l.b16 %v1970
      %v2003 = vunpack.c.l.b16 %v1971
      %v2004 = vunpack.c.l.b16 %v1972
      %v2005 = vpack.c.b16 %v1990, %v1989
      %v2006 = vpack.c.b16 %v1992, %v1991
      %v2007 = vpack.c.b16 %v1994, %v1993
      %v2008 = vpack.c.b16 %v1996, %v1995
      %v2009 = vpack.c.b16 %v1998, %v1997
      %v2010 = vpack.c.b16 %v2000, %v1999
      %v2011 = vpack.c.b16 %v2002, %v2001
      %v2012 = vpack.c.b16 %v2004, %v2003
      %2013 = vrot.lane.b32.xlu0 %v324, 108
      %v2014 = vpop.permute.xlu0 %2013
      %2015 = vrot.lane.b32.xlu0 %v325, 108
      %v2016 = vpop.permute.xlu0 %2015
      %2017 = vrot.lane.b32.xlu0 %v326, 108
      %v2018 = vpop.permute.xlu0 %2017
      %2019 = vrot.lane.b32.xlu0 %v327, 108
      %v2020 = vpop.permute.xlu0 %2019
      %vm2021 = vcmask 883712
      %v2022 = vsel %vm2021, %v2014, %v2016
      %v2023 = vsel %vm2021, %v2016, %v2018
      %v2024 = vsel %vm2021, %v2018, %v2020
      %v2026 = vsel %vm340, %v2005, 0
      %v2029 = vsel %vm340, %v2006, 0
      %v2032 = vsel %vm340, %v2007, 0
      %v2035 = vsel %vm340, %v2008, 0
      %v2038 = vsel %vm340, %v2009, 0
      %v2041 = vsel %vm340, %v2010, 0
      %v2044 = vsel %vm340, %v2011, 0
      %v2047 = vsel %vm340, %v2012, 0
      %v2050 = vsel %vm365, %v2022, 0
      %v2053 = vsel %vm365, %v2023, 0
      %v2056 = vsel %vm365, %v2024, 0
      %2058 = vmatprep.subr.bf16.mxu0 %v2053
      %2059 = vmatpush1.bf16.msra.mxu0 %v2050
      %2060 = vmatprep.subr.bf16.mxu0 0
      %2061 = vmatpush1.bf16.msra.mxu0 0
      %2062 = vmatprep.subr.bf16.mxu0 0
      %2063 = vmatpush1.bf16.msra.mxu0 0
      %2064 = vmatprep.subr.bf16.mxu0 0
      %2065 = vmatpush1.bf16.msra.mxu0 0
      %2066 = vmatprep.subr.bf16.mxu0 0
      %2067 = vmatpush1.bf16.msra.mxu0 0
      %2068 = vmatprep.subr.bf16.mxu0 0
      %2069 = vmatpush1.bf16.msra.mxu0 0
      %2070 = vmatprep.subr.bf16.mxu0 0
      %2071 = vmatpush1.bf16.msra.mxu0 0
      %2072 = vmatprep.subr.bf16.mxu0 0
      %2073 = vmatpush1.bf16.msra.mxu0 0
      %2074 = vmatprep.subr.bf16.mxu0 0
      %2075 = vmatpush1.bf16.msra.mxu0 0
      %2076 = vmatprep.subr.bf16.mxu0 0
      %2077 = vmatpush1.bf16.msra.mxu0 0
      %2078 = vmatprep.subr.bf16.mxu0 0
      %2079 = vmatpush1.bf16.msra.mxu0 0
      %2080 = vmatprep.subr.bf16.mxu0 0
      %2081 = vmatpush1.bf16.msra.mxu0 0
      %2082 = vmatprep.subr.bf16.mxu0 0
      %2083 = vmatpush1.bf16.msra.mxu0 0
      %2084 = vmatprep.subr.bf16.mxu0 0
      %2085 = vmatpush1.bf16.msra.mxu0 0
      %2086 = vmatprep.subr.bf16.mxu0 0
      %2087 = vmatpush1.bf16.msra.mxu0 0
      %2088 = vmatprep.subr.bf16.mxu0 0
      %2089 = vmatpush1.bf16.msra.mxu0 0
      %2090 = vmatprep.mubr.bf16.mxu0 0
      %2091 = vmatmul.mubr.bf16.gmra.mrb[0].mxu0 %v2026
      %v2092 = vpop.f32.mrb[0].mxu0
      %v2093 = vadd.f32 0.0, %v2092
      %v2094 = vpop.f32.mrb[0].mxu0
      %v2095 = vadd.f32 0.0, %v2094
      %v2096 = vpop.f32.mrb[0].mxu0
      %v2097 = vadd.f32 0.0, %v2096
      %v2098 = vpop.f32.mrb[0].mxu0
      %v2099 = vadd.f32 0.0, %v2098
      %2100 = vmatprep.mubr.bf16.mxu0 0
      %2101 = vmatmul.mubr.bf16.gmra.mrb[0].mxu0 %v2029
      %v2102 = vpop.f32.mrb[0].mxu0
      %v2103 = vadd.f32 0.0, %v2102
      %v2104 = vpop.f32.mrb[0].mxu0
      %v2105 = vadd.f32 0.0, %v2104
      %v2106 = vpop.f32.mrb[0].mxu0
      %v2107 = vadd.f32 0.0, %v2106
      %v2108 = vpop.f32.mrb[0].mxu0
      %v2109 = vadd.f32 0.0, %v2108
      %2110 = vmatprep.mubr.bf16.mxu0 0
      %2111 = vmatmul.mubr.bf16.gmra.mrb[0].mxu0 %v2032
      %v2112 = vpop.f32.mrb[0].mxu0
      %v2113 = vadd.f32 0.0, %v2112
      %v2114 = vpop.f32.mrb[0].mxu0
      %v2115 = vadd.f32 0.0, %v2114
      %v2116 = vpop.f32.mrb[0].mxu0
      %v2117 = vadd.f32 0.0, %v2116
      %v2118 = vpop.f32.mrb[0].mxu0
      %v2119 = vadd.f32 0.0, %v2118
      %2120 = vmatprep.mubr.bf16.mxu0 0
      %2121 = vmatmul.mubr.bf16.gmra.mrb[0].mxu0 %v2035
      %v2122 = vpop.f32.mrb[0].mxu0
      %v2123 = vadd.f32 0.0, %v2122
      %v2124 = vpop.f32.mrb[0].mxu0
      %v2125 = vadd.f32 0.0, %v2124
      %v2126 = vpop.f32.mrb[0].mxu0
      %v2127 = vadd.f32 0.0, %v2126
      %v2128 = vpop.f32.mrb[0].mxu0
      %v2129 = vadd.f32 0.0, %v2128
      %2130 = vmatprep.mubr.bf16.mxu0 0
      %2131 = vmatmul.mubr.bf16.gmra.mrb[0].mxu0 %v2038
      %v2132 = vpop.f32.mrb[0].mxu0
      %v2133 = vadd.f32 0.0, %v2132
      %v2134 = vpop.f32.mrb[0].mxu0
      %v2135 = vadd.f32 0.0, %v2134
      %v2136 = vpop.f32.mrb[0].mxu0
      %v2137 = vadd.f32 0.0, %v2136
      %v2138 = vpop.f32.mrb[0].mxu0
      %v2139 = vadd.f32 0.0, %v2138
      %2140 = vmatprep.mubr.bf16.mxu0 0
      %2141 = vmatmul.mubr.bf16.gmra.mrb[0].mxu0 %v2041
      %v2142 = vpop.f32.mrb[0].mxu0
      %v2143 = vadd.f32 0.0, %v2142
      %v2144 = vpop.f32.mrb[0].mxu0
      %v2145 = vadd.f32 0.0, %v2144
      %v2146 = vpop.f32.mrb[0].mxu0
      %v2147 = vadd.f32 0.0, %v2146
      %v2148 = vpop.f32.mrb[0].mxu0
      %v2149 = vadd.f32 0.0, %v2148
      %2150 = vmatprep.mubr.bf16.mxu0 0
      %2151 = vmatmul.mubr.bf16.gmra.mrb[0].mxu0 %v2044
      %v2152 = vpop.f32.mrb[0].mxu0
      %v2153 = vadd.f32 0.0, %v2152
      %v2154 = vpop.f32.mrb[0].mxu0
      %v2155 = vadd.f32 0.0, %v2154
      %v2156 = vpop.f32.mrb[0].mxu0
      %v2157 = vadd.f32 0.0, %v2156
      %v2158 = vpop.f32.mrb[0].mxu0
      %v2159 = vadd.f32 0.0, %v2158
      %2160 = vmatprep.mubr.bf16.mxu0 0
      %2161 = vmatmul.mubr.bf16.gmra.mrb[0].mxu0 %v2047
      %v2162 = vpop.f32.mrb[0].mxu0
      %v2163 = vadd.f32 0.0, %v2162
      %v2164 = vpop.f32.mrb[0].mxu0
      %v2165 = vadd.f32 0.0, %v2164
      %v2166 = vpop.f32.mrb[0].mxu0
      %v2167 = vadd.f32 0.0, %v2166
      %v2168 = vpop.f32.mrb[0].mxu0
      %v2169 = vadd.f32 0.0, %v2168
      %2170 = vdwg.mxu0
      %2171 = vmatprep.subr.bf16.mxu0 0
      %2172 = vmatpush1.bf16.msra.mxu0 %v2056
      %2173 = vmatprep.subr.bf16.mxu0 0
      %2174 = vmatpush1.bf16.msra.mxu0 0
      %2175 = vmatprep.subr.bf16.mxu0 0
      %2176 = vmatpush1.bf16.msra.mxu0 0
      %2177 = vmatprep.subr.bf16.mxu0 0
      %2178 = vmatpush1.bf16.msra.mxu0 0
      %2179 = vmatprep.subr.bf16.mxu0 0
      %2180 = vmatpush1.bf16.msra.mxu0 0
      %2181 = vmatprep.subr.bf16.mxu0 0
      %2182 = vmatpush1.bf16.msra.mxu0 0
      %2183 = vmatprep.subr.bf16.mxu0 0
      %2184 = vmatpush1.bf16.msra.mxu0 0
      %2185 = vmatprep.subr.bf16.mxu0 0
      %2186 = vmatpush1.bf16.msra.mxu0 0
      %2187 = vmatprep.subr.bf16.mxu0 0
      %2188 = vmatpush1.bf16.msra.mxu0 0
      %2189 = vmatprep.subr.bf16.mxu0 0
      %2190 = vmatpush1.bf16.msra.mxu0 0
      %2191 = vmatprep.subr.bf16.mxu0 0
      %2192 = vmatpush1.bf16.msra.mxu0 0
      %2193 = vmatprep.subr.bf16.mxu0 0
      %2194 = vmatpush1.bf16.msra.mxu0 0
      %2195 = vmatprep.subr.bf16.mxu0 0
      %2196 = vmatpush1.bf16.msra.mxu0 0
      %2197 = vmatprep.subr.bf16.mxu0 0
      %2198 = vmatpush1.bf16.msra.mxu0 0
      %2199 = vmatprep.subr.bf16.mxu0 0
      %2200 = vmatpush1.bf16.msra.mxu0 0
      %2201 = vmatprep.subr.bf16.mxu0 0
      %2202 = vmatpush1.bf16.msra.mxu0 0
      %2203 = vmatprep.mubr.bf16.mxu0 0
      %2204 = vmatmul.mubr.bf16.gmra.mrb[0].mxu0 %v2026
      %v2205 = vpop.f32.mrb[0].mxu0
      %v2206 = vadd.f32 0.0, %v2205
      %v2207 = vpop.f32.mrb[0].mxu0
      %v2208 = vpop.f32.mrb[0].mxu0
      %v2209 = vadd.f32 0.0, %v2208
      %v2210 = vpop.f32.mrb[0].mxu0
      %2211 = vmatprep.mubr.bf16.mxu0 0
      %2212 = vmatmul.mubr.bf16.gmra.mrb[0].mxu0 %v2029
      %v2213 = vpop.f32.mrb[0].mxu0
      %v2214 = vadd.f32 0.0, %v2213
      %v2215 = vpop.f32.mrb[0].mxu0
      %v2216 = vpop.f32.mrb[0].mxu0
      %v2217 = vadd.f32 0.0, %v2216
      %v2218 = vpop.f32.mrb[0].mxu0
      %2219 = vmatprep.mubr.bf16.mxu0 0
      %2220 = vmatmul.mubr.bf16.gmra.mrb[0].mxu0 %v2032
      %v2221 = vpop.f32.mrb[0].mxu0
      %v2222 = vadd.f32 0.0, %v2221
      %v2223 = vpop.f32.mrb[0].mxu0
      %v2224 = vpop.f32.mrb[0].mxu0
      %v2225 = vadd.f32 0.0, %v2224
      %v2226 = vpop.f32.mrb[0].mxu0
      %2227 = vmatprep.mubr.bf16.mxu0 0
      %2228 = vmatmul.mubr.bf16.gmra.mrb[0].mxu0 %v2035
      %v2229 = vpop.f32.mrb[0].mxu0
      %v2230 = vadd.f32 0.0, %v2229
      %v2231 = vpop.f32.mrb[0].mxu0
      %v2232 = vpop.f32.mrb[0].mxu0
      %v2233 = vadd.f32 0.0, %v2232
      %v2234 = vpop.f32.mrb[0].mxu0
      %2235 = vmatprep.mubr.bf16.mxu0 0
      %2236 = vmatmul.mubr.bf16.gmra.mrb[0].mxu0 %v2038
      %v2237 = vpop.f32.mrb[0].mxu0
      %v2238 = vadd.f32 0.0, %v2237
      %v2239 = vpop.f32.mrb[0].mxu0
      %v2240 = vpop.f32.mrb[0].mxu0
      %v2241 = vadd.f32 0.0, %v2240
      %v2242 = vpop.f32.mrb[0].mxu0
      %2243 = vmatprep.mubr.bf16.mxu0 0
      %2244 = vmatmul.mubr.bf16.gmra.mrb[0].mxu0 %v2041
      %v2245 = vpop.f32.mrb[0].mxu0
      %v2246 = vadd.f32 0.0, %v2245
      %v2247 = vpop.f32.mrb[0].mxu0
      %v2248 = vpop.f32.mrb[0].mxu0
      %v2249 = vadd.f32 0.0, %v2248
      %v2250 = vpop.f32.mrb[0].mxu0
      %2251 = vmatprep.mubr.bf16.mxu0 0
      %2252 = vmatmul.mubr.bf16.gmra.mrb[0].mxu0 %v2044
      %v2253 = vpop.f32.mrb[0].mxu0
      %v2254 = vadd.f32 0.0, %v2253
      %v2255 = vpop.f32.mrb[0].mxu0
      %v2256 = vpop.f32.mrb[0].mxu0
      %v2257 = vadd.f32 0.0, %v2256
      %v2258 = vpop.f32.mrb[0].mxu0
      %2259 = vmatprep.mubr.bf16.mxu0 0
      %2260 = vmatmul.mubr.bf16.gmra.mrb[0].mxu0 %v2047
      %v2261 = vpop.f32.mrb[0].mxu0
      %v2262 = vadd.f32 0.0, %v2261
      %v2263 = vpop.f32.mrb[0].mxu0
      %v2264 = vpop.f32.mrb[0].mxu0
      %v2265 = vadd.f32 0.0, %v2264
      %v2266 = vpop.f32.mrb[0].mxu0
      %2267 = vdwg.mxu0
      %v2268 = vadd.f32 %v1908, %v2093
      %v2269 = vadd.f32 %v1909, %v2095
      %v2270 = vadd.f32 %v1910, %v2206
      %v2271 = vadd.f32 %v1911, %v2097
      %v2272 = vadd.f32 %v1912, %v2099
      %v2273 = vadd.f32 %v1913, %v2209
      %v2274 = vadd.f32 %v1914, %v2103
      %v2275 = vadd.f32 %v1915, %v2105
      %v2276 = vadd.f32 %v1916, %v2214
      %v2277 = vadd.f32 %v1917, %v2107
      %v2278 = vadd.f32 %v1918, %v2109
      %v2279 = vadd.f32 %v1919, %v2217
      %v2280 = vadd.f32 %v1920, %v2113
      %v2281 = vadd.f32 %v1921, %v2115
      %v2282 = vadd.f32 %v1922, %v2222
      %v2283 = vadd.f32 %v1923, %v2117
      %v2284 = vadd.f32 %v1924, %v2119
      %v2285 = vadd.f32 %v1925, %v2225
      %v2286 = vadd.f32 %v1926, %v2123
      %v2287 = vadd.f32 %v1927, %v2125
      %v2288 = vadd.f32 %v1928, %v2230
      %v2289 = vadd.f32 %v1929, %v2127
      %v2290 = vadd.f32 %v1930, %v2129
      %v2291 = vadd.f32 %v1931, %v2233
      %v2292 = vadd.f32 %v1932, %v2133
      %v2293 = vadd.f32 %v1933, %v2135
      %v2294 = vadd.f32 %v1934, %v2238
      %v2295 = vadd.f32 %v1935, %v2137
      %v2296 = vadd.f32 %v1936, %v2139
      %v2297 = vadd.f32 %v1937, %v2241
      %v2298 = vadd.f32 %v1938, %v2143
      %v2299 = vadd.f32 %v1939, %v2145
      %v2300 = vadd.f32 %v1940, %v2246
      %v2301 = vadd.f32 %v1941, %v2147
      %v2302 = vadd.f32 %v1942, %v2149
      %v2303 = vadd.f32 %v1943, %v2249
      %v2304 = vadd.f32 %v1944, %v2153
      %v2305 = vadd.f32 %v1945, %v2155
      %v2306 = vadd.f32 %v1946, %v2254
      %v2307 = vadd.f32 %v1947, %v2157
      %v2308 = vadd.f32 %v1948, %v2159
      %v2309 = vadd.f32 %v1949, %v2257
      %v2310 = vadd.f32 %v1950, %v2163
      %v2311 = vadd.f32 %v1951, %v2165
      %v2312 = vadd.f32 %v1952, %v2262
      %v2313 = vadd.f32 %v1953, %v2167
      %v2314 = vadd.f32 %v1954, %v2169
      %v2315 = vadd.f32 %v1955, %v2265
      %s2316 = scalar_lea.vmem %s221, 384
      %v2317 = vld [vmem:[%s2316] sm:$0xf]
      %v2318 = vld [vmem:[%s2316 + $0x4] sm:$0xf]
      %v2319 = vld [vmem:[%s2316 + $0x8] sm:$0xf]
      %v2320 = vld [vmem:[%s2316 + $0xc] sm:$0xf]
      %v2321 = vld [vmem:[%s2316 + $0x10] sm:$0xf]
      %v2322 = vld [vmem:[%s2316 + $0x14] sm:$0xf]
      %v2323 = vld [vmem:[%s2316 + $0x18] sm:$0xf]
      %v2324 = vld [vmem:[%s2316 + $0x1c] sm:$0xf]
      %v2325 = vld [vmem:[%s2316 + $0x20] sm:$0xf]
      %v2326 = vld [vmem:[%s2316 + $0x24] sm:$0xf]
      %v2327 = vld [vmem:[%s2316 + $0x28] sm:$0xf]
      %v2328 = vld [vmem:[%s2316 + $0x2c] sm:$0xf]
      %v2329 = vld [vmem:[%s2316 + $0x30] sm:$0xf]
      %v2330 = vld [vmem:[%s2316 + $0x34] sm:$0xf]
      %v2331 = vld [vmem:[%s2316 + $0x38] sm:$0xf]
      %v2332 = vld [vmem:[%s2316 + $0x3c] sm:$0xf]
      %v2349 = vunpack.c.l.b16 %v2317
      %v2350 = vunpack.c.l.b16 %v2318
      %v2351 = vunpack.c.l.b16 %v2319
      %v2352 = vunpack.c.l.b16 %v2320
      %v2353 = vunpack.c.l.b16 %v2321
      %v2354 = vunpack.c.l.b16 %v2322
      %v2355 = vunpack.c.l.b16 %v2323
      %v2356 = vunpack.c.l.b16 %v2324
      %v2357 = vunpack.c.l.b16 %v2325
      %v2358 = vunpack.c.l.b16 %v2326
      %v2359 = vunpack.c.l.b16 %v2327
      %v2360 = vunpack.c.l.b16 %v2328
      %v2361 = vunpack.c.l.b16 %v2329
      %v2362 = vunpack.c.l.b16 %v2330
      %v2363 = vunpack.c.l.b16 %v2331
      %v2364 = vunpack.c.l.b16 %v2332
      %v2365 = vpack.c.b16 %v2350, %v2349
      %v2366 = vpack.c.b16 %v2352, %v2351
      %v2367 = vpack.c.b16 %v2354, %v2353
      %v2368 = vpack.c.b16 %v2356, %v2355
      %v2369 = vpack.c.b16 %v2358, %v2357
      %v2370 = vpack.c.b16 %v2360, %v2359
      %v2371 = vpack.c.b16 %v2362, %v2361
      %v2372 = vpack.c.b16 %v2364, %v2363
      %2373 = vrot.lane.b32.xlu0 %v324, 92
      %v2374 = vpop.permute.xlu0 %2373
      %2375 = vrot.lane.b32.xlu0 %v325, 92
      %v2376 = vpop.permute.xlu0 %2375
      %2377 = vrot.lane.b32.xlu0 %v326, 92
      %v2378 = vpop.permute.xlu0 %2377
      %2379 = vrot.lane.b32.xlu0 %v327, 92
      %v2380 = vpop.permute.xlu0 %2379
      %vm2381 = vcmask 752640
      %v2382 = vsel %vm2381, %v2374, %v2376
      %v2383 = vsel %vm2381, %v2376, %v2378
      %v2384 = vsel %vm2381, %v2378, %v2380
      %v2386 = vsel %vm340, %v2365, 0
      %v2389 = vsel %vm340, %v2366, 0
      %v2392 = vsel %vm340, %v2367, 0
      %v2395 = vsel %vm340, %v2368, 0
      %v2398 = vsel %vm340, %v2369, 0
      %v2401 = vsel %vm340, %v2370, 0
      %v2404 = vsel %vm340, %v2371, 0
      %v2407 = vsel %vm340, %v2372, 0
      %v2410 = vsel %vm365, %v2382, 0
      %v2413 = vsel %vm365, %v2383, 0
      %v2416 = vsel %vm365, %v2384, 0
      %2418 = vmatprep.subr.bf16.mxu0 %v2413
      %2419 = vmatpush1.bf16.msra.mxu0 %v2410
      %2420 = vmatprep.subr.bf16.mxu0 0
      %2421 = vmatpush1.bf16.msra.mxu0 0
      %2422 = vmatprep.subr.bf16.mxu0 0
      %2423 = vmatpush1.bf16.msra.mxu0 0
      %2424 = vmatprep.subr.bf16.mxu0 0
      %2425 = vmatpush1.bf16.msra.mxu0 0
      %2426 = vmatprep.subr.bf16.mxu0 0
      %2427 = vmatpush1.bf16.msra.mxu0 0
      %2428 = vmatprep.subr.bf16.mxu0 0
      %2429 = vmatpush1.bf16.msra.mxu0 0
      %2430 = vmatprep.subr.bf16.mxu0 0
      %2431 = vmatpush1.bf16.msra.mxu0 0
      %2432 = vmatprep.subr.bf16.mxu0 0
      %2433 = vmatpush1.bf16.msra.mxu0 0
      %2434 = vmatprep.subr.bf16.mxu0 0
      %2435 = vmatpush1.bf16.msra.mxu0 0
      %2436 = vmatprep.subr.bf16.mxu0 0
      %2437 = vmatpush1.bf16.msra.mxu0 0
      %2438 = vmatprep.subr.bf16.mxu0 0
      %2439 = vmatpush1.bf16.msra.mxu0 0
      %2440 = vmatprep.subr.bf16.mxu0 0
      %2441 = vmatpush1.bf16.msra.mxu0 0
      %2442 = vmatprep.subr.bf16.mxu0 0
      %2443 = vmatpush1.bf16.msra.mxu0 0
      %2444 = vmatprep.subr.bf16.mxu0 0
      %2445 = vmatpush1.bf16.msra.mxu0 0
      %2446 = vmatprep.subr.bf16.mxu0 0
      %2447 = vmatpush1.bf16.msra.mxu0 0
      %2448 = vmatprep.subr.bf16.mxu0 0
      %2449 = vmatpush1.bf16.msra.mxu0 0
      %2450 = vmatprep.mubr.bf16.mxu0 0
      %2451 = vmatmul.mubr.bf16.gmra.mrb[0].mxu0 %v2386
      %v2452 = vpop.f32.mrb[0].mxu0
      %v2453 = vadd.f32 0.0, %v2452
      %v2454 = vpop.f32.mrb[0].mxu0
      %v2455 = vadd.f32 0.0, %v2454
      %v2456 = vpop.f32.mrb[0].mxu0
      %v2457 = vadd.f32 0.0, %v2456
      %v2458 = vpop.f32.mrb[0].mxu0
      %v2459 = vadd.f32 0.0, %v2458
      %2460 = vmatprep.mubr.bf16.mxu0 0
      %2461 = vmatmul.mubr.bf16.gmra.mrb[0].mxu0 %v2389
      %v2462 = vpop.f32.mrb[0].mxu0
      %v2463 = vadd.f32 0.0, %v2462
      %v2464 = vpop.f32.mrb[0].mxu0
      %v2465 = vadd.f32 0.0, %v2464
      %v2466 = vpop.f32.mrb[0].mxu0
      %v2467 = vadd.f32 0.0, %v2466
      %v2468 = vpop.f32.mrb[0].mxu0
      %v2469 = vadd.f32 0.0, %v2468
      %2470 = vmatprep.mubr.bf16.mxu0 0
      %2471 = vmatmul.mubr.bf16.gmra.mrb[0].mxu0 %v2392
      %v2472 = vpop.f32.mrb[0].mxu0
      %v2473 = vadd.f32 0.0, %v2472
      %v2474 = vpop.f32.mrb[0].mxu0
      %v2475 = vadd.f32 0.0, %v2474
      %v2476 = vpop.f32.mrb[0].mxu0
      %v2477 = vadd.f32 0.0, %v2476
      %v2478 = vpop.f32.mrb[0].mxu0
      %v2479 = vadd.f32 0.0, %v2478
      %2480 = vmatprep.mubr.bf16.mxu0 0
      %2481 = vmatmul.mubr.bf16.gmra.mrb[0].mxu0 %v2395
      %v2482 = vpop.f32.mrb[0].mxu0
      %v2483 = vadd.f32 0.0, %v2482
      %v2484 = vpop.f32.mrb[0].mxu0
      %v2485 = vadd.f32 0.0, %v2484
      %v2486 = vpop.f32.mrb[0].mxu0
      %v2487 = vadd.f32 0.0, %v2486
      %v2488 = vpop.f32.mrb[0].mxu0
      %v2489 = vadd.f32 0.0, %v2488
      %2490 = vmatprep.mubr.bf16.mxu0 0
      %2491 = vmatmul.mubr.bf16.gmra.mrb[0].mxu0 %v2398
      %v2492 = vpop.f32.mrb[0].mxu0
      %v2493 = vadd.f32 0.0, %v2492
      %v2494 = vpop.f32.mrb[0].mxu0
      %v2495 = vadd.f32 0.0, %v2494
      %v2496 = vpop.f32.mrb[0].mxu0
      %v2497 = vadd.f32 0.0, %v2496
      %v2498 = vpop.f32.mrb[0].mxu0
      %v2499 = vadd.f32 0.0, %v2498
      %2500 = vmatprep.mubr.bf16.mxu0 0
      %2501 = vmatmul.mubr.bf16.gmra.mrb[0].mxu0 %v2401
      %v2502 = vpop.f32.mrb[0].mxu0
      %v2503 = vadd.f32 0.0, %v2502
      %v2504 = vpop.f32.mrb[0].mxu0
      %v2505 = vadd.f32 0.0, %v2504
      %v2506 = vpop.f32.mrb[0].mxu0
      %v2507 = vadd.f32 0.0, %v2506
      %v2508 = vpop.f32.mrb[0].mxu0
      %v2509 = vadd.f32 0.0, %v2508
      %2510 = vmatprep.mubr.bf16.mxu0 0
      %2511 = vmatmul.mubr.bf16.gmra.mrb[0].mxu0 %v2404
      %v2512 = vpop.f32.mrb[0].mxu0
      %v2513 = vadd.f32 0.0, %v2512
      %v2514 = vpop.f32.mrb[0].mxu0
      %v2515 = vadd.f32 0.0, %v2514
      %v2516 = vpop.f32.mrb[0].mxu0
      %v2517 = vadd.f32 0.0, %v2516
      %v2518 = vpop.f32.mrb[0].mxu0
      %v2519 = vadd.f32 0.0, %v2518
      %2520 = vmatprep.mubr.bf16.mxu0 0
      %2521 = vmatmul.mubr.bf16.gmra.mrb[0].mxu0 %v2407
      %v2522 = vpop.f32.mrb[0].mxu0
      %v2523 = vadd.f32 0.0, %v2522
      %v2524 = vpop.f32.mrb[0].mxu0
      %v2525 = vadd.f32 0.0, %v2524
      %v2526 = vpop.f32.mrb[0].mxu0
      %v2527 = vadd.f32 0.0, %v2526
      %v2528 = vpop.f32.mrb[0].mxu0
      %v2529 = vadd.f32 0.0, %v2528
      %2530 = vdwg.mxu0
      %2531 = vmatprep.subr.bf16.mxu0 0
      %2532 = vmatpush1.bf16.msra.mxu0 %v2416
      %2533 = vmatprep.subr.bf16.mxu0 0
      %2534 = vmatpush1.bf16.msra.mxu0 0
      %2535 = vmatprep.subr.bf16.mxu0 0
      %2536 = vmatpush1.bf16.msra.mxu0 0
      %2537 = vmatprep.subr.bf16.mxu0 0
      %2538 = vmatpush1.bf16.msra.mxu0 0
      %2539 = vmatprep.subr.bf16.mxu0 0
      %2540 = vmatpush1.bf16.msra.mxu0 0
      %2541 = vmatprep.subr.bf16.mxu0 0
      %2542 = vmatpush1.bf16.msra.mxu0 0
      %2543 = vmatprep.subr.bf16.mxu0 0
      %2544 = vmatpush1.bf16.msra.mxu0 0
      %2545 = vmatprep.subr.bf16.mxu0 0
      %2546 = vmatpush1.bf16.msra.mxu0 0
      %2547 = vmatprep.subr.bf16.mxu0 0
      %2548 = vmatpush1.bf16.msra.mxu0 0
      %2549 = vmatprep.subr.bf16.mxu0 0
      %2550 = vmatpush1.bf16.msra.mxu0 0
      %2551 = vmatprep.subr.bf16.mxu0 0
      %2552 = vmatpush1.bf16.msra.mxu0 0
      %2553 = vmatprep.subr.bf16.mxu0 0
      %2554 = vmatpush1.bf16.msra.mxu0 0
      %2555 = vmatprep.subr.bf16.mxu0 0
      %2556 = vmatpush1.bf16.msra.mxu0 0
      %2557 = vmatprep.subr.bf16.mxu0 0
      %2558 = vmatpush1.bf16.msra.mxu0 0
      %2559 = vmatprep.subr.bf16.mxu0 0
      %2560 = vmatpush1.bf16.msra.mxu0 0
      %2561 = vmatprep.subr.bf16.mxu0 0
      %2562 = vmatpush1.bf16.msra.mxu0 0
      %2563 = vmatprep.mubr.bf16.mxu0 0
      %2564 = vmatmul.mubr.bf16.gmra.mrb[0].mxu0 %v2386
      %v2565 = vpop.f32.mrb[0].mxu0
      %v2566 = vadd.f32 0.0, %v2565
      %v2567 = vpop.f32.mrb[0].mxu0
      %v2568 = vpop.f32.mrb[0].mxu0
      %v2569 = vadd.f32 0.0, %v2568
      %v2570 = vpop.f32.mrb[0].mxu0
      %2571 = vmatprep.mubr.bf16.mxu0 0
      %2572 = vmatmul.mubr.bf16.gmra.mrb[0].mxu0 %v2389
      %v2573 = vpop.f32.mrb[0].mxu0
      %v2574 = vadd.f32 0.0, %v2573
      %v2575 = vpop.f32.mrb[0].mxu0
      %v2576 = vpop.f32.mrb[0].mxu0
      %v2577 = vadd.f32 0.0, %v2576
      %v2578 = vpop.f32.mrb[0].mxu0
      %2579 = vmatprep.mubr.bf16.mxu0 0
      %2580 = vmatmul.mubr.bf16.gmra.mrb[0].mxu0 %v2392
      %v2581 = vpop.f32.mrb[0].mxu0
      %v2582 = vadd.f32 0.0, %v2581
      %v2583 = vpop.f32.mrb[0].mxu0
      %v2584 = vpop.f32.mrb[0].mxu0
      %v2585 = vadd.f32 0.0, %v2584
      %v2586 = vpop.f32.mrb[0].mxu0
      %2587 = vmatprep.mubr.bf16.mxu0 0
      %2588 = vmatmul.mubr.bf16.gmra.mrb[0].mxu0 %v2395
      %v2589 = vpop.f32.mrb[0].mxu0
      %v2590 = vadd.f32 0.0, %v2589
      %v2591 = vpop.f32.mrb[0].mxu0
      %v2592 = vpop.f32.mrb[0].mxu0
      %v2593 = vadd.f32 0.0, %v2592
      %v2594 = vpop.f32.mrb[0].mxu0
      %2595 = vmatprep.mubr.bf16.mxu0 0
      %2596 = vmatmul.mubr.bf16.gmra.mrb[0].mxu0 %v2398
      %v2597 = vpop.f32.mrb[0].mxu0
      %v2598 = vadd.f32 0.0, %v2597
      %v2599 = vpop.f32.mrb[0].mxu0
      %v2600 = vpop.f32.mrb[0].mxu0
      %v2601 = vadd.f32 0.0, %v2600
      %v2602 = vpop.f32.mrb[0].mxu0
      %2603 = vmatprep.mubr.bf16.mxu0 0
      %2604 = vmatmul.mubr.bf16.gmra.mrb[0].mxu0 %v2401
      %v2605 = vpop.f32.mrb[0].mxu0
      %v2606 = vadd.f32 0.0, %v2605
      %v2607 = vpop.f32.mrb[0].mxu0
      %v2608 = vpop.f32.mrb[0].mxu0
      %v2609 = vadd.f32 0.0, %v2608
      %v2610 = vpop.f32.mrb[0].mxu0
      %2611 = vmatprep.mubr.bf16.mxu0 0
      %2612 = vmatmul.mubr.bf16.gmra.mrb[0].mxu0 %v2404
      %v2613 = vpop.f32.mrb[0].mxu0
      %v2614 = vadd.f32 0.0, %v2613
      %v2615 = vpop.f32.mrb[0].mxu0
      %v2616 = vpop.f32.mrb[0].mxu0
      %v2617 = vadd.f32 0.0, %v2616
      %v2618 = vpop.f32.mrb[0].mxu0
      %2619 = vmatprep.mubr.bf16.mxu0 0
      %2620 = vmatmul.mubr.bf16.gmra.mrb[0].mxu0 %v2407
      %v2621 = vpop.f32.mrb[0].mxu0
      %v2622 = vadd.f32 0.0, %v2621
      %v2623 = vpop.f32.mrb[0].mxu0
      %v2624 = vpop.f32.mrb[0].mxu0
      %v2625 = vadd.f32 0.0, %v2624
      %v2626 = vpop.f32.mrb[0].mxu0
      %2627 = vdwg.mxu0
      %v2628 = vadd.f32 %v2268, %v2453
      %v2629 = vadd.f32 %v2269, %v2455
      %v2630 = vadd.f32 %v2270, %v2566
      %v2631 = vadd.f32 %v2271, %v2457
      %v2632 = vadd.f32 %v2272, %v2459
      %v2633 = vadd.f32 %v2273, %v2569
      %v2634 = vadd.f32 %v2274, %v2463
      %v2635 = vadd.f32 %v2275, %v2465
      %v2636 = vadd.f32 %v2276, %v2574
      %v2637 = vadd.f32 %v2277, %v2467
      %v2638 = vadd.f32 %v2278, %v2469
      %v2639 = vadd.f32 %v2279, %v2577
      %v2640 = vadd.f32 %v2280, %v2473
      %v2641 = vadd.f32 %v2281, %v2475
      %v2642 = vadd.f32 %v2282, %v2582
      %v2643 = vadd.f32 %v2283, %v2477
      %v2644 = vadd.f32 %v2284, %v2479
      %v2645 = vadd.f32 %v2285, %v2585
      %v2646 = vadd.f32 %v2286, %v2483
      %v2647 = vadd.f32 %v2287, %v2485
      %v2648 = vadd.f32 %v2288, %v2590
      %v2649 = vadd.f32 %v2289, %v2487
      %v2650 = vadd.f32 %v2290, %v2489
      %v2651 = vadd.f32 %v2291, %v2593
      %v2652 = vadd.f32 %v2292, %v2493
      %v2653 = vadd.f32 %v2293, %v2495
      %v2654 = vadd.f32 %v2294, %v2598
      %v2655 = vadd.f32 %v2295, %v2497
      %v2656 = vadd.f32 %v2296, %v2499
      %v2657 = vadd.f32 %v2297, %v2601
      %v2658 = vadd.f32 %v2298, %v2503
      %v2659 = vadd.f32 %v2299, %v2505
      %v2660 = vadd.f32 %v2300, %v2606
      %v2661 = vadd.f32 %v2301, %v2507
      %v2662 = vadd.f32 %v2302, %v2509
      %v2663 = vadd.f32 %v2303, %v2609
      %v2664 = vadd.f32 %v2304, %v2513
      %v2665 = vadd.f32 %v2305, %v2515
      %v2666 = vadd.f32 %v2306, %v2614
      %v2667 = vadd.f32 %v2307, %v2517
      %v2668 = vadd.f32 %v2308, %v2519
      %v2669 = vadd.f32 %v2309, %v2617
      %v2670 = vadd.f32 %v2310, %v2523
      %v2671 = vadd.f32 %v2311, %v2525
      %v2672 = vadd.f32 %v2312, %v2622
      %v2673 = vadd.f32 %v2313, %v2527
      %v2674 = vadd.f32 %v2314, %v2529
      %v2675 = vadd.f32 %v2315, %v2625
      %s2676 = scalar_lea.vmem %s221, 448
      %v2677 = vld [vmem:[%s2676] sm:$0xf]
      %v2678 = vld [vmem:[%s2676 + $0x4] sm:$0xf]
      %v2679 = vld [vmem:[%s2676 + $0x8] sm:$0xf]
      %v2680 = vld [vmem:[%s2676 + $0xc] sm:$0xf]
      %v2681 = vld [vmem:[%s2676 + $0x10] sm:$0xf]
      %v2682 = vld [vmem:[%s2676 + $0x14] sm:$0xf]
      %v2683 = vld [vmem:[%s2676 + $0x18] sm:$0xf]
      %v2684 = vld [vmem:[%s2676 + $0x1c] sm:$0xf]
      %v2685 = vld [vmem:[%s2676 + $0x20] sm:$0xf]
      %v2686 = vld [vmem:[%s2676 + $0x24] sm:$0xf]
      %v2687 = vld [vmem:[%s2676 + $0x28] sm:$0xf]
      %v2688 = vld [vmem:[%s2676 + $0x2c] sm:$0xf]
      %v2689 = vld [vmem:[%s2676 + $0x30] sm:$0xf]
      %v2690 = vld [vmem:[%s2676 + $0x34] sm:$0xf]
      %v2691 = vld [vmem:[%s2676 + $0x38] sm:$0xf]
      %v2692 = vld [vmem:[%s2676 + $0x3c] sm:$0xf]
      %v2709 = vunpack.c.l.b16 %v2677
      %v2710 = vunpack.c.l.b16 %v2678
      %v2711 = vunpack.c.l.b16 %v2679
      %v2712 = vunpack.c.l.b16 %v2680
      %v2713 = vunpack.c.l.b16 %v2681
      %v2714 = vunpack.c.l.b16 %v2682
      %v2715 = vunpack.c.l.b16 %v2683
      %v2716 = vunpack.c.l.b16 %v2684
      %v2717 = vunpack.c.l.b16 %v2685
      %v2718 = vunpack.c.l.b16 %v2686
      %v2719 = vunpack.c.l.b16 %v2687
      %v2720 = vunpack.c.l.b16 %v2688
      %v2721 = vunpack.c.l.b16 %v2689
      %v2722 = vunpack.c.l.b16 %v2690
      %v2723 = vunpack.c.l.b16 %v2691
      %v2724 = vunpack.c.l.b16 %v2692
      %v2725 = vpack.c.b16 %v2710, %v2709
      %v2726 = vpack.c.b16 %v2712, %v2711
      %v2727 = vpack.c.b16 %v2714, %v2713
      %v2728 = vpack.c.b16 %v2716, %v2715
      %v2729 = vpack.c.b16 %v2718, %v2717
      %v2730 = vpack.c.b16 %v2720, %v2719
      %v2731 = vpack.c.b16 %v2722, %v2721
      %v2732 = vpack.c.b16 %v2724, %v2723
      %2733 = vrot.lane.b32.xlu0 %v324, 91
      %v2734 = vpop.permute.xlu0 %2733
      %2735 = vrot.lane.b32.xlu0 %v325, 91
      %v2736 = vpop.permute.xlu0 %2735
      %2737 = vrot.lane.b32.xlu0 %v326, 91
      %v2738 = vpop.permute.xlu0 %2737
      %2739 = vrot.lane.b32.xlu0 %v327, 91
      %v2740 = vpop.permute.xlu0 %2739
      %vm2741 = vcmask 744448
      %v2742 = vsel %vm2741, %v2734, %v2736
      %v2743 = vsel %vm2741, %v2736, %v2738
      %v2744 = vsel %vm2741, %v2738, %v2740
      %v2746 = vsel %vm340, %v2725, 0
      %v2749 = vsel %vm340, %v2726, 0
      %v2752 = vsel %vm340, %v2727, 0
      %v2755 = vsel %vm340, %v2728, 0
      %v2758 = vsel %vm340, %v2729, 0
      %v2761 = vsel %vm340, %v2730, 0
      %v2764 = vsel %vm340, %v2731, 0
      %v2767 = vsel %vm340, %v2732, 0
      %v2770 = vsel %vm365, %v2742, 0
      %v2773 = vsel %vm365, %v2743, 0
      %v2776 = vsel %vm365, %v2744, 0
      %2778 = vmatprep.subr.bf16.mxu0 %v2773
      %2779 = vmatpush1.bf16.msra.mxu0 %v2770
      %2780 = vmatprep.subr.bf16.mxu0 0
      %2781 = vmatpush1.bf16.msra.mxu0 0
      %2782 = vmatprep.subr.bf16.mxu0 0
      %2783 = vmatpush1.bf16.msra.mxu0 0
      %2784 = vmatprep.subr.bf16.mxu0 0
      %2785 = vmatpush1.bf16.msra.mxu0 0
      %2786 = vmatprep.subr.bf16.mxu0 0
      %2787 = vmatpush1.bf16.msra.mxu0 0
      %2788 = vmatprep.subr.bf16.mxu0 0
      %2789 = vmatpush1.bf16.msra.mxu0 0
      %2790 = vmatprep.subr.bf16.mxu0 0
      %2791 = vmatpush1.bf16.msra.mxu0 0
      %2792 = vmatprep.subr.bf16.mxu0 0
      %2793 = vmatpush1.bf16.msra.mxu0 0
      %2794 = vmatprep.subr.bf16.mxu0 0
      %2795 = vmatpush1.bf16.msra.mxu0 0
      %2796 = vmatprep.subr.bf16.mxu0 0
      %2797 = vmatpush1.bf16.msra.mxu0 0
      %2798 = vmatprep.subr.bf16.mxu0 0
      %2799 = vmatpush1.bf16.msra.mxu0 0
      %2800 = vmatprep.subr.bf16.mxu0 0
      %2801 = vmatpush1.bf16.msra.mxu0 0
      %2802 = vmatprep.subr.bf16.mxu0 0
      %2803 = vmatpush1.bf16.msra.mxu0 0
      %2804 = vmatprep.subr.bf16.mxu0 0
      %2805 = vmatpush1.bf16.msra.mxu0 0
      %2806 = vmatprep.subr.bf16.mxu0 0
      %2807 = vmatpush1.bf16.msra.mxu0 0
      %2808 = vmatprep.subr.bf16.mxu0 0
      %2809 = vmatpush1.bf16.msra.mxu0 0
      %2810 = vmatprep.mubr.bf16.mxu0 0
      %2811 = vmatmul.mubr.bf16.gmra.mrb[0].mxu0 %v2746
      %v2812 = vpop.f32.mrb[0].mxu0
      %v2813 = vadd.f32 0.0, %v2812
      %v2814 = vpop.f32.mrb[0].mxu0
      %v2815 = vadd.f32 0.0, %v2814
      %v2816 = vpop.f32.mrb[0].mxu0
      %v2817 = vadd.f32 0.0, %v2816
      %v2818 = vpop.f32.mrb[0].mxu0
      %v2819 = vadd.f32 0.0, %v2818
      %2820 = vmatprep.mubr.bf16.mxu0 0
      %2821 = vmatmul.mubr.bf16.gmra.mrb[0].mxu0 %v2749
      %v2822 = vpop.f32.mrb[0].mxu0
      %v2823 = vadd.f32 0.0, %v2822
      %v2824 = vpop.f32.mrb[0].mxu0
      %v2825 = vadd.f32 0.0, %v2824
      %v2826 = vpop.f32.mrb[0].mxu0
      %v2827 = vadd.f32 0.0, %v2826
      %v2828 = vpop.f32.mrb[0].mxu0
      %v2829 = vadd.f32 0.0, %v2828
      %2830 = vmatprep.mubr.bf16.mxu0 0
      %2831 = vmatmul.mubr.bf16.gmra.mrb[0].mxu0 %v2752
      %v2832 = vpop.f32.mrb[0].mxu0
      %v2833 = vadd.f32 0.0, %v2832
      %v2834 = vpop.f32.mrb[0].mxu0
      %v2835 = vadd.f32 0.0, %v2834
      %v2836 = vpop.f32.mrb[0].mxu0
      %v2837 = vadd.f32 0.0, %v2836
      %v2838 = vpop.f32.mrb[0].mxu0
      %v2839 = vadd.f32 0.0, %v2838
      %2840 = vmatprep.mubr.bf16.mxu0 0
      %2841 = vmatmul.mubr.bf16.gmra.mrb[0].mxu0 %v2755
      %v2842 = vpop.f32.mrb[0].mxu0
      %v2843 = vadd.f32 0.0, %v2842
      %v2844 = vpop.f32.mrb[0].mxu0
      %v2845 = vadd.f32 0.0, %v2844
      %v2846 = vpop.f32.mrb[0].mxu0
      %v2847 = vadd.f32 0.0, %v2846
      %v2848 = vpop.f32.mrb[0].mxu0
      %v2849 = vadd.f32 0.0, %v2848
      %2850 = vmatprep.mubr.bf16.mxu0 0
      %2851 = vmatmul.mubr.bf16.gmra.mrb[0].mxu0 %v2758
      %v2852 = vpop.f32.mrb[0].mxu0
      %v2853 = vadd.f32 0.0, %v2852
      %v2854 = vpop.f32.mrb[0].mxu0
      %v2855 = vadd.f32 0.0, %v2854
      %v2856 = vpop.f32.mrb[0].mxu0
      %v2857 = vadd.f32 0.0, %v2856
      %v2858 = vpop.f32.mrb[0].mxu0
      %v2859 = vadd.f32 0.0, %v2858
      %2860 = vmatprep.mubr.bf16.mxu0 0
      %2861 = vmatmul.mubr.bf16.gmra.mrb[0].mxu0 %v2761
      %v2862 = vpop.f32.mrb[0].mxu0
      %v2863 = vadd.f32 0.0, %v2862
      %v2864 = vpop.f32.mrb[0].mxu0
      %v2865 = vadd.f32 0.0, %v2864
      %v2866 = vpop.f32.mrb[0].mxu0
      %v2867 = vadd.f32 0.0, %v2866
      %v2868 = vpop.f32.mrb[0].mxu0
      %v2869 = vadd.f32 0.0, %v2868
      %2870 = vmatprep.mubr.bf16.mxu0 0
      %2871 = vmatmul.mubr.bf16.gmra.mrb[0].mxu0 %v2764
      %v2872 = vpop.f32.mrb[0].mxu0
      %v2873 = vadd.f32 0.0, %v2872
      %v2874 = vpop.f32.mrb[0].mxu0
      %v2875 = vadd.f32 0.0, %v2874
      %v2876 = vpop.f32.mrb[0].mxu0
      %v2877 = vadd.f32 0.0, %v2876
      %v2878 = vpop.f32.mrb[0].mxu0
      %v2879 = vadd.f32 0.0, %v2878
      %2880 = vmatprep.mubr.bf16.mxu0 0
      %2881 = vmatmul.mubr.bf16.gmra.mrb[0].mxu0 %v2767
      %v2882 = vpop.f32.mrb[0].mxu0
      %v2883 = vadd.f32 0.0, %v2882
      %v2884 = vpop.f32.mrb[0].mxu0
      %v2885 = vadd.f32 0.0, %v2884
      %v2886 = vpop.f32.mrb[0].mxu0
      %v2887 = vadd.f32 0.0, %v2886
      %v2888 = vpop.f32.mrb[0].mxu0
      %v2889 = vadd.f32 0.0, %v2888
      %2890 = vdwg.mxu0
      %2891 = vmatprep.subr.bf16.mxu0 0
      %2892 = vmatpush1.bf16.msra.mxu0 %v2776
      %2893 = vmatprep.subr.bf16.mxu0 0
      %2894 = vmatpush1.bf16.msra.mxu0 0
      %2895 = vmatprep.subr.bf16.mxu0 0
      %2896 = vmatpush1.bf16.msra.mxu0 0
      %2897 = vmatprep.subr.bf16.mxu0 0
      %2898 = vmatpush1.bf16.msra.mxu0 0
      %2899 = vmatprep.subr.bf16.mxu0 0
      %2900 = vmatpush1.bf16.msra.mxu0 0
      %2901 = vmatprep.subr.bf16.mxu0 0
      %2902 = vmatpush1.bf16.msra.mxu0 0
      %2903 = vmatprep.subr.bf16.mxu0 0
      %2904 = vmatpush1.bf16.msra.mxu0 0
      %2905 = vmatprep.subr.bf16.mxu0 0
      %2906 = vmatpush1.bf16.msra.mxu0 0
      %2907 = vmatprep.subr.bf16.mxu0 0
      %2908 = vmatpush1.bf16.msra.mxu0 0
      %2909 = vmatprep.subr.bf16.mxu0 0
      %2910 = vmatpush1.bf16.msra.mxu0 0
      %2911 = vmatprep.subr.bf16.mxu0 0
      %2912 = vmatpush1.bf16.msra.mxu0 0
      %2913 = vmatprep.subr.bf16.mxu0 0
      %2914 = vmatpush1.bf16.msra.mxu0 0
      %2915 = vmatprep.subr.bf16.mxu0 0
      %2916 = vmatpush1.bf16.msra.mxu0 0
      %2917 = vmatprep.subr.bf16.mxu0 0
      %2918 = vmatpush1.bf16.msra.mxu0 0
      %2919 = vmatprep.subr.bf16.mxu0 0
      %2920 = vmatpush1.bf16.msra.mxu0 0
      %2921 = vmatprep.subr.bf16.mxu0 0
      %2922 = vmatpush1.bf16.msra.mxu0 0
      %2923 = vmatprep.mubr.bf16.mxu0 0
      %2924 = vmatmul.mubr.bf16.gmra.mrb[0].mxu0 %v2746
      %v2925 = vpop.f32.mrb[0].mxu0
      %v2926 = vadd.f32 0.0, %v2925
      %v2927 = vpop.f32.mrb[0].mxu0
      %v2928 = vpop.f32.mrb[0].mxu0
      %v2929 = vadd.f32 0.0, %v2928
      %v2930 = vpop.f32.mrb[0].mxu0
      %2931 = vmatprep.mubr.bf16.mxu0 0
      %2932 = vmatmul.mubr.bf16.gmra.mrb[0].mxu0 %v2749
      %v2933 = vpop.f32.mrb[0].mxu0
      %v2934 = vadd.f32 0.0, %v2933
      %v2935 = vpop.f32.mrb[0].mxu0
      %v2936 = vpop.f32.mrb[0].mxu0
      %v2937 = vadd.f32 0.0, %v2936
      %v2938 = vpop.f32.mrb[0].mxu0
      %2939 = vmatprep.mubr.bf16.mxu0 0
      %2940 = vmatmul.mubr.bf16.gmra.mrb[0].mxu0 %v2752
      %v2941 = vpop.f32.mrb[0].mxu0
      %v2942 = vadd.f32 0.0, %v2941
      %v2943 = vpop.f32.mrb[0].mxu0
      %v2944 = vpop.f32.mrb[0].mxu0
      %v2945 = vadd.f32 0.0, %v2944
      %v2946 = vpop.f32.mrb[0].mxu0
      %2947 = vmatprep.mubr.bf16.mxu0 0
      %2948 = vmatmul.mubr.bf16.gmra.mrb[0].mxu0 %v2755
      %v2949 = vpop.f32.mrb[0].mxu0
      %v2950 = vadd.f32 0.0, %v2949
      %v2951 = vpop.f32.mrb[0].mxu0
      %v2952 = vpop.f32.mrb[0].mxu0
      %v2953 = vadd.f32 0.0, %v2952
      %v2954 = vpop.f32.mrb[0].mxu0
      %2955 = vmatprep.mubr.bf16.mxu0 0
      %2956 = vmatmul.mubr.bf16.gmra.mrb[0].mxu0 %v2758
      %v2957 = vpop.f32.mrb[0].mxu0
      %v2958 = vadd.f32 0.0, %v2957
      %v2959 = vpop.f32.mrb[0].mxu0
      %v2960 = vpop.f32.mrb[0].mxu0
      %v2961 = vadd.f32 0.0, %v2960
      %v2962 = vpop.f32.mrb[0].mxu0
      %2963 = vmatprep.mubr.bf16.mxu0 0
      %2964 = vmatmul.mubr.bf16.gmra.mrb[0].mxu0 %v2761
      %v2965 = vpop.f32.mrb[0].mxu0
      %v2966 = vadd.f32 0.0, %v2965
      %v2967 = vpop.f32.mrb[0].mxu0
      %v2968 = vpop.f32.mrb[0].mxu0
      %v2969 = vadd.f32 0.0, %v2968
      %v2970 = vpop.f32.mrb[0].mxu0
      %2971 = vmatprep.mubr.bf16.mxu0 0
      %2972 = vmatmul.mubr.bf16.gmra.mrb[0].mxu0 %v2764
      %v2973 = vpop.f32.mrb[0].mxu0
      %v2974 = vadd.f32 0.0, %v2973
      %v2975 = vpop.f32.mrb[0].mxu0
      %v2976 = vpop.f32.mrb[0].mxu0
      %v2977 = vadd.f32 0.0, %v2976
      %v2978 = vpop.f32.mrb[0].mxu0
      %2979 = vmatprep.mubr.bf16.mxu0 0
      %2980 = vmatmul.mubr.bf16.gmra.mrb[0].mxu0 %v2767
      %v2981 = vpop.f32.mrb[0].mxu0
      %v2982 = vadd.f32 0.0, %v2981
      %v2983 = vpop.f32.mrb[0].mxu0
      %v2984 = vpop.f32.mrb[0].mxu0
      %v2985 = vadd.f32 0.0, %v2984
      %v2986 = vpop.f32.mrb[0].mxu0
      %2987 = vdwg.mxu0
      %v2988 = vadd.f32 %v2628, %v2813
      %v2989 = vadd.f32 %v2629, %v2815
      %v2990 = vadd.f32 %v2630, %v2926
      %v2991 = vadd.f32 %v2631, %v2817
      %v2992 = vadd.f32 %v2632, %v2819
      %v2993 = vadd.f32 %v2633, %v2929
      %v2994 = vadd.f32 %v2634, %v2823
      %v2995 = vadd.f32 %v2635, %v2825
      %v2996 = vadd.f32 %v2636, %v2934
      %v2997 = vadd.f32 %v2637, %v2827
      %v2998 = vadd.f32 %v2638, %v2829
      %v2999 = vadd.f32 %v2639, %v2937
      %v3000 = vadd.f32 %v2640, %v2833
      %v3001 = vadd.f32 %v2641, %v2835
      %v3002 = vadd.f32 %v2642, %v2942
      %v3003 = vadd.f32 %v2643, %v2837
      %v3004 = vadd.f32 %v2644, %v2839
      %v3005 = vadd.f32 %v2645, %v2945
      %v3006 = vadd.f32 %v2646, %v2843
      %v3007 = vadd.f32 %v2647, %v2845
      %v3008 = vadd.f32 %v2648, %v2950
      %v3009 = vadd.f32 %v2649, %v2847
      %v3010 = vadd.f32 %v2650, %v2849
      %v3011 = vadd.f32 %v2651, %v2953
      %v3012 = vadd.f32 %v2652, %v2853
      %v3013 = vadd.f32 %v2653, %v2855
      %v3014 = vadd.f32 %v2654, %v2958
      %v3015 = vadd.f32 %v2655, %v2857
      %v3016 = vadd.f32 %v2656, %v2859
      %v3017 = vadd.f32 %v2657, %v2961
      %v3018 = vadd.f32 %v2658, %v2863
      %v3019 = vadd.f32 %v2659, %v2865
      %v3020 = vadd.f32 %v2660, %v2966
      %v3021 = vadd.f32 %v2661, %v2867
      %v3022 = vadd.f32 %v2662, %v2869
      %v3023 = vadd.f32 %v2663, %v2969
      %v3024 = vadd.f32 %v2664, %v2873
      %v3025 = vadd.f32 %v2665, %v2875
      %v3026 = vadd.f32 %v2666, %v2974
      %v3027 = vadd.f32 %v2667, %v2877
      %v3028 = vadd.f32 %v2668, %v2879
      %v3029 = vadd.f32 %v2669, %v2977
      %v3030 = vadd.f32 %v2670, %v2883
      %v3031 = vadd.f32 %v2671, %v2885
      %v3032 = vadd.f32 %v2672, %v2982
      %v3033 = vadd.f32 %v2673, %v2887
      %v3034 = vadd.f32 %v2674, %v2889
      %v3035 = vadd.f32 %v2675, %v2985
      %s3036 = scalar_lea.vmem %s221, 512
      %v3037 = vld [vmem:[%s3036] sm:$0xf]
      %v3038 = vld [vmem:[%s3036 + $0x4] sm:$0xf]
      %v3039 = vld [vmem:[%s3036 + $0x8] sm:$0xf]
      %v3040 = vld [vmem:[%s3036 + $0xc] sm:$0xf]
      %v3041 = vld [vmem:[%s3036 + $0x10] sm:$0xf]
      %v3042 = vld [vmem:[%s3036 + $0x14] sm:$0xf]
      %v3043 = vld [vmem:[%s3036 + $0x18] sm:$0xf]
      %v3044 = vld [vmem:[%s3036 + $0x1c] sm:$0xf]
      %v3045 = vld [vmem:[%s3036 + $0x20] sm:$0xf]
      %v3046 = vld [vmem:[%s3036 + $0x24] sm:$0xf]
      %v3047 = vld [vmem:[%s3036 + $0x28] sm:$0xf]
      %v3048 = vld [vmem:[%s3036 + $0x2c] sm:$0xf]
      %v3049 = vld [vmem:[%s3036 + $0x30] sm:$0xf]
      %v3050 = vld [vmem:[%s3036 + $0x34] sm:$0xf]
      %v3051 = vld [vmem:[%s3036 + $0x38] sm:$0xf]
      %v3052 = vld [vmem:[%s3036 + $0x3c] sm:$0xf]
      %v3069 = vunpack.c.l.b16 %v3037
      %v3070 = vunpack.c.l.b16 %v3038
      %v3071 = vunpack.c.l.b16 %v3039
      %v3072 = vunpack.c.l.b16 %v3040
      %v3073 = vunpack.c.l.b16 %v3041
      %v3074 = vunpack.c.l.b16 %v3042
      %v3075 = vunpack.c.l.b16 %v3043
      %v3076 = vunpack.c.l.b16 %v3044
      %v3077 = vunpack.c.l.b16 %v3045
      %v3078 = vunpack.c.l.b16 %v3046
      %v3079 = vunpack.c.l.b16 %v3047
      %v3080 = vunpack.c.l.b16 %v3048
      %v3081 = vunpack.c.l.b16 %v3049
      %v3082 = vunpack.c.l.b16 %v3050
      %v3083 = vunpack.c.l.b16 %v3051
      %v3084 = vunpack.c.l.b16 %v3052
      %v3085 = vpack.c.b16 %v3070, %v3069
      %v3086 = vpack.c.b16 %v3072, %v3071
      %v3087 = vpack.c.b16 %v3074, %v3073
      %v3088 = vpack.c.b16 %v3076, %v3075
      %v3089 = vpack.c.b16 %v3078, %v3077
      %v3090 = vpack.c.b16 %v3080, %v3079
      %v3091 = vpack.c.b16 %v3082, %v3081
      %v3092 = vpack.c.b16 %v3084, %v3083
      %3093 = vrot.lane.b32.xlu0 %v324, 90
      %v3094 = vpop.permute.xlu0 %3093
      %3095 = vrot.lane.b32.xlu0 %v325, 90
      %v3096 = vpop.permute.xlu0 %3095
      %3097 = vrot.lane.b32.xlu0 %v326, 90
      %v3098 = vpop.permute.xlu0 %3097
      %3099 = vrot.lane.b32.xlu0 %v327, 90
      %v3100 = vpop.permute.xlu0 %3099
      %vm3101 = vcmask 736256
      %v3102 = vsel %vm3101, %v3094, %v3096
      %v3103 = vsel %vm3101, %v3096, %v3098
      %v3104 = vsel %vm3101, %v3098, %v3100
      %v3106 = vsel %vm340, %v3085, 0
      %v3109 = vsel %vm340, %v3086, 0
      %v3112 = vsel %vm340, %v3087, 0
      %v3115 = vsel %vm340, %v3088, 0
      %v3118 = vsel %vm340, %v3089, 0
      %v3121 = vsel %vm340, %v3090, 0
      %v3124 = vsel %vm340, %v3091, 0
      %v3127 = vsel %vm340, %v3092, 0
      %v3130 = vsel %vm365, %v3102, 0
      %v3133 = vsel %vm365, %v3103, 0
      %v3136 = vsel %vm365, %v3104, 0
      %3138 = vmatprep.subr.bf16.mxu0 %v3133
      %3139 = vmatpush1.bf16.msra.mxu0 %v3130
      %3140 = vmatprep.subr.bf16.mxu0 0
      %3141 = vmatpush1.bf16.msra.mxu0 0
      %3142 = vmatprep.subr.bf16.mxu0 0
      %3143 = vmatpush1.bf16.msra.mxu0 0
      %3144 = vmatprep.subr.bf16.mxu0 0
      %3145 = vmatpush1.bf16.msra.mxu0 0
      %3146 = vmatprep.subr.bf16.mxu0 0
      %3147 = vmatpush1.bf16.msra.mxu0 0
      %3148 = vmatprep.subr.bf16.mxu0 0
      %3149 = vmatpush1.bf16.msra.mxu0 0
      %3150 = vmatprep.subr.bf16.mxu0 0
      %3151 = vmatpush1.bf16.msra.mxu0 0
      %3152 = vmatprep.subr.bf16.mxu0 0
      %3153 = vmatpush1.bf16.msra.mxu0 0
      %3154 = vmatprep.subr.bf16.mxu0 0
      %3155 = vmatpush1.bf16.msra.mxu0 0
      %3156 = vmatprep.subr.bf16.mxu0 0
      %3157 = vmatpush1.bf16.msra.mxu0 0
      %3158 = vmatprep.subr.bf16.mxu0 0
      %3159 = vmatpush1.bf16.msra.mxu0 0
      %3160 = vmatprep.subr.bf16.mxu0 0
      %3161 = vmatpush1.bf16.msra.mxu0 0
      %3162 = vmatprep.subr.bf16.mxu0 0
      %3163 = vmatpush1.bf16.msra.mxu0 0
      %3164 = vmatprep.subr.bf16.mxu0 0
      %3165 = vmatpush1.bf16.msra.mxu0 0
      %3166 = vmatprep.subr.bf16.mxu0 0
      %3167 = vmatpush1.bf16.msra.mxu0 0
      %3168 = vmatprep.subr.bf16.mxu0 0
      %3169 = vmatpush1.bf16.msra.mxu0 0
      %3170 = vmatprep.mubr.bf16.mxu0 0
      %3171 = vmatmul.mubr.bf16.gmra.mrb[0].mxu0 %v3106
      %v3172 = vpop.f32.mrb[0].mxu0
      %v3173 = vadd.f32 0.0, %v3172
      %v3174 = vpop.f32.mrb[0].mxu0
      %v3175 = vadd.f32 0.0, %v3174
      %v3176 = vpop.f32.mrb[0].mxu0
      %v3177 = vadd.f32 0.0, %v3176
      %v3178 = vpop.f32.mrb[0].mxu0
      %v3179 = vadd.f32 0.0, %v3178
      %3180 = vmatprep.mubr.bf16.mxu0 0
      %3181 = vmatmul.mubr.bf16.gmra.mrb[0].mxu0 %v3109
      %v3182 = vpop.f32.mrb[0].mxu0
      %v3183 = vadd.f32 0.0, %v3182
      %v3184 = vpop.f32.mrb[0].mxu0
      %v3185 = vadd.f32 0.0, %v3184
      %v3186 = vpop.f32.mrb[0].mxu0
      %v3187 = vadd.f32 0.0, %v3186
      %v3188 = vpop.f32.mrb[0].mxu0
      %v3189 = vadd.f32 0.0, %v3188
      %3190 = vmatprep.mubr.bf16.mxu0 0
      %3191 = vmatmul.mubr.bf16.gmra.mrb[0].mxu0 %v3112
      %v3192 = vpop.f32.mrb[0].mxu0
      %v3193 = vadd.f32 0.0, %v3192
      %v3194 = vpop.f32.mrb[0].mxu0
      %v3195 = vadd.f32 0.0, %v3194
      %v3196 = vpop.f32.mrb[0].mxu0
      %v3197 = vadd.f32 0.0, %v3196
      %v3198 = vpop.f32.mrb[0].mxu0
      %v3199 = vadd.f32 0.0, %v3198
      %3200 = vmatprep.mubr.bf16.mxu0 0
      %3201 = vmatmul.mubr.bf16.gmra.mrb[0].mxu0 %v3115
      %v3202 = vpop.f32.mrb[0].mxu0
      %v3203 = vadd.f32 0.0, %v3202
      %v3204 = vpop.f32.mrb[0].mxu0
      %v3205 = vadd.f32 0.0, %v3204
      %v3206 = vpop.f32.mrb[0].mxu0
      %v3207 = vadd.f32 0.0, %v3206
      %v3208 = vpop.f32.mrb[0].mxu0
      %v3209 = vadd.f32 0.0, %v3208
      %3210 = vmatprep.mubr.bf16.mxu0 0
      %3211 = vmatmul.mubr.bf16.gmra.mrb[0].mxu0 %v3118
      %v3212 = vpop.f32.mrb[0].mxu0
      %v3213 = vadd.f32 0.0, %v3212
      %v3214 = vpop.f32.mrb[0].mxu0
      %v3215 = vadd.f32 0.0, %v3214
      %v3216 = vpop.f32.mrb[0].mxu0
      %v3217 = vadd.f32 0.0, %v3216
      %v3218 = vpop.f32.mrb[0].mxu0
      %v3219 = vadd.f32 0.0, %v3218
      %3220 = vmatprep.mubr.bf16.mxu0 0
      %3221 = vmatmul.mubr.bf16.gmra.mrb[0].mxu0 %v3121
      %v3222 = vpop.f32.mrb[0].mxu0
      %v3223 = vadd.f32 0.0, %v3222
      %v3224 = vpop.f32.mrb[0].mxu0
      %v3225 = vadd.f32 0.0, %v3224
      %v3226 = vpop.f32.mrb[0].mxu0
      %v3227 = vadd.f32 0.0, %v3226
      %v3228 = vpop.f32.mrb[0].mxu0
      %v3229 = vadd.f32 0.0, %v3228
      %3230 = vmatprep.mubr.bf16.mxu0 0
      %3231 = vmatmul.mubr.bf16.gmra.mrb[0].mxu0 %v3124
      %v3232 = vpop.f32.mrb[0].mxu0
      %v3233 = vadd.f32 0.0, %v3232
      %v3234 = vpop.f32.mrb[0].mxu0
      %v3235 = vadd.f32 0.0, %v3234
      %v3236 = vpop.f32.mrb[0].mxu0
      %v3237 = vadd.f32 0.0, %v3236
      %v3238 = vpop.f32.mrb[0].mxu0
      %v3239 = vadd.f32 0.0, %v3238
      %3240 = vmatprep.mubr.bf16.mxu0 0
      %3241 = vmatmul.mubr.bf16.gmra.mrb[0].mxu0 %v3127
      %v3242 = vpop.f32.mrb[0].mxu0
      %v3243 = vadd.f32 0.0, %v3242
      %v3244 = vpop.f32.mrb[0].mxu0
      %v3245 = vadd.f32 0.0, %v3244
      %v3246 = vpop.f32.mrb[0].mxu0
      %v3247 = vadd.f32 0.0, %v3246
      %v3248 = vpop.f32.mrb[0].mxu0
      %v3249 = vadd.f32 0.0, %v3248
      %3250 = vdwg.mxu0
      %3251 = vmatprep.subr.bf16.mxu0 0
      %3252 = vmatpush1.bf16.msra.mxu0 %v3136
      %3253 = vmatprep.subr.bf16.mxu0 0
      %3254 = vmatpush1.bf16.msra.mxu0 0
      %3255 = vmatprep.subr.bf16.mxu0 0
      %3256 = vmatpush1.bf16.msra.mxu0 0
      %3257 = vmatprep.subr.bf16.mxu0 0
      %3258 = vmatpush1.bf16.msra.mxu0 0
      %3259 = vmatprep.subr.bf16.mxu0 0
      %3260 = vmatpush1.bf16.msra.mxu0 0
      %3261 = vmatprep.subr.bf16.mxu0 0
      %3262 = vmatpush1.bf16.msra.mxu0 0
      %3263 = vmatprep.subr.bf16.mxu0 0
      %3264 = vmatpush1.bf16.msra.mxu0 0
      %3265 = vmatprep.subr.bf16.mxu0 0
      %3266 = vmatpush1.bf16.msra.mxu0 0
      %3267 = vmatprep.subr.bf16.mxu0 0
      %3268 = vmatpush1.bf16.msra.mxu0 0
      %3269 = vmatprep.subr.bf16.mxu0 0
      %3270 = vmatpush1.bf16.msra.mxu0 0
      %3271 = vmatprep.subr.bf16.mxu0 0
      %3272 = vmatpush1.bf16.msra.mxu0 0
      %3273 = vmatprep.subr.bf16.mxu0 0
      %3274 = vmatpush1.bf16.msra.mxu0 0
      %3275 = vmatprep.subr.bf16.mxu0 0
      %3276 = vmatpush1.bf16.msra.mxu0 0
      %3277 = vmatprep.subr.bf16.mxu0 0
      %3278 = vmatpush1.bf16.msra.mxu0 0
      %3279 = vmatprep.subr.bf16.mxu0 0
      %3280 = vmatpush1.bf16.msra.mxu0 0
      %3281 = vmatprep.subr.bf16.mxu0 0
      %3282 = vmatpush1.bf16.msra.mxu0 0
      %3283 = vmatprep.mubr.bf16.mxu0 0
      %3284 = vmatmul.mubr.bf16.gmra.mrb[0].mxu0 %v3106
      %v3285 = vpop.f32.mrb[0].mxu0
      %v3286 = vadd.f32 0.0, %v3285
      %v3287 = vpop.f32.mrb[0].mxu0
      %v3288 = vpop.f32.mrb[0].mxu0
      %v3289 = vadd.f32 0.0, %v3288
      %v3290 = vpop.f32.mrb[0].mxu0
      %3291 = vmatprep.mubr.bf16.mxu0 0
      %3292 = vmatmul.mubr.bf16.gmra.mrb[0].mxu0 %v3109
      %v3293 = vpop.f32.mrb[0].mxu0
      %v3294 = vadd.f32 0.0, %v3293
      %v3295 = vpop.f32.mrb[0].mxu0
      %v3296 = vpop.f32.mrb[0].mxu0
      %v3297 = vadd.f32 0.0, %v3296
      %v3298 = vpop.f32.mrb[0].mxu0
      %3299 = vmatprep.mubr.bf16.mxu0 0
      %3300 = vmatmul.mubr.bf16.gmra.mrb[0].mxu0 %v3112
      %v3301 = vpop.f32.mrb[0].mxu0
      %v3302 = vadd.f32 0.0, %v3301
      %v3303 = vpop.f32.mrb[0].mxu0
      %v3304 = vpop.f32.mrb[0].mxu0
      %v3305 = vadd.f32 0.0, %v3304
      %v3306 = vpop.f32.mrb[0].mxu0
      %3307 = vmatprep.mubr.bf16.mxu0 0
      %3308 = vmatmul.mubr.bf16.gmra.mrb[0].mxu0 %v3115
      %v3309 = vpop.f32.mrb[0].mxu0
      %v3310 = vadd.f32 0.0, %v3309
      %v3311 = vpop.f32.mrb[0].mxu0
      %v3312 = vpop.f32.mrb[0].mxu0
      %v3313 = vadd.f32 0.0, %v3312
      %v3314 = vpop.f32.mrb[0].mxu0
      %3315 = vmatprep.mubr.bf16.mxu0 0
      %3316 = vmatmul.mubr.bf16.gmra.mrb[0].mxu0 %v3118
      %v3317 = vpop.f32.mrb[0].mxu0
      %v3318 = vadd.f32 0.0, %v3317
      %v3319 = vpop.f32.mrb[0].mxu0
      %v3320 = vpop.f32.mrb[0].mxu0
      %v3321 = vadd.f32 0.0, %v3320
      %v3322 = vpop.f32.mrb[0].mxu0
      %3323 = vmatprep.mubr.bf16.mxu0 0
      %3324 = vmatmul.mubr.bf16.gmra.mrb[0].mxu0 %v3121
      %v3325 = vpop.f32.mrb[0].mxu0
      %v3326 = vadd.f32 0.0, %v3325
      %v3327 = vpop.f32.mrb[0].mxu0
      %v3328 = vpop.f32.mrb[0].mxu0
      %v3329 = vadd.f32 0.0, %v3328
      %v3330 = vpop.f32.mrb[0].mxu0
      %3331 = vmatprep.mubr.bf16.mxu0 0
      %3332 = vmatmul.mubr.bf16.gmra.mrb[0].mxu0 %v3124
      %v3333 = vpop.f32.mrb[0].mxu0
      %v3334 = vadd.f32 0.0, %v3333
      %v3335 = vpop.f32.mrb[0].mxu0
      %v3336 = vpop.f32.mrb[0].mxu0
      %v3337 = vadd.f32 0.0, %v3336
      %v3338 = vpop.f32.mrb[0].mxu0
      %3339 = vmatprep.mubr.bf16.mxu0 0
      %3340 = vmatmul.mubr.bf16.gmra.mrb[0].mxu0 %v3127
      %v3341 = vpop.f32.mrb[0].mxu0
      %v3342 = vadd.f32 0.0, %v3341
      %v3343 = vpop.f32.mrb[0].mxu0
      %v3344 = vpop.f32.mrb[0].mxu0
      %v3345 = vadd.f32 0.0, %v3344
      %v3346 = vpop.f32.mrb[0].mxu0
      %3347 = vdwg.mxu0
      %v3348 = vadd.f32 %v2988, %v3173
      %v3349 = vadd.f32 %v2989, %v3175
      %v3350 = vadd.f32 %v2990, %v3286
      %v3351 = vadd.f32 %v2991, %v3177
      %v3352 = vadd.f32 %v2992, %v3179
      %v3353 = vadd.f32 %v2993, %v3289
      %v3354 = vadd.f32 %v2994, %v3183
      %v3355 = vadd.f32 %v2995, %v3185
      %v3356 = vadd.f32 %v2996, %v3294
      %v3357 = vadd.f32 %v2997, %v3187
      %v3358 = vadd.f32 %v2998, %v3189
      %v3359 = vadd.f32 %v2999, %v3297
      %v3360 = vadd.f32 %v3000, %v3193
      %v3361 = vadd.f32 %v3001, %v3195
      %v3362 = vadd.f32 %v3002, %v3302
      %v3363 = vadd.f32 %v3003, %v3197
      %v3364 = vadd.f32 %v3004, %v3199
      %v3365 = vadd.f32 %v3005, %v3305
      %v3366 = vadd.f32 %v3006, %v3203
      %v3367 = vadd.f32 %v3007, %v3205
      %v3368 = vadd.f32 %v3008, %v3310
      %v3369 = vadd.f32 %v3009, %v3207
      %v3370 = vadd.f32 %v3010, %v3209
      %v3371 = vadd.f32 %v3011, %v3313
      %v3372 = vadd.f32 %v3012, %v3213
      %v3373 = vadd.f32 %v3013, %v3215
      %v3374 = vadd.f32 %v3014, %v3318
      %v3375 = vadd.f32 %v3015, %v3217
      %v3376 = vadd.f32 %v3016, %v3219
      %v3377 = vadd.f32 %v3017, %v3321
      %v3378 = vadd.f32 %v3018, %v3223
      %v3379 = vadd.f32 %v3019, %v3225
      %v3380 = vadd.f32 %v3020, %v3326
      %v3381 = vadd.f32 %v3021, %v3227
      %v3382 = vadd.f32 %v3022, %v3229
      %v3383 = vadd.f32 %v3023, %v3329
      %v3384 = vadd.f32 %v3024, %v3233
      %v3385 = vadd.f32 %v3025, %v3235
      %v3386 = vadd.f32 %v3026, %v3334
      %v3387 = vadd.f32 %v3027, %v3237
      %v3388 = vadd.f32 %v3028, %v3239
      %v3389 = vadd.f32 %v3029, %v3337
      %v3390 = vadd.f32 %v3030, %v3243
      %v3391 = vadd.f32 %v3031, %v3245
      %v3392 = vadd.f32 %v3032, %v3342
      %v3393 = vadd.f32 %v3033, %v3247
      %v3394 = vadd.f32 %v3034, %v3249
      %v3395 = vadd.f32 %v3035, %v3345
      %v3396 = vld [vmem:[%s227] sm:$0xff]
      %v3397 = vld [vmem:[%s227 + $0x8] sm:$0xff]
      %v3398 = vld [vmem:[%s227 + $0x10] sm:$0xff]
      %v3399 = vld [vmem:[%s227 + $0x18] sm:$0xff]
      %v3400 = vld [vmem:[%s227 + $0x20] sm:$0xff]
      %v3401 = vld [vmem:[%s227 + $0x28] sm:$0xff]
      %v3402 = vld [vmem:[%s227 + $0x30] sm:$0xff]
      %v3403 = vld [vmem:[%s227 + $0x38] sm:$0xff]
      %v3404 = vld [vmem:[%s227 + $0x40] sm:$0xff]
      %v3405 = vld [vmem:[%s227 + $0x48] sm:$0xff]
      %v3406 = vld [vmem:[%s227 + $0x50] sm:$0xff]
      %v3407 = vld [vmem:[%s227 + $0x58] sm:$0xff]
      %v3408 = vld [vmem:[%s227 + $0x60] sm:$0xff]
      %v3409 = vld [vmem:[%s227 + $0x68] sm:$0xff]
      %v3410 = vld [vmem:[%s227 + $0x70] sm:$0xff]
      %v3411 = vld [vmem:[%s227 + $0x78] sm:$0xff]
      %3413 = vset.pattern.permute.xlu0 0
      %3414 = vperm.xlu0 %3413, %v3396
      %v3415 = vpop.permute.xlu0 %3414
      %3418 = vset.pattern.permute.xlu0 0
      %3419 = vperm.xlu0 %3418, %v3397
      %v3420 = vpop.permute.xlu0 %3419
      %3423 = vset.pattern.permute.xlu0 0
      %3424 = vperm.xlu0 %3423, %v3398
      %v3425 = vpop.permute.xlu0 %3424
      %3428 = vset.pattern.permute.xlu0 0
      %3429 = vperm.xlu0 %3428, %v3399
      %v3430 = vpop.permute.xlu0 %3429
      %3433 = vset.pattern.permute.xlu0 0
      %3434 = vperm.xlu0 %3433, %v3400
      %v3435 = vpop.permute.xlu0 %3434
      %3438 = vset.pattern.permute.xlu0 0
      %3439 = vperm.xlu0 %3438, %v3401
      %v3440 = vpop.permute.xlu0 %3439
      %3443 = vset.pattern.permute.xlu0 0
      %3444 = vperm.xlu0 %3443, %v3402
      %v3445 = vpop.permute.xlu0 %3444
      %3448 = vset.pattern.permute.xlu0 0
      %3449 = vperm.xlu0 %3448, %v3403
      %v3450 = vpop.permute.xlu0 %3449
      %3453 = vset.pattern.permute.xlu0 0
      %3454 = vperm.xlu0 %3453, %v3404
      %v3455 = vpop.permute.xlu0 %3454
      %3458 = vset.pattern.permute.xlu0 0
      %3459 = vperm.xlu0 %3458, %v3405
      %v3460 = vpop.permute.xlu0 %3459
      %3463 = vset.pattern.permute.xlu0 0
      %3464 = vperm.xlu0 %3463, %v3406
      %v3465 = vpop.permute.xlu0 %3464
      %3468 = vset.pattern.permute.xlu0 0
      %3469 = vperm.xlu0 %3468, %v3407
      %v3470 = vpop.permute.xlu0 %3469
      %3473 = vset.pattern.permute.xlu0 0
      %3474 = vperm.xlu0 %3473, %v3408
      %v3475 = vpop.permute.xlu0 %3474
      %3478 = vset.pattern.permute.xlu0 0
      %3479 = vperm.xlu0 %3478, %v3409
      %v3480 = vpop.permute.xlu0 %3479
      %3483 = vset.pattern.permute.xlu0 0
      %3484 = vperm.xlu0 %3483, %v3410
      %v3485 = vpop.permute.xlu0 %3484
      %3488 = vset.pattern.permute.xlu0 0
      %3489 = vperm.xlu0 %3488, %v3411
      %v3490 = vpop.permute.xlu0 %3489
      %v3492 = vadd.f32 %v3348, %v3415
      %v3493 = vadd.f32 %v3349, %v3415
      %v3494 = vadd.f32 %v3350, %v3415
      %v3495 = vadd.f32 %v3351, %v3420
      %v3496 = vadd.f32 %v3352, %v3420
      %v3497 = vadd.f32 %v3353, %v3420
      %v3498 = vadd.f32 %v3354, %v3425
      %v3499 = vadd.f32 %v3355, %v3425
      %v3500 = vadd.f32 %v3356, %v3425
      %v3501 = vadd.f32 %v3357, %v3430
      %v3502 = vadd.f32 %v3358, %v3430
      %v3503 = vadd.f32 %v3359, %v3430
      %v3504 = vadd.f32 %v3360, %v3435
      %v3505 = vadd.f32 %v3361, %v3435
      %v3506 = vadd.f32 %v3362, %v3435
      %v3507 = vadd.f32 %v3363, %v3440
      %v3508 = vadd.f32 %v3364, %v3440
      %v3509 = vadd.f32 %v3365, %v3440
      %v3510 = vadd.f32 %v3366, %v3445
      %v3511 = vadd.f32 %v3367, %v3445
      %v3512 = vadd.f32 %v3368, %v3445
      %v3513 = vadd.f32 %v3369, %v3450
      %v3514 = vadd.f32 %v3370, %v3450
      %v3515 = vadd.f32 %v3371, %v3450
      %v3516 = vadd.f32 %v3372, %v3455
      %v3517 = vadd.f32 %v3373, %v3455
      %v3518 = vadd.f32 %v3374, %v3455
      %v3519 = vadd.f32 %v3375, %v3460
      %v3520 = vadd.f32 %v3376, %v3460
      %v3521 = vadd.f32 %v3377, %v3460
      %v3522 = vadd.f32 %v3378, %v3465
      %v3523 = vadd.f32 %v3379, %v3465
      %v3524 = vadd.f32 %v3380, %v3465
      %v3525 = vadd.f32 %v3381, %v3470
      %v3526 = vadd.f32 %v3382, %v3470
      %v3527 = vadd.f32 %v3383, %v3470
      %v3528 = vadd.f32 %v3384, %v3475
      %v3529 = vadd.f32 %v3385, %v3475
      %v3530 = vadd.f32 %v3386, %v3475
      %v3531 = vadd.f32 %v3387, %v3480
      %v3532 = vadd.f32 %v3388, %v3480
      %v3533 = vadd.f32 %v3389, %v3480
      %v3534 = vadd.f32 %v3390, %v3485
      %v3535 = vadd.f32 %v3391, %v3485
      %v3536 = vadd.f32 %v3392, %v3485
      %v3537 = vadd.f32 %v3393, %v3490
      %v3538 = vadd.f32 %v3394, %v3490
      %v3539 = vadd.f32 %v3395, %v3490
      %v3540 = vmax.f32 %v3492, 0.0
      %v3541 = vmax.f32 %v3493, 0.0
      %v3542 = vmax.f32 %v3494, 0.0
      %v3543 = vmax.f32 %v3495, 0.0
      %v3544 = vmax.f32 %v3496, 0.0
      %v3545 = vmax.f32 %v3497, 0.0
      %v3546 = vmax.f32 %v3498, 0.0
      %v3547 = vmax.f32 %v3499, 0.0
      %v3548 = vmax.f32 %v3500, 0.0
      %v3549 = vmax.f32 %v3501, 0.0
      %v3550 = vmax.f32 %v3502, 0.0
      %v3551 = vmax.f32 %v3503, 0.0
      %v3552 = vmax.f32 %v3504, 0.0
      %v3553 = vmax.f32 %v3505, 0.0
      %v3554 = vmax.f32 %v3506, 0.0
      %v3555 = vmax.f32 %v3507, 0.0
      %v3556 = vmax.f32 %v3508, 0.0
      %v3557 = vmax.f32 %v3509, 0.0
      %v3558 = vmax.f32 %v3510, 0.0
      %v3559 = vmax.f32 %v3511, 0.0
      %v3560 = vmax.f32 %v3512, 0.0
      %v3561 = vmax.f32 %v3513, 0.0
      %v3562 = vmax.f32 %v3514, 0.0
      %v3563 = vmax.f32 %v3515, 0.0
      %v3564 = vmax.f32 %v3516, 0.0
      %v3565 = vmax.f32 %v3517, 0.0
      %v3566 = vmax.f32 %v3518, 0.0
      %v3567 = vmax.f32 %v3519, 0.0
      %v3568 = vmax.f32 %v3520, 0.0
      %v3569 = vmax.f32 %v3521, 0.0
      %v3570 = vmax.f32 %v3522, 0.0
      %v3571 = vmax.f32 %v3523, 0.0
      %v3572 = vmax.f32 %v3524, 0.0
      %v3573 = vmax.f32 %v3525, 0.0
      %v3574 = vmax.f32 %v3526, 0.0
      %v3575 = vmax.f32 %v3527, 0.0
      %v3576 = vmax.f32 %v3528, 0.0
      %v3577 = vmax.f32 %v3529, 0.0
      %v3578 = vmax.f32 %v3530, 0.0
      %v3579 = vmax.f32 %v3531, 0.0
      %v3580 = vmax.f32 %v3532, 0.0
      %v3581 = vmax.f32 %v3533, 0.0
      %v3582 = vmax.f32 %v3534, 0.0
      %v3583 = vmax.f32 %v3535, 0.0
      %v3584 = vmax.f32 %v3536, 0.0
      %v3585 = vmax.f32 %v3537, 0.0
      %v3586 = vmax.f32 %v3538, 0.0
      %v3587 = vmax.f32 %v3539, 0.0
      %v3588 = vmin.f32 %v3540, 6.0
      %v3589 = vmin.f32 %v3541, 6.0
      %v3590 = vmin.f32 %v3542, 6.0
      %v3591 = vmin.f32 %v3543, 6.0
      %v3592 = vmin.f32 %v3544, 6.0
      %v3593 = vmin.f32 %v3545, 6.0
      %v3594 = vmin.f32 %v3546, 6.0
      %v3595 = vmin.f32 %v3547, 6.0
      %v3596 = vmin.f32 %v3548, 6.0
      %v3597 = vmin.f32 %v3549, 6.0
      %v3598 = vmin.f32 %v3550, 6.0
      %v3599 = vmin.f32 %v3551, 6.0
      %v3600 = vmin.f32 %v3552, 6.0
      %v3601 = vmin.f32 %v3553, 6.0
      %v3602 = vmin.f32 %v3554, 6.0
      %v3603 = vmin.f32 %v3555, 6.0
      %v3604 = vmin.f32 %v3556, 6.0
      %v3605 = vmin.f32 %v3557, 6.0
      %v3606 = vmin.f32 %v3558, 6.0
      %v3607 = vmin.f32 %v3559, 6.0
      %v3608 = vmin.f32 %v3560, 6.0
      %v3609 = vmin.f32 %v3561, 6.0
      %v3610 = vmin.f32 %v3562, 6.0
      %v3611 = vmin.f32 %v3563, 6.0
      %v3612 = vmin.f32 %v3564, 6.0
      %v3613 = vmin.f32 %v3565, 6.0
      %v3614 = vmin.f32 %v3566, 6.0
      %v3615 = vmin.f32 %v3567, 6.0
      %v3616 = vmin.f32 %v3568, 6.0
      %v3617 = vmin.f32 %v3569, 6.0
      %v3618 = vmin.f32 %v3570, 6.0
      %v3619 = vmin.f32 %v3571, 6.0
      %v3620 = vmin.f32 %v3572, 6.0
      %v3621 = vmin.f32 %v3573, 6.0
      %v3622 = vmin.f32 %v3574, 6.0
      %v3623 = vmin.f32 %v3575, 6.0
      %v3624 = vmin.f32 %v3576, 6.0
      %v3625 = vmin.f32 %v3577, 6.0
      %v3626 = vmin.f32 %v3578, 6.0
      %v3627 = vmin.f32 %v3579, 6.0
      %v3628 = vmin.f32 %v3580, 6.0
      %v3629 = vmin.f32 %v3581, 6.0
      %v3630 = vmin.f32 %v3582, 6.0
      %v3631 = vmin.f32 %v3583, 6.0
      %v3632 = vmin.f32 %v3584, 6.0
      %v3633 = vmin.f32 %v3585, 6.0
      %v3634 = vmin.f32 %v3586, 6.0
      %v3635 = vmin.f32 %v3587, 6.0
      %3636 = vst [vmem:[%s238] sm:$0xff] %v3588
      %3637 = vst [vmem:[%s238 + $0x8] sm:$0xff] %v3589
      %3638 = vst [vmem:[%s238 + $0x10] sm:$0xff] %v3590
      %3639 = vst [vmem:[%s238 + $0x18] sm:$0xff] %v3591
      %3640 = vst [vmem:[%s238 + $0x20] sm:$0xff] %v3592
      %3641 = vst [vmem:[%s238 + $0x28] sm:$0xff] %v3593
      %3642 = vst [vmem:[%s238 + $0x30] sm:$0xff] %v3594
      %3643 = vst [vmem:[%s238 + $0x38] sm:$0xff] %v3595
      %3644 = vst [vmem:[%s238 + $0x40] sm:$0xff] %v3596
      %3645 = vst [vmem:[%s238 + $0x48] sm:$0xff] %v3597
      %3646 = vst [vmem:[%s238 + $0x50] sm:$0xff] %v3598
      %3647 = vst [vmem:[%s238 + $0x58] sm:$0xff] %v3599
      %3648 = vst [vmem:[%s238 + $0x60] sm:$0xff] %v3600
      %3649 = vst [vmem:[%s238 + $0x68] sm:$0xff] %v3601
      %3650 = vst [vmem:[%s238 + $0x70] sm:$0xff] %v3602
      %3651 = vst [vmem:[%s238 + $0x78] sm:$0xff] %v3603
      %3652 = vst [vmem:[%s238 + $0x80] sm:$0xff] %v3604
      %3653 = vst [vmem:[%s238 + $0x88] sm:$0xff] %v3605
      %3654 = vst [vmem:[%s238 + $0x90] sm:$0xff] %v3606
      %3655 = vst [vmem:[%s238 + $0x98] sm:$0xff] %v3607
      %3656 = vst [vmem:[%s238 + $0xa0] sm:$0xff] %v3608
      %3657 = vst [vmem:[%s238 + $0xa8] sm:$0xff] %v3609
      %3658 = vst [vmem:[%s238 + $0xb0] sm:$0xff] %v3610
      %3659 = vst [vmem:[%s238 + $0xb8] sm:$0xff] %v3611
      %3660 = vst [vmem:[%s238 + $0xc0] sm:$0xff] %v3612
      %3661 = vst [vmem:[%s238 + $0xc8] sm:$0xff] %v3613
      %3662 = vst [vmem:[%s238 + $0xd0] sm:$0xff] %v3614
      %3663 = vst [vmem:[%s238 + $0xd8] sm:$0xff] %v3615
      %3664 = vst [vmem:[%s238 + $0xe0] sm:$0xff] %v3616
      %3665 = vst [vmem:[%s238 + $0xe8] sm:$0xff] %v3617
      %3666 = vst [vmem:[%s238 + $0xf0] sm:$0xff] %v3618
      %3667 = vst [vmem:[%s238 + $0xf8] sm:$0xff] %v3619
      %3668 = vst [vmem:[%s238 + $0x100] sm:$0xff] %v3620
      %3669 = vst [vmem:[%s238 + $0x108] sm:$0xff] %v3621
      %3670 = vst [vmem:[%s238 + $0x110] sm:$0xff] %v3622
      %3671 = vst [vmem:[%s238 + $0x118] sm:$0xff] %v3623
      %3672 = vst [vmem:[%s238 + $0x120] sm:$0xff] %v3624
      %3673 = vst [vmem:[%s238 + $0x128] sm:$0xff] %v3625
      %3674 = vst [vmem:[%s238 + $0x130] sm:$0xff] %v3626
      %3675 = vst [vmem:[%s238 + $0x138] sm:$0xff] %v3627
      %3676 = vst [vmem:[%s238 + $0x140] sm:$0xff] %v3628
      %3677 = vst [vmem:[%s238 + $0x148] sm:$0xff] %v3629
      %3678 = vst [vmem:[%s238 + $0x150] sm:$0xff] %v3630
      %3679 = vst [vmem:[%s238 + $0x158] sm:$0xff] %v3631
      %3680 = vst [vmem:[%s238 + $0x160] sm:$0xff] %v3632
      %3681 = vst [vmem:[%s238 + $0x168] sm:$0xff] %v3633
      %3682 = vst [vmem:[%s238 + $0x170] sm:$0xff] %v3634
      %3683 = vst [vmem:[%s238 + $0x178] sm:$0xff] %v3635
      %s3684 = smul.u32 16, %s19
      %p3685 = scmp.lt.s32.totalorder %s18, 1
      %s3686 = scalar_select %p3685, %s18, 1
      %p3687 = scmp.lt.s32.totalorder %s3684, 15
      %s3688 = scalar_select %p3687, %s3684, 15
      %s3689 = smul.addr %s3688, 3
      %s3690 = smul.addr %s3686, 48
      %s3691 = sadd.s32 %s3689, %s3690
      %s3692 = smul.addr %s3691, 8
      %s3693 = scalar_lea.vmem %s3, %s3692
      // Predicated region
      $region33: #{conv_block_forward.1} parent=31 // pred_check
        %p3694 = pneg %p124
      $region34: #{conv_block_forward.1} parent=31 // pred_check_branch
        %3696 = sbr.rel (%p3694) target = $region36
      $region35: #{conv_block_forward.1} parent=31 // pred_region
        %s3697 = smul.u32 16, %s19
      $region36: #{conv_block_forward.1} parent=31 // pred_fallthru
        _
    $region32: #{conv_block_forward.1} parent=5 // pred_fallthru
      _
    %p3698 = scmp.le.s32.totalorder 2, %s9
    // Predicated region
    $region37: #{conv_block_forward.1} parent=5 // pred_check
      %p3699 = pneg %p3698
    $region38: #{conv_block_forward.1} parent=5 // pred_check_branch
      %3701 = sbr.rel (%p3699) target = $region40
    $region39: #{conv_block_forward.1} parent=5 // pred_region
      %s3702 = ssub.s32 %s9, 2
      // Predicated region
      $region41: #{conv_block_forward.1} parent=39 // pred_check
        %p3703 = pneg %p130
      $region42: #{conv_block_forward.1} parent=39 // pred_check_branch
        %3705 = sbr.rel (%p3703) target = $region44
      $region43: #{conv_block_forward.1} parent=39 // pred_region
        %s3706 = smul.u32 16, %s21
        %p3707 = scmp.lt.s32.totalorder %s20, 1
        %s3708 = scalar_select %p3707, %s20, 1
        %p3709 = scmp.lt.s32.totalorder %s3706, 15
        %s3710 = scalar_select %p3709, %s3706, 15
        %s3711 = smul.addr %s3710, 3
        %s3712 = smul.addr %s3708, 48
        %s3713 = sadd.s32 %s3711, %s3712
        %s3714 = smul.addr %s3713, 8
        %s3715 = scalar_lea.vmem %s3, %s3714
      $region44: #{conv_block_forward.1} parent=39 // pred_fallthru
        _
    $region40: #{conv_block_forward.1} parent=5 // pred_fallthru
      _
  $region6: #{conv_block_forward.1} parent=0 // loop_footer
    %s13 = sadd.s32 1, %s9
  $region7: #{conv_block_forward.1} parent=0 // loop_footer_branch
    %8 = sbr.rel target = $region3
  $region8: #{conv_block_forward.1} parent=0 // loop_exit
    _

</llo_original>
